<compile_context>
chip_gen: v7x
topology: tpu7x:2x2x1
jax: 0.10.0
libtpu: 0.0.40
codegen_flags: <defaults>
</compile_context>

<pallas_src>
import functools

import jax
import jax.numpy as jnp
import numpy as np
from jax import lax
from jax.experimental import pallas as pl
from jax.experimental.pallas import tpu as pltpu

NUM_GAUSSIANS = 32


# ---------------------------------------------------------------------------
# Fully fused kernel: projections + spatial FFN + attention + output proj.
# ---------------------------------------------------------------------------
def _fused_kernel(xq_ref, xkv_ref, d_ref, keep_ref,
                  wq_ref, bq_ref, wk_ref, bk_ref, wv_ref, bv_ref,
                  wo_ref, bo_ref, offs_ref,
                  w1_ref, b1_ref, w2_ref, b2_ref, w3_ref, b3_ref,
                  o_ref, *, coeff, num_heads):
    f32 = jnp.float32
    bf16 = jnp.bfloat16
    bb, s1, _ = xq_ref.shape
    s2 = xkv_ref.shape[1]
    m = s1 * s2

    # Tiny (s2, 1, s2) selector sel[r, 0, j] = (r == j).  Used to move data
    # between the (s1, s2) score layout and the (m, 1) pairs-as-rows FFN
    # layout via broadcasts + reductions (minor-dim-preserving reshapes only).
    # Replaces v2's O(s1^2*s2^2) fold_l/fold_c MXU unfold.
    sel = (lax.broadcasted_iota(jnp.int32, (s2, 1, s2), 0) ==
           lax.broadcasted_iota(jnp.int32, (s2, 1, s2), 2)).astype(f32)

    offs = offs_ref[...]                       # (1, G)
    w1, b1 = w1_ref[...], b1_ref[...]
    w2, b2 = w2_ref[...], b2_ref[...]
    w3, b3 = w3_ref[...], b3_ref[...]
    bo = bo_ref[...]                           # (1, D)

    for bi in range(bb):                       # static loop over batch block
        xq = xq_ref[bi]                        # (s1, dq)   bf16
        xkv = xkv_ref[bi]                      # (s2, dkv)  bf16
        dmat = d_ref[bi]                       # (s1, s2)   f32
        keep = keep_ref[bi]                    # (s1, s2)   f32 in {0, 1}
        masked_add = (keep - 1.0) * 1e9        # 0 keep / -1e9 masked

        # pairwise distance -> pairs-as-rows column, ordering m = j*s1 + i.
        dsel = dmat[None, :, :] * sel                           # (s2, s1, s2)
        d_col = jnp.sum(dsel, axis=-1, keepdims=True).reshape(m, 1)

        # Gaussian smearing + 3-layer spatial FFN -> per-pair/per-head bias.
        g = jnp.exp(coeff * (d_col - offs) ** 2)                # (m, G)
        h1 = jnp.maximum(
            jnp.dot(g, w1, preferred_element_type=f32) + b1, 0.0)
        h2 = jnp.maximum(
            jnp.dot(h1, w2, preferred_element_type=f32) + b2, 0.0)
        bias_rows = jnp.dot(h2, w3, preferred_element_type=f32) + b3  # (m, H)

        acc = None
        for h in range(num_heads):
            # Per-head projections via head-split weights (leading-dim index,
            # no lane slicing).  Attention scale is pre-folded into wq / bq.
            qh = jnp.dot(xq, wq_ref[h], preferred_element_type=f32) + bq_ref[h]
            kh = jnp.dot(xkv, wk_ref[h], preferred_element_type=f32) + bk_ref[h]
            vh = jnp.dot(xkv, wv_ref[h], preferred_element_type=f32) + bv_ref[h]

            # Unfold head-h bias column (m, 1) -> (s1, s2) score layout:
            # broadcast * selector, then a cheap leading-axis sum.
            bcol = bias_rows[:, h:h + 1].reshape(s2, s1, 1)
            bh = jnp.sum(bcol * sel, axis=0)                    # (s1, s2)

            s = lax.dot_general(qh.astype(bf16), kh.astype(bf16),
                                (((1,), (1,)), ((), ())),
                                preferred_element_type=f32)     # (s1, s2)
            # Exact "scores[~mask] = -1e9" semantics of the reference module.
            s = (s + bh) * keep + masked_add

            mx = jnp.max(s, axis=-1, keepdims=True)
            e = jnp.exp(s - mx)
            p = e * pl.reciprocal(jnp.sum(e, axis=-1, keepdims=True),
                                  approx=True)

            oh = jnp.dot(p.astype(bf16), vh.astype(bf16),
                         preferred_element_type=f32)            # (s1, hd)
            # Output projection folded in per head: acc += oh @ wo[h].
            contrib = jnp.dot(oh.astype(bf16), wo_ref[h],
                              preferred_element_type=f32)       # (s1, D)
            acc = contrib if acc is None else acc + contrib

        o_ref[bi] = (acc + bo).astype(o_ref.dtype)


# Index maps (plain functions: exact arity expected by Pallas).
def _map_batch3(i):
    return (i, 0, 0)


def _map_const3(i):
    return (0, 0, 0)


def _map_const2(i):
    return (0, 0)


# ---------------------------------------------------------------------------
# Wrapper: parameter prep + single pallas_call.
# ---------------------------------------------------------------------------
def cross_attention_forward(params, query, key_value, pairwise_distance,
                            pairwise_mask, *, batch_block=8):
    """Forward pass of CrossAttentionWithSpatialEncoding (eval mode)."""
    B, S1, Dq = query.shape
    _, S2, Dkv = key_value.shape
    D = params["wq"].shape[1]
    H = int(params["num_heads"])
    assert D % H == 0
    hd = D // H
    scale = hd ** (-0.5)
    G = NUM_GAUSSIANS
    f32, bf16 = jnp.float32, jnp.bfloat16

    # --- parameter prep (tiny; in a real model do this once at init time) ---
    def split_w(w, s=1.0):                    # (din, D) -> (H, din, hd)
        return (w * s).reshape(w.shape[0], H, hd).transpose(1, 0, 2)

    def split_b(b, s=1.0):                    # (1, D) -> (H, 1, hd)
        return (b * s).reshape(1, H, hd).transpose(1, 0, 2)

    wq3 = split_w(params["wq"], scale).astype(bf16)   # attention scale folded in
    bq3 = split_b(params["bq"], scale).astype(f32)
    wk3 = split_w(params["wk"]).astype(bf16)
    bk3 = split_b(params["bk"]).astype(f32)
    wv3 = split_w(params["wv"]).astype(bf16)
    bv3 = split_b(params["bv"]).astype(f32)
    wo3 = params["wo"].reshape(H, hd, D).astype(bf16)
    bo = params["bo"].astype(f32)

    xq = query.astype(bf16)
    xkv = key_value.astype(bf16)
    dmat = pairwise_distance.astype(f32)
    keep = pairwise_mask.astype(f32)

    # --- batch blocking: several batch elements per grid step ---
    bb = max(1, min(batch_block, B))
    n_blocks = pl.cdiv(B, bb)
    Bp = n_blocks * bb
    if Bp != B:
        pad = ((0, Bp - B), (0, 0), (0, 0))
        xq, xkv = jnp.pad(xq, pad), jnp.pad(xkv, pad)
        dmat, keep = jnp.pad(dmat, pad), jnp.pad(keep, pad)  # padded rows masked

    kern = functools.partial(_fused_kernel, coeff=float(params["coeff"]),
                             num_heads=H)

    def batch_spec(shape):
        return pl.BlockSpec(shape, _map_batch3)

    def const_spec(shape):
        imap = _map_const3 if len(shape) == 3 else _map_const2
        return pl.BlockSpec(shape, imap, pipeline_mode=pl.Buffered(1))

    out = pl.pallas_call(
        kern,
        out_shape=jax.ShapeDtypeStruct((Bp, S1, D), f32),
        grid_spec=pltpu.PrefetchScalarGridSpec(
            num_scalar_prefetch=0,
            grid=(n_blocks,),
            in_specs=[
                batch_spec((bb, S1, Dq)),        # query
                batch_spec((bb, S2, Dkv)),       # key_value
                batch_spec((bb, S1, S2)),        # pairwise distance
                batch_spec((bb, S1, S2)),        # keep mask (0/1)
                const_spec((H, Dq, hd)),         # wq (scaled)
                const_spec((H, 1, hd)),          # bq (scaled)
                const_spec((H, Dkv, hd)),        # wk
                const_spec((H, 1, hd)),          # bk
                const_spec((H, Dkv, hd)),        # wv
                const_spec((H, 1, hd)),          # bv
                const_spec((H, hd, D)),          # wo
                const_spec((1, D)),              # bo
                const_spec((1, G)),              # gaussian offsets
                const_spec((G, G)),              # spatial ffn w1
                const_spec((1, G)),              # spatial ffn b1
                const_spec((G, G)),              # spatial ffn w2
                const_spec((1, G)),              # spatial ffn b2
                const_spec((G, H)),              # spatial ffn w3
                const_spec((1, H)),              # spatial ffn b3
            ],
            out_specs=pl.BlockSpec((bb, S1, D), _map_batch3),
        ),
        compiler_params=pltpu.CompilerParams(
            dimension_semantics=("parallel",),
            vmem_limit_bytes=64 * 1024 * 1024),
    )(xq, xkv, dmat, keep,
      wq3, bq3, wk3, bk3, wv3, bv3, wo3, bo,
      params["offs"], params["sw1"], params["sb1"],
      params["sw2"], params["sb2"], params["sw3"], params["sb3"])

    return out[:B] if Bp != B else out


# ---------------------------------------------------------------------------
# Pure-JAX reference (matches the PyTorch module, eval mode).
# ---------------------------------------------------------------------------
def ref_forward(params, query, key_value, pairwise_distance, pairwise_mask):
    B, S1, _ = query.shape
    _, S2, _ = key_value.shape
    D = params["wq"].shape[1]
    H = int(params["num_heads"])
    hd = D // H
    scale = hd ** (-0.5)
    hp = jax.lax.Precision.HIGHEST

    Q = jnp.dot(query, params["wq"], precision=hp) + params["bq"]
    K = jnp.dot(key_value, params["wk"], precision=hp) + params["bk"]
    V = jnp.dot(key_value, params["wv"], precision=hp) + params["bv"]
    Q = Q.reshape(B, S1, H, hd).transpose(0, 2, 1, 3)
    K = K.reshape(B, S2, H, hd).transpose(0, 2, 1, 3)
    V = V.reshape(B, S2, H, hd).transpose(0, 2, 1, 3)
    scores = jnp.einsum("bhqd,bhkd->bhqk", Q, K, precision=hp) * scale

    d = pairwise_distance.reshape(-1, 1)
    g = jnp.exp(params["coeff"] * (d - params["offs"]) ** 2)
    h1 = jax.nn.relu(jnp.dot(g, params["sw1"], precision=hp) + params["sb1"])
    h2 = jax.nn.relu(jnp.dot(h1, params["sw2"], precision=hp) + params["sb2"])
    sp = jnp.dot(h2, params["sw3"], precision=hp) + params["sb3"]
    sp = sp.reshape(B, S1, S2, H).transpose(0, 3, 1, 2)
    scores = scores + sp

    mask = pairwise_mask[:, None, :, :]
    scores = jnp.where(mask, scores, -1e9)
    p = jax.nn.softmax(scores, axis=-1)
    attn = jnp.einsum("bhqk,bhkd->bhqd", p, V, precision=hp)
    attn = attn.transpose(0, 2, 1, 3).reshape(B, S1, D)
    return jnp.dot(attn, params["wo"], precision=hp) + params["bo"]


# ---------------------------------------------------------------------------
# Deterministic parameter init.
# ---------------------------------------------------------------------------
def init_params(key, dim_query, dim_kv, dim_out, num_heads):
    ks = jax.random.split(key, 14)

    def init(k, shape, s=0.1):
        return (jax.random.normal(k, shape, jnp.float32) * s).astype(jnp.float32)

    offs_np = np.linspace(0.0, 10.0, NUM_GAUSSIANS).astype(np.float32)
    delta = float(offs_np[1] - offs_np[0])
    coeff = -0.5 / (delta * delta)

    return {
        "num_heads": num_heads,
        "wq": init(ks[0], (dim_query, dim_out)), "bq": init(ks[1], (1, dim_out)),
        "wk": init(ks[2], (dim_kv, dim_out)),    "bk": init(ks[3], (1, dim_out)),
        "wv": init(ks[4], (dim_kv, dim_out)),    "bv": init(ks[5], (1, dim_out)),
        "wo": init(ks[6], (dim_out, dim_out)),   "bo": init(ks[7], (1, dim_out)),
        "sw1": init(ks[8], (NUM_GAUSSIANS, NUM_GAUSSIANS)),
        "sb1": init(ks[9], (1, NUM_GAUSSIANS)),
        "sw2": init(ks[10], (NUM_GAUSSIANS, NUM_GAUSSIANS)),
        "sb2": init(ks[11], (1, NUM_GAUSSIANS)),
        "sw3": init(ks[12], (NUM_GAUSSIANS, num_heads)),
        "sb3": init(ks[13], (1, num_heads)),
        "offs": jnp.asarray(offs_np).reshape(1, NUM_GAUSSIANS),
        "coeff": coeff,
    }


if __name__ == "__main__":
    B, S1, S2 = 2, 8, 8
    dim_query, dim_kv, dim_out, num_heads = 32, 32, 32, 4

    root = jax.random.PRNGKey(0)
    k_q, k_kv, k_d, k_m, k_p = jax.random.split(root, 5)

    query = jax.random.normal(k_q, (B, S1, dim_query), jnp.float32)
    key_value = jax.random.normal(k_kv, (B, S2, dim_kv), jnp.float32)
    pairwise_distance = jax.random.uniform(
        k_d, (B, S1, S2), jnp.float32, minval=0.0, maxval=10.0)
    pairwise_mask = jax.random.uniform(k_m, (B, S1, S2)) > 0.2

    params = init_params(k_p, dim_query, dim_kv, dim_out, num_heads)

    out = cross_attention_forward(params, query, key_value,
                                  pairwise_distance, pairwise_mask)
    out = jax.block_until_ready(out)

    ref = ref_forward(params, query, key_value, pairwise_distance, pairwise_mask)
    assert out.shape == (B, S1, dim_out), out.shape
    assert bool(jnp.isfinite(out).all()), "non-finite output"
    assert bool(jnp.allclose(out, ref, atol=2e-2, rtol=2e-2)), "mismatch vs reference"

    print("KERNEL_OK")
</pallas_src>

<mosaic_0001>
module attributes {stable_mosaic.version = 11 : i64} {
  func.func @_fused_kernel(%arg0: i32, %arg1: memref<2x8x32xbf16, #tpu.memory_space<vmem>>, %arg2: memref<2x8x32xbf16, #tpu.memory_space<vmem>>, %arg3: memref<2x8x8xf32, #tpu.memory_space<vmem>>, %arg4: memref<2x8x8xf32, #tpu.memory_space<vmem>>, %arg5: memref<4x32x8xbf16, #tpu.memory_space<vmem>>, %arg6: memref<4x1x8xf32, #tpu.memory_space<vmem>>, %arg7: memref<4x32x8xbf16, #tpu.memory_space<vmem>>, %arg8: memref<4x1x8xf32, #tpu.memory_space<vmem>>, %arg9: memref<4x32x8xbf16, #tpu.memory_space<vmem>>, %arg10: memref<4x1x8xf32, #tpu.memory_space<vmem>>, %arg11: memref<4x8x32xbf16, #tpu.memory_space<vmem>>, %arg12: memref<1x32xf32, #tpu.memory_space<vmem>>, %arg13: memref<1x32xf32, #tpu.memory_space<vmem>>, %arg14: memref<32x32xf32, #tpu.memory_space<vmem>>, %arg15: memref<1x32xf32, #tpu.memory_space<vmem>>, %arg16: memref<32x32xf32, #tpu.memory_space<vmem>>, %arg17: memref<1x32xf32, #tpu.memory_space<vmem>>, %arg18: memref<32x4xf32, #tpu.memory_space<vmem>>, %arg19: memref<1x4xf32, #tpu.memory_space<vmem>>, %arg20: memref<2x8x32xf32, #tpu.memory_space<vmem>>) attributes {dimension_semantics = [#tpu.dimension_semantics<parallel>], iteration_bounds = array<i64: 1>, scalar_prefetch = 0 : i64, scratch_operands = 0 : i64, tpu.core_type = #tpu.core_type<tc>, window_params = [{transform_indices = @transform_0, window_bounds = array<i64: 2, 8, 32>}, {transform_indices = @transform_1, window_bounds = array<i64: 2, 8, 32>}, {transform_indices = @transform_2, window_bounds = array<i64: 2, 8, 8>}, {transform_indices = @transform_3, window_bounds = array<i64: 2, 8, 8>}, {pipeline_mode = #tpu.pipeline_mode<synchronous>, transform_indices = @transform_4, window_bounds = array<i64: 4, 32, 8>}, {pipeline_mode = #tpu.pipeline_mode<synchronous>, transform_indices = @transform_5, window_bounds = array<i64: 4, 1, 8>}, {pipeline_mode = #tpu.pipeline_mode<synchronous>, transform_indices = @transform_6, window_bounds = array<i64: 4, 32, 8>}, {pipeline_mode = #tpu.pipeline_mode<synchronous>, transform_indices = @transform_7, window_bounds = array<i64: 4, 1, 8>}, {pipeline_mode = #tpu.pipeline_mode<synchronous>, transform_indices = @transform_8, window_bounds = array<i64: 4, 32, 8>}, {pipeline_mode = #tpu.pipeline_mode<synchronous>, transform_indices = @transform_9, window_bounds = array<i64: 4, 1, 8>}, {pipeline_mode = #tpu.pipeline_mode<synchronous>, transform_indices = @transform_10, window_bounds = array<i64: 4, 8, 32>}, {pipeline_mode = #tpu.pipeline_mode<synchronous>, transform_indices = @transform_11, window_bounds = array<i64: 1, 32>}, {pipeline_mode = #tpu.pipeline_mode<synchronous>, transform_indices = @transform_12, window_bounds = array<i64: 1, 32>}, {pipeline_mode = #tpu.pipeline_mode<synchronous>, transform_indices = @transform_13, window_bounds = array<i64: 32, 32>}, {pipeline_mode = #tpu.pipeline_mode<synchronous>, transform_indices = @transform_14, window_bounds = array<i64: 1, 32>}, {pipeline_mode = #tpu.pipeline_mode<synchronous>, transform_indices = @transform_15, window_bounds = array<i64: 32, 32>}, {pipeline_mode = #tpu.pipeline_mode<synchronous>, transform_indices = @transform_16, window_bounds = array<i64: 1, 32>}, {pipeline_mode = #tpu.pipeline_mode<synchronous>, transform_indices = @transform_17, window_bounds = array<i64: 32, 4>}, {pipeline_mode = #tpu.pipeline_mode<synchronous>, transform_indices = @transform_18, window_bounds = array<i64: 1, 4>}, {transform_indices = @transform_19, window_bounds = array<i64: 2, 8, 32>}]} {
    %0 = tpu.iota {dimensions = array<i32: 0>} : vector<8x1x8xi32>
    %1 = tpu.iota {dimensions = array<i32: 2>} : vector<8x1x8xi32>
    %2 = arith.cmpi eq, %0, %1 : vector<8x1x8xi32>
    %3 = arith.extui %2 : vector<8x1x8xi1> to vector<8x1x8xi32>
    %4 = arith.sitofp %3 : vector<8x1x8xi32> to vector<8x1x8xf32>
    %c0 = arith.constant 0 : index
    %c0_0 = arith.constant 0 : index
    %5 = vector.load %arg13[%c0, %c0_0] : memref<1x32xf32, #tpu.memory_space<vmem>>, vector<1x32xf32>
    %c0_1 = arith.constant 0 : index
    %c0_2 = arith.constant 0 : index
    %6 = vector.load %arg14[%c0_1, %c0_2] : memref<32x32xf32, #tpu.memory_space<vmem>>, vector<32x32xf32>
    %c0_3 = arith.constant 0 : index
    %c0_4 = arith.constant 0 : index
    %7 = vector.load %arg15[%c0_3, %c0_4] : memref<1x32xf32, #tpu.memory_space<vmem>>, vector<1x32xf32>
    %c0_5 = arith.constant 0 : index
    %c0_6 = arith.constant 0 : index
    %8 = vector.load %arg16[%c0_5, %c0_6] : memref<32x32xf32, #tpu.memory_space<vmem>>, vector<32x32xf32>
    %c0_7 = arith.constant 0 : index
    %c0_8 = arith.constant 0 : index
    %9 = vector.load %arg17[%c0_7, %c0_8] : memref<1x32xf32, #tpu.memory_space<vmem>>, vector<1x32xf32>
    %c0_9 = arith.constant 0 : index
    %c0_10 = arith.constant 0 : index
    %10 = vector.load %arg18[%c0_9, %c0_10] : memref<32x4xf32, #tpu.memory_space<vmem>>, vector<32x4xf32>
    %c0_11 = arith.constant 0 : index
    %c0_12 = arith.constant 0 : index
    %11 = vector.load %arg19[%c0_11, %c0_12] : memref<1x4xf32, #tpu.memory_space<vmem>>, vector<1x4xf32>
    %c0_13 = arith.constant 0 : index
    %c0_14 = arith.constant 0 : index
    %12 = vector.load %arg12[%c0_13, %c0_14] : memref<1x32xf32, #tpu.memory_space<vmem>>, vector<1x32xf32>
    %c0_15 = arith.constant 0 : index
    %c0_16 = arith.constant 0 : index
    %c0_17 = arith.constant 0 : index
    %13 = vector.load %arg1[%c0_15, %c0_16, %c0_17] : memref<2x8x32xbf16, #tpu.memory_space<vmem>>, vector<1x8x32xbf16>
    %14 = vector.shape_cast %13 : vector<1x8x32xbf16> to vector<8x32xbf16>
    %c0_18 = arith.constant 0 : index
    %c0_19 = arith.constant 0 : index
    %c0_20 = arith.constant 0 : index
    %15 = vector.load %arg2[%c0_18, %c0_19, %c0_20] : memref<2x8x32xbf16, #tpu.memory_space<vmem>>, vector<1x8x32xbf16>
    %16 = vector.shape_cast %15 : vector<1x8x32xbf16> to vector<8x32xbf16>
    %c0_21 = arith.constant 0 : index
    %c0_22 = arith.constant 0 : index
    %c0_23 = arith.constant 0 : index
    %17 = vector.load %arg3[%c0_21, %c0_22, %c0_23] : memref<2x8x8xf32, #tpu.memory_space<vmem>>, vector<1x8x8xf32>
    %18 = vector.shape_cast %17 : vector<1x8x8xf32> to vector<8x8xf32>
    %c0_24 = arith.constant 0 : index
    %c0_25 = arith.constant 0 : index
    %c0_26 = arith.constant 0 : index
    %19 = vector.load %arg4[%c0_24, %c0_25, %c0_26] : memref<2x8x8xf32, #tpu.memory_space<vmem>>, vector<1x8x8xf32>
    %20 = vector.shape_cast %19 : vector<1x8x8xf32> to vector<8x8xf32>
    %cst = arith.constant 1.000000e+00 : f32
    %21 = vector.broadcast %cst : f32 to vector<8x8xf32>
    %22 = arith.subf %20, %21 : vector<8x8xf32>
    %cst_27 = arith.constant 1.000000e+09 : f32
    %23 = vector.broadcast %cst_27 : f32 to vector<8x8xf32>
    %24 = arith.mulf %22, %23 : vector<8x8xf32>
    %25 = vector.shape_cast %18 : vector<8x8xf32> to vector<1x8x8xf32>
    %26 = vector.broadcast %25 : vector<1x8x8xf32> to vector<8x8x8xf32>
    %27 = vector.broadcast %4 : vector<8x1x8xf32> to vector<8x8x8xf32>
    %28 = arith.mulf %26, %27 : vector<8x8x8xf32>
    %cst_28 = arith.constant dense<0.000000e+00> : vector<8x8xf32>
    %29 = vector.multi_reduction <add>, %28, %cst_28 [2] : vector<8x8x8xf32> to vector<8x8xf32>
    %30 = vector.shape_cast %29 : vector<8x8xf32> to vector<8x8x1xf32>
    %31 = vector.shape_cast %30 : vector<8x8x1xf32> to vector<64x1xf32>
    %32 = vector.broadcast %31 : vector<64x1xf32> to vector<64x32xf32>
    %33 = vector.broadcast %5 : vector<1x32xf32> to vector<64x32xf32>
    %34 = arith.subf %32, %33 : vector<64x32xf32>
    %35 = arith.mulf %34, %34 : vector<64x32xf32>
    %cst_29 = arith.constant -4.80500031 : f32
    %36 = vector.broadcast %cst_29 : f32 to vector<64x32xf32>
    %37 = arith.mulf %36, %35 : vector<64x32xf32>
    %38 = math.exp %37 : vector<64x32xf32>
    %cst_30 = arith.constant dense<0.000000e+00> : vector<64x32xf32>
    %39 = tpu.matmul %38, %6, %cst_30 {dimension_numbers = #tpu.dot_dimension_numbers<[1], [0], [0], [1], [0, 0, 1, 1], [], []>} : vector<64x32xf32>, vector<32x32xf32>, vector<64x32xf32> -> vector<64x32xf32>
    %40 = vector.broadcast %7 : vector<1x32xf32> to vector<64x32xf32>
    %41 = arith.addf %39, %40 : vector<64x32xf32>
    %cst_31 = arith.constant 0.000000e+00 : f32
    %42 = vector.broadcast %cst_31 : f32 to vector<64x32xf32>
    %43 = arith.maximumf %41, %42 : vector<64x32xf32>
    %cst_32 = arith.constant dense<0.000000e+00> : vector<64x32xf32>
    %44 = tpu.matmul %43, %8, %cst_32 {dimension_numbers = #tpu.dot_dimension_numbers<[1], [0], [0], [1], [0, 0, 1, 1], [], []>} : vector<64x32xf32>, vector<32x32xf32>, vector<64x32xf32> -> vector<64x32xf32>
    %45 = vector.broadcast %9 : vector<1x32xf32> to vector<64x32xf32>
    %46 = arith.addf %44, %45 : vector<64x32xf32>
    %cst_33 = arith.constant 0.000000e+00 : f32
    %47 = vector.broadcast %cst_33 : f32 to vector<64x32xf32>
    %48 = arith.maximumf %46, %47 : vector<64x32xf32>
    %cst_34 = arith.constant dense<0.000000e+00> : vector<64x4xf32>
    %49 = tpu.matmul %48, %10, %cst_34 {dimension_numbers = #tpu.dot_dimension_numbers<[1], [0], [0], [1], [0, 0, 1, 1], [], []>} : vector<64x32xf32>, vector<32x4xf32>, vector<64x4xf32> -> vector<64x4xf32>
    %50 = vector.broadcast %11 : vector<1x4xf32> to vector<64x4xf32>
    %51 = arith.addf %49, %50 : vector<64x4xf32>
    %c0_35 = arith.constant 0 : index
    %c0_36 = arith.constant 0 : index
    %c0_37 = arith.constant 0 : index
    %52 = vector.load %arg5[%c0_35, %c0_36, %c0_37] : memref<4x32x8xbf16, #tpu.memory_space<vmem>>, vector<1x32x8xbf16>
    %53 = vector.shape_cast %52 : vector<1x32x8xbf16> to vector<32x8xbf16>
    %cst_38 = arith.constant dense<0.000000e+00> : vector<8x8xf32>
    %54 = tpu.matmul %14, %53, %cst_38 {dimension_numbers = #tpu.dot_dimension_numbers<[1], [0], [0], [1], [0, 0, 1, 1], [], []>} : vector<8x32xbf16>, vector<32x8xbf16>, vector<8x8xf32> -> vector<8x8xf32>
    %c0_39 = arith.constant 0 : index
    %c0_40 = arith.constant 0 : index
    %c0_41 = arith.constant 0 : index
    %55 = vector.load %arg6[%c0_39, %c0_40, %c0_41] : memref<4x1x8xf32, #tpu.memory_space<vmem>>, vector<1x1x8xf32>
    %56 = vector.shape_cast %55 : vector<1x1x8xf32> to vector<1x8xf32>
    %57 = vector.broadcast %56 : vector<1x8xf32> to vector<8x8xf32>
    %58 = arith.addf %54, %57 : vector<8x8xf32>
    %c0_42 = arith.constant 0 : index
    %c0_43 = arith.constant 0 : index
    %c0_44 = arith.constant 0 : index
    %59 = vector.load %arg7[%c0_42, %c0_43, %c0_44] : memref<4x32x8xbf16, #tpu.memory_space<vmem>>, vector<1x32x8xbf16>
    %60 = vector.shape_cast %59 : vector<1x32x8xbf16> to vector<32x8xbf16>
    %cst_45 = arith.constant dense<0.000000e+00> : vector<8x8xf32>
    %61 = tpu.matmul %16, %60, %cst_45 {dimension_numbers = #tpu.dot_dimension_numbers<[1], [0], [0], [1], [0, 0, 1, 1], [], []>} : vector<8x32xbf16>, vector<32x8xbf16>, vector<8x8xf32> -> vector<8x8xf32>
    %c0_46 = arith.constant 0 : index
    %c0_47 = arith.constant 0 : index
    %c0_48 = arith.constant 0 : index
    %62 = vector.load %arg8[%c0_46, %c0_47, %c0_48] : memref<4x1x8xf32, #tpu.memory_space<vmem>>, vector<1x1x8xf32>
    %63 = vector.shape_cast %62 : vector<1x1x8xf32> to vector<1x8xf32>
    %64 = vector.broadcast %63 : vector<1x8xf32> to vector<8x8xf32>
    %65 = arith.addf %61, %64 : vector<8x8xf32>
    %c0_49 = arith.constant 0 : index
    %c0_50 = arith.constant 0 : index
    %c0_51 = arith.constant 0 : index
    %66 = vector.load %arg9[%c0_49, %c0_50, %c0_51] : memref<4x32x8xbf16, #tpu.memory_space<vmem>>, vector<1x32x8xbf16>
    %67 = vector.shape_cast %66 : vector<1x32x8xbf16> to vector<32x8xbf16>
    %cst_52 = arith.constant dense<0.000000e+00> : vector<8x8xf32>
    %68 = tpu.matmul %16, %67, %cst_52 {dimension_numbers = #tpu.dot_dimension_numbers<[1], [0], [0], [1], [0, 0, 1, 1], [], []>} : vector<8x32xbf16>, vector<32x8xbf16>, vector<8x8xf32> -> vector<8x8xf32>
    %c0_53 = arith.constant 0 : index
    %c0_54 = arith.constant 0 : index
    %c0_55 = arith.constant 0 : index
    %69 = vector.load %arg10[%c0_53, %c0_54, %c0_55] : memref<4x1x8xf32, #tpu.memory_space<vmem>>, vector<1x1x8xf32>
    %70 = vector.shape_cast %69 : vector<1x1x8xf32> to vector<1x8xf32>
    %71 = vector.broadcast %70 : vector<1x8xf32> to vector<8x8xf32>
    %72 = arith.addf %68, %71 : vector<8x8xf32>
    %73 = vector.extract_strided_slice %51 {offsets = [0, 0], sizes = [64, 1], strides = [1, 1]} : vector<64x4xf32> to vector<64x1xf32>
    %74 = vector.shape_cast %73 : vector<64x1xf32> to vector<8x8x1xf32>
    %75 = vector.broadcast %74 : vector<8x8x1xf32> to vector<8x8x8xf32>
    %76 = vector.broadcast %4 : vector<8x1x8xf32> to vector<8x8x8xf32>
    %77 = arith.mulf %75, %76 : vector<8x8x8xf32>
    %cst_56 = arith.constant dense<0.000000e+00> : vector<8x8xf32>
    %78 = vector.multi_reduction <add>, %77, %cst_56 [0] : vector<8x8x8xf32> to vector<8x8xf32>
    %79 = arith.truncf %58 : vector<8x8xf32> to vector<8x8xbf16>
    %80 = arith.truncf %65 : vector<8x8xf32> to vector<8x8xbf16>
    %cst_57 = arith.constant dense<0.000000e+00> : vector<8x8xf32>
    %81 = tpu.matmul %79, %80, %cst_57 {dimension_numbers = #tpu.dot_dimension_numbers<[1], [1], [0], [0], [0, 0, 1, 0], [], []>} : vector<8x8xbf16>, vector<8x8xbf16>, vector<8x8xf32> -> vector<8x8xf32>
    %82 = arith.addf %81, %78 : vector<8x8xf32>
    %83 = arith.mulf %82, %20 : vector<8x8xf32>
    %84 = arith.addf %83, %24 : vector<8x8xf32>
    %cst_58 = arith.constant dense<0xFF800000> : vector<8xf32>
    %85 = vector.multi_reduction <maximumf>, %84, %cst_58 [1] : vector<8x8xf32> to vector<8xf32>
    %86 = vector.shape_cast %85 : vector<8xf32> to vector<8x1xf32>
    %87 = vector.broadcast %86 : vector<8x1xf32> to vector<8x8xf32>
    %88 = arith.subf %84, %87 : vector<8x8xf32>
    %89 = math.exp %88 : vector<8x8xf32>
    %cst_59 = arith.constant dense<0.000000e+00> : vector<8xf32>
    %90 = vector.multi_reduction <add>, %89, %cst_59 [1] : vector<8x8xf32> to vector<8xf32>
    %91 = vector.shape_cast %90 : vector<8xf32> to vector<8x1xf32>
    %92 = tpu.reciprocal %91 {approx = true} : vector<8x1xf32> -> vector<8x1xf32>
    %93 = vector.broadcast %92 : vector<8x1xf32> to vector<8x8xf32>
    %94 = arith.mulf %89, %93 : vector<8x8xf32>
    %95 = arith.truncf %94 : vector<8x8xf32> to vector<8x8xbf16>
    %96 = arith.truncf %72 : vector<8x8xf32> to vector<8x8xbf16>
    %cst_60 = arith.constant dense<0.000000e+00> : vector<8x8xf32>
    %97 = tpu.matmul %95, %96, %cst_60 {dimension_numbers = #tpu.dot_dimension_numbers<[1], [0], [0], [1], [0, 0, 1, 1], [], []>} : vector<8x8xbf16>, vector<8x8xbf16>, vector<8x8xf32> -> vector<8x8xf32>
    %98 = arith.truncf %97 : vector<8x8xf32> to vector<8x8xbf16>
    %c0_61 = arith.constant 0 : index
    %c0_62 = arith.constant 0 : index
    %c0_63 = arith.constant 0 : index
    %99 = vector.load %arg11[%c0_61, %c0_62, %c0_63] : memref<4x8x32xbf16, #tpu.memory_space<vmem>>, vector<1x8x32xbf16>
    %100 = vector.shape_cast %99 : vector<1x8x32xbf16> to vector<8x32xbf16>
    %cst_64 = arith.constant dense<0.000000e+00> : vector<8x32xf32>
    %101 = tpu.matmul %98, %100, %cst_64 {dimension_numbers = #tpu.dot_dimension_numbers<[1], [0], [0], [1], [0, 0, 1, 1], [], []>} : vector<8x8xbf16>, vector<8x32xbf16>, vector<8x32xf32> -> vector<8x32xf32>
    %c1 = arith.constant 1 : index
    %c0_65 = arith.constant 0 : index
    %c0_66 = arith.constant 0 : index
    %102 = vector.load %arg5[%c1, %c0_65, %c0_66] : memref<4x32x8xbf16, #tpu.memory_space<vmem>>, vector<1x32x8xbf16>
    %103 = vector.shape_cast %102 : vector<1x32x8xbf16> to vector<32x8xbf16>
    %cst_67 = arith.constant dense<0.000000e+00> : vector<8x8xf32>
    %104 = tpu.matmul %14, %103, %cst_67 {dimension_numbers = #tpu.dot_dimension_numbers<[1], [0], [0], [1], [0, 0, 1, 1], [], []>} : vector<8x32xbf16>, vector<32x8xbf16>, vector<8x8xf32> -> vector<8x8xf32>
    %c1_68 = arith.constant 1 : index
    %c0_69 = arith.constant 0 : index
    %c0_70 = arith.constant 0 : index
    %105 = vector.load %arg6[%c1_68, %c0_69, %c0_70] : memref<4x1x8xf32, #tpu.memory_space<vmem>>, vector<1x1x8xf32>
    %106 = vector.shape_cast %105 : vector<1x1x8xf32> to vector<1x8xf32>
    %107 = vector.broadcast %106 : vector<1x8xf32> to vector<8x8xf32>
    %108 = arith.addf %104, %107 : vector<8x8xf32>
    %c1_71 = arith.constant 1 : index
    %c0_72 = arith.constant 0 : index
    %c0_73 = arith.constant 0 : index
    %109 = vector.load %arg7[%c1_71, %c0_72, %c0_73] : memref<4x32x8xbf16, #tpu.memory_space<vmem>>, vector<1x32x8xbf16>
    %110 = vector.shape_cast %109 : vector<1x32x8xbf16> to vector<32x8xbf16>
    %cst_74 = arith.constant dense<0.000000e+00> : vector<8x8xf32>
    %111 = tpu.matmul %16, %110, %cst_74 {dimension_numbers = #tpu.dot_dimension_numbers<[1], [0], [0], [1], [0, 0, 1, 1], [], []>} : vector<8x32xbf16>, vector<32x8xbf16>, vector<8x8xf32> -> vector<8x8xf32>
    %c1_75 = arith.constant 1 : index
    %c0_76 = arith.constant 0 : index
    %c0_77 = arith.constant 0 : index
    %112 = vector.load %arg8[%c1_75, %c0_76, %c0_77] : memref<4x1x8xf32, #tpu.memory_space<vmem>>, vector<1x1x8xf32>
    %113 = vector.shape_cast %112 : vector<1x1x8xf32> to vector<1x8xf32>
    %114 = vector.broadcast %113 : vector<1x8xf32> to vector<8x8xf32>
    %115 = arith.addf %111, %114 : vector<8x8xf32>
    %c1_78 = arith.constant 1 : index
    %c0_79 = arith.constant 0 : index
    %c0_80 = arith.constant 0 : index
    %116 = vector.load %arg9[%c1_78, %c0_79, %c0_80] : memref<4x32x8xbf16, #tpu.memory_space<vmem>>, vector<1x32x8xbf16>
    %117 = vector.shape_cast %116 : vector<1x32x8xbf16> to vector<32x8xbf16>
    %cst_81 = arith.constant dense<0.000000e+00> : vector<8x8xf32>
    %118 = tpu.matmul %16, %117, %cst_81 {dimension_numbers = #tpu.dot_dimension_numbers<[1], [0], [0], [1], [0, 0, 1, 1], [], []>} : vector<8x32xbf16>, vector<32x8xbf16>, vector<8x8xf32> -> vector<8x8xf32>
    %c1_82 = arith.constant 1 : index
    %c0_83 = arith.constant 0 : index
    %c0_84 = arith.constant 0 : index
    %119 = vector.load %arg10[%c1_82, %c0_83, %c0_84] : memref<4x1x8xf32, #tpu.memory_space<vmem>>, vector<1x1x8xf32>
    %120 = vector.shape_cast %119 : vector<1x1x8xf32> to vector<1x8xf32>
    %121 = vector.broadcast %120 : vector<1x8xf32> to vector<8x8xf32>
    %122 = arith.addf %118, %121 : vector<8x8xf32>
    %123 = vector.extract_strided_slice %51 {offsets = [0, 1], sizes = [64, 1], strides = [1, 1]} : vector<64x4xf32> to vector<64x1xf32>
    %124 = vector.shape_cast %123 : vector<64x1xf32> to vector<8x8x1xf32>
    %125 = vector.broadcast %124 : vector<8x8x1xf32> to vector<8x8x8xf32>
    %126 = vector.broadcast %4 : vector<8x1x8xf32> to vector<8x8x8xf32>
    %127 = arith.mulf %125, %126 : vector<8x8x8xf32>
    %cst_85 = arith.constant dense<0.000000e+00> : vector<8x8xf32>
    %128 = vector.multi_reduction <add>, %127, %cst_85 [0] : vector<8x8x8xf32> to vector<8x8xf32>
    %129 = arith.truncf %108 : vector<8x8xf32> to vector<8x8xbf16>
    %130 = arith.truncf %115 : vector<8x8xf32> to vector<8x8xbf16>
    %cst_86 = arith.constant dense<0.000000e+00> : vector<8x8xf32>
    %131 = tpu.matmul %129, %130, %cst_86 {dimension_numbers = #tpu.dot_dimension_numbers<[1], [1], [0], [0], [0, 0, 1, 0], [], []>} : vector<8x8xbf16>, vector<8x8xbf16>, vector<8x8xf32> -> vector<8x8xf32>
    %132 = arith.addf %131, %128 : vector<8x8xf32>
    %133 = arith.mulf %132, %20 : vector<8x8xf32>
    %134 = arith.addf %133, %24 : vector<8x8xf32>
    %cst_87 = arith.constant dense<0xFF800000> : vector<8xf32>
    %135 = vector.multi_reduction <maximumf>, %134, %cst_87 [1] : vector<8x8xf32> to vector<8xf32>
    %136 = vector.shape_cast %135 : vector<8xf32> to vector<8x1xf32>
    %137 = vector.broadcast %136 : vector<8x1xf32> to vector<8x8xf32>
    %138 = arith.subf %134, %137 : vector<8x8xf32>
    %139 = math.exp %138 : vector<8x8xf32>
    %cst_88 = arith.constant dense<0.000000e+00> : vector<8xf32>
    %140 = vector.multi_reduction <add>, %139, %cst_88 [1] : vector<8x8xf32> to vector<8xf32>
    %141 = vector.shape_cast %140 : vector<8xf32> to vector<8x1xf32>
    %142 = tpu.reciprocal %141 {approx = true} : vector<8x1xf32> -> vector<8x1xf32>
    %143 = vector.broadcast %142 : vector<8x1xf32> to vector<8x8xf32>
    %144 = arith.mulf %139, %143 : vector<8x8xf32>
    %145 = arith.truncf %144 : vector<8x8xf32> to vector<8x8xbf16>
    %146 = arith.truncf %122 : vector<8x8xf32> to vector<8x8xbf16>
    %cst_89 = arith.constant dense<0.000000e+00> : vector<8x8xf32>
    %147 = tpu.matmul %145, %146, %cst_89 {dimension_numbers = #tpu.dot_dimension_numbers<[1], [0], [0], [1], [0, 0, 1, 1], [], []>} : vector<8x8xbf16>, vector<8x8xbf16>, vector<8x8xf32> -> vector<8x8xf32>
    %148 = arith.truncf %147 : vector<8x8xf32> to vector<8x8xbf16>
    %c1_90 = arith.constant 1 : index
    %c0_91 = arith.constant 0 : index
    %c0_92 = arith.constant 0 : index
    %149 = vector.load %arg11[%c1_90, %c0_91, %c0_92] : memref<4x8x32xbf16, #tpu.memory_space<vmem>>, vector<1x8x32xbf16>
    %150 = vector.shape_cast %149 : vector<1x8x32xbf16> to vector<8x32xbf16>
    %cst_93 = arith.constant dense<0.000000e+00> : vector<8x32xf32>
    %151 = tpu.matmul %148, %150, %cst_93 {dimension_numbers = #tpu.dot_dimension_numbers<[1], [0], [0], [1], [0, 0, 1, 1], [], []>} : vector<8x8xbf16>, vector<8x32xbf16>, vector<8x32xf32> -> vector<8x32xf32>
    %152 = arith.addf %101, %151 : vector<8x32xf32>
    %c2 = arith.constant 2 : index
    %c0_94 = arith.constant 0 : index
    %c0_95 = arith.constant 0 : index
    %153 = vector.load %arg5[%c2, %c0_94, %c0_95] : memref<4x32x8xbf16, #tpu.memory_space<vmem>>, vector<1x32x8xbf16>
    %154 = vector.shape_cast %153 : vector<1x32x8xbf16> to vector<32x8xbf16>
    %cst_96 = arith.constant dense<0.000000e+00> : vector<8x8xf32>
    %155 = tpu.matmul %14, %154, %cst_96 {dimension_numbers = #tpu.dot_dimension_numbers<[1], [0], [0], [1], [0, 0, 1, 1], [], []>} : vector<8x32xbf16>, vector<32x8xbf16>, vector<8x8xf32> -> vector<8x8xf32>
    %c2_97 = arith.constant 2 : index
    %c0_98 = arith.constant 0 : index
    %c0_99 = arith.constant 0 : index
    %156 = vector.load %arg6[%c2_97, %c0_98, %c0_99] : memref<4x1x8xf32, #tpu.memory_space<vmem>>, vector<1x1x8xf32>
    %157 = vector.shape_cast %156 : vector<1x1x8xf32> to vector<1x8xf32>
    %158 = vector.broadcast %157 : vector<1x8xf32> to vector<8x8xf32>
    %159 = arith.addf %155, %158 : vector<8x8xf32>
    %c2_100 = arith.constant 2 : index
    %c0_101 = arith.constant 0 : index
    %c0_102 = arith.constant 0 : index
    %160 = vector.load %arg7[%c2_100, %c0_101, %c0_102] : memref<4x32x8xbf16, #tpu.memory_space<vmem>>, vector<1x32x8xbf16>
    %161 = vector.shape_cast %160 : vector<1x32x8xbf16> to vector<32x8xbf16>
    %cst_103 = arith.constant dense<0.000000e+00> : vector<8x8xf32>
    %162 = tpu.matmul %16, %161, %cst_103 {dimension_numbers = #tpu.dot_dimension_numbers<[1], [0], [0], [1], [0, 0, 1, 1], [], []>} : vector<8x32xbf16>, vector<32x8xbf16>, vector<8x8xf32> -> vector<8x8xf32>
    %c2_104 = arith.constant 2 : index
    %c0_105 = arith.constant 0 : index
    %c0_106 = arith.constant 0 : index
    %163 = vector.load %arg8[%c2_104, %c0_105, %c0_106] : memref<4x1x8xf32, #tpu.memory_space<vmem>>, vector<1x1x8xf32>
    %164 = vector.shape_cast %163 : vector<1x1x8xf32> to vector<1x8xf32>
    %165 = vector.broadcast %164 : vector<1x8xf32> to vector<8x8xf32>
    %166 = arith.addf %162, %165 : vector<8x8xf32>
    %c2_107 = arith.constant 2 : index
    %c0_108 = arith.constant 0 : index
    %c0_109 = arith.constant 0 : index
    %167 = vector.load %arg9[%c2_107, %c0_108, %c0_109] : memref<4x32x8xbf16, #tpu.memory_space<vmem>>, vector<1x32x8xbf16>
    %168 = vector.shape_cast %167 : vector<1x32x8xbf16> to vector<32x8xbf16>
    %cst_110 = arith.constant dense<0.000000e+00> : vector<8x8xf32>
    %169 = tpu.matmul %16, %168, %cst_110 {dimension_numbers = #tpu.dot_dimension_numbers<[1], [0], [0], [1], [0, 0, 1, 1], [], []>} : vector<8x32xbf16>, vector<32x8xbf16>, vector<8x8xf32> -> vector<8x8xf32>
    %c2_111 = arith.constant 2 : index
    %c0_112 = arith.constant 0 : index
    %c0_113 = arith.constant 0 : index
    %170 = vector.load %arg10[%c2_111, %c0_112, %c0_113] : memref<4x1x8xf32, #tpu.memory_space<vmem>>, vector<1x1x8xf32>
    %171 = vector.shape_cast %170 : vector<1x1x8xf32> to vector<1x8xf32>
    %172 = vector.broadcast %171 : vector<1x8xf32> to vector<8x8xf32>
    %173 = arith.addf %169, %172 : vector<8x8xf32>
    %174 = vector.extract_strided_slice %51 {offsets = [0, 2], sizes = [64, 1], strides = [1, 1]} : vector<64x4xf32> to vector<64x1xf32>
    %175 = vector.shape_cast %174 : vector<64x1xf32> to vector<8x8x1xf32>
    %176 = vector.broadcast %175 : vector<8x8x1xf32> to vector<8x8x8xf32>
    %177 = vector.broadcast %4 : vector<8x1x8xf32> to vector<8x8x8xf32>
    %178 = arith.mulf %176, %177 : vector<8x8x8xf32>
    %cst_114 = arith.constant dense<0.000000e+00> : vector<8x8xf32>
    %179 = vector.multi_reduction <add>, %178, %cst_114 [0] : vector<8x8x8xf32> to vector<8x8xf32>
    %180 = arith.truncf %159 : vector<8x8xf32> to vector<8x8xbf16>
    %181 = arith.truncf %166 : vector<8x8xf32> to vector<8x8xbf16>
    %cst_115 = arith.constant dense<0.000000e+00> : vector<8x8xf32>
    %182 = tpu.matmul %180, %181, %cst_115 {dimension_numbers = #tpu.dot_dimension_numbers<[1], [1], [0], [0], [0, 0, 1, 0], [], []>} : vector<8x8xbf16>, vector<8x8xbf16>, vector<8x8xf32> -> vector<8x8xf32>
    %183 = arith.addf %182, %179 : vector<8x8xf32>
    %184 = arith.mulf %183, %20 : vector<8x8xf32>
    %185 = arith.addf %184, %24 : vector<8x8xf32>
    %cst_116 = arith.constant dense<0xFF800000> : vector<8xf32>
    %186 = vector.multi_reduction <maximumf>, %185, %cst_116 [1] : vector<8x8xf32> to vector<8xf32>
    %187 = vector.shape_cast %186 : vector<8xf32> to vector<8x1xf32>
    %188 = vector.broadcast %187 : vector<8x1xf32> to vector<8x8xf32>
    %189 = arith.subf %185, %188 : vector<8x8xf32>
    %190 = math.exp %189 : vector<8x8xf32>
    %cst_117 = arith.constant dense<0.000000e+00> : vector<8xf32>
    %191 = vector.multi_reduction <add>, %190, %cst_117 [1] : vector<8x8xf32> to vector<8xf32>
    %192 = vector.shape_cast %191 : vector<8xf32> to vector<8x1xf32>
    %193 = tpu.reciprocal %192 {approx = true} : vector<8x1xf32> -> vector<8x1xf32>
    %194 = vector.broadcast %193 : vector<8x1xf32> to vector<8x8xf32>
    %195 = arith.mulf %190, %194 : vector<8x8xf32>
    %196 = arith.truncf %195 : vector<8x8xf32> to vector<8x8xbf16>
    %197 = arith.truncf %173 : vector<8x8xf32> to vector<8x8xbf16>
    %cst_118 = arith.constant dense<0.000000e+00> : vector<8x8xf32>
    %198 = tpu.matmul %196, %197, %cst_118 {dimension_numbers = #tpu.dot_dimension_numbers<[1], [0], [0], [1], [0, 0, 1, 1], [], []>} : vector<8x8xbf16>, vector<8x8xbf16>, vector<8x8xf32> -> vector<8x8xf32>
    %199 = arith.truncf %198 : vector<8x8xf32> to vector<8x8xbf16>
    %c2_119 = arith.constant 2 : index
    %c0_120 = arith.constant 0 : index
    %c0_121 = arith.constant 0 : index
    %200 = vector.load %arg11[%c2_119, %c0_120, %c0_121] : memref<4x8x32xbf16, #tpu.memory_space<vmem>>, vector<1x8x32xbf16>
    %201 = vector.shape_cast %200 : vector<1x8x32xbf16> to vector<8x32xbf16>
    %cst_122 = arith.constant dense<0.000000e+00> : vector<8x32xf32>
    %202 = tpu.matmul %199, %201, %cst_122 {dimension_numbers = #tpu.dot_dimension_numbers<[1], [0], [0], [1], [0, 0, 1, 1], [], []>} : vector<8x8xbf16>, vector<8x32xbf16>, vector<8x32xf32> -> vector<8x32xf32>
    %203 = arith.addf %152, %202 : vector<8x32xf32>
    %c3 = arith.constant 3 : index
    %c0_123 = arith.constant 0 : index
    %c0_124 = arith.constant 0 : index
    %204 = vector.load %arg5[%c3, %c0_123, %c0_124] : memref<4x32x8xbf16, #tpu.memory_space<vmem>>, vector<1x32x8xbf16>
    %205 = vector.shape_cast %204 : vector<1x32x8xbf16> to vector<32x8xbf16>
    %cst_125 = arith.constant dense<0.000000e+00> : vector<8x8xf32>
    %206 = tpu.matmul %14, %205, %cst_125 {dimension_numbers = #tpu.dot_dimension_numbers<[1], [0], [0], [1], [0, 0, 1, 1], [], []>} : vector<8x32xbf16>, vector<32x8xbf16>, vector<8x8xf32> -> vector<8x8xf32>
    %c3_126 = arith.constant 3 : index
    %c0_127 = arith.constant 0 : index
    %c0_128 = arith.constant 0 : index
    %207 = vector.load %arg6[%c3_126, %c0_127, %c0_128] : memref<4x1x8xf32, #tpu.memory_space<vmem>>, vector<1x1x8xf32>
    %208 = vector.shape_cast %207 : vector<1x1x8xf32> to vector<1x8xf32>
    %209 = vector.broadcast %208 : vector<1x8xf32> to vector<8x8xf32>
    %210 = arith.addf %206, %209 : vector<8x8xf32>
    %c3_129 = arith.constant 3 : index
    %c0_130 = arith.constant 0 : index
    %c0_131 = arith.constant 0 : index
    %211 = vector.load %arg7[%c3_129, %c0_130, %c0_131] : memref<4x32x8xbf16, #tpu.memory_space<vmem>>, vector<1x32x8xbf16>
    %212 = vector.shape_cast %211 : vector<1x32x8xbf16> to vector<32x8xbf16>
    %cst_132 = arith.constant dense<0.000000e+00> : vector<8x8xf32>
    %213 = tpu.matmul %16, %212, %cst_132 {dimension_numbers = #tpu.dot_dimension_numbers<[1], [0], [0], [1], [0, 0, 1, 1], [], []>} : vector<8x32xbf16>, vector<32x8xbf16>, vector<8x8xf32> -> vector<8x8xf32>
    %c3_133 = arith.constant 3 : index
    %c0_134 = arith.constant 0 : index
    %c0_135 = arith.constant 0 : index
    %214 = vector.load %arg8[%c3_133, %c0_134, %c0_135] : memref<4x1x8xf32, #tpu.memory_space<vmem>>, vector<1x1x8xf32>
    %215 = vector.shape_cast %214 : vector<1x1x8xf32> to vector<1x8xf32>
    %216 = vector.broadcast %215 : vector<1x8xf32> to vector<8x8xf32>
    %217 = arith.addf %213, %216 : vector<8x8xf32>
    %c3_136 = arith.constant 3 : index
    %c0_137 = arith.constant 0 : index
    %c0_138 = arith.constant 0 : index
    %218 = vector.load %arg9[%c3_136, %c0_137, %c0_138] : memref<4x32x8xbf16, #tpu.memory_space<vmem>>, vector<1x32x8xbf16>
    %219 = vector.shape_cast %218 : vector<1x32x8xbf16> to vector<32x8xbf16>
    %cst_139 = arith.constant dense<0.000000e+00> : vector<8x8xf32>
    %220 = tpu.matmul %16, %219, %cst_139 {dimension_numbers = #tpu.dot_dimension_numbers<[1], [0], [0], [1], [0, 0, 1, 1], [], []>} : vector<8x32xbf16>, vector<32x8xbf16>, vector<8x8xf32> -> vector<8x8xf32>
    %c3_140 = arith.constant 3 : index
    %c0_141 = arith.constant 0 : index
    %c0_142 = arith.constant 0 : index
    %221 = vector.load %arg10[%c3_140, %c0_141, %c0_142] : memref<4x1x8xf32, #tpu.memory_space<vmem>>, vector<1x1x8xf32>
    %222 = vector.shape_cast %221 : vector<1x1x8xf32> to vector<1x8xf32>
    %223 = vector.broadcast %222 : vector<1x8xf32> to vector<8x8xf32>
    %224 = arith.addf %220, %223 : vector<8x8xf32>
    %225 = vector.extract_strided_slice %51 {offsets = [0, 3], sizes = [64, 1], strides = [1, 1]} : vector<64x4xf32> to vector<64x1xf32>
    %226 = vector.shape_cast %225 : vector<64x1xf32> to vector<8x8x1xf32>
    %227 = vector.broadcast %226 : vector<8x8x1xf32> to vector<8x8x8xf32>
    %228 = vector.broadcast %4 : vector<8x1x8xf32> to vector<8x8x8xf32>
    %229 = arith.mulf %227, %228 : vector<8x8x8xf32>
    %cst_143 = arith.constant dense<0.000000e+00> : vector<8x8xf32>
    %230 = vector.multi_reduction <add>, %229, %cst_143 [0] : vector<8x8x8xf32> to vector<8x8xf32>
    %231 = arith.truncf %210 : vector<8x8xf32> to vector<8x8xbf16>
    %232 = arith.truncf %217 : vector<8x8xf32> to vector<8x8xbf16>
    %cst_144 = arith.constant dense<0.000000e+00> : vector<8x8xf32>
    %233 = tpu.matmul %231, %232, %cst_144 {dimension_numbers = #tpu.dot_dimension_numbers<[1], [1], [0], [0], [0, 0, 1, 0], [], []>} : vector<8x8xbf16>, vector<8x8xbf16>, vector<8x8xf32> -> vector<8x8xf32>
    %234 = arith.addf %233, %230 : vector<8x8xf32>
    %235 = arith.mulf %234, %20 : vector<8x8xf32>
    %236 = arith.addf %235, %24 : vector<8x8xf32>
    %cst_145 = arith.constant dense<0xFF800000> : vector<8xf32>
    %237 = vector.multi_reduction <maximumf>, %236, %cst_145 [1] : vector<8x8xf32> to vector<8xf32>
    %238 = vector.shape_cast %237 : vector<8xf32> to vector<8x1xf32>
    %239 = vector.broadcast %238 : vector<8x1xf32> to vector<8x8xf32>
    %240 = arith.subf %236, %239 : vector<8x8xf32>
    %241 = math.exp %240 : vector<8x8xf32>
    %cst_146 = arith.constant dense<0.000000e+00> : vector<8xf32>
    %242 = vector.multi_reduction <add>, %241, %cst_146 [1] : vector<8x8xf32> to vector<8xf32>
    %243 = vector.shape_cast %242 : vector<8xf32> to vector<8x1xf32>
    %244 = tpu.reciprocal %243 {approx = true} : vector<8x1xf32> -> vector<8x1xf32>
    %245 = vector.broadcast %244 : vector<8x1xf32> to vector<8x8xf32>
    %246 = arith.mulf %241, %245 : vector<8x8xf32>
    %247 = arith.truncf %246 : vector<8x8xf32> to vector<8x8xbf16>
    %248 = arith.truncf %224 : vector<8x8xf32> to vector<8x8xbf16>
    %cst_147 = arith.constant dense<0.000000e+00> : vector<8x8xf32>
    %249 = tpu.matmul %247, %248, %cst_147 {dimension_numbers = #tpu.dot_dimension_numbers<[1], [0], [0], [1], [0, 0, 1, 1], [], []>} : vector<8x8xbf16>, vector<8x8xbf16>, vector<8x8xf32> -> vector<8x8xf32>
    %250 = arith.truncf %249 : vector<8x8xf32> to vector<8x8xbf16>
    %c3_148 = arith.constant 3 : index
    %c0_149 = arith.constant 0 : index
    %c0_150 = arith.constant 0 : index
    %251 = vector.load %arg11[%c3_148, %c0_149, %c0_150] : memref<4x8x32xbf16, #tpu.memory_space<vmem>>, vector<1x8x32xbf16>
    %252 = vector.shape_cast %251 : vector<1x8x32xbf16> to vector<8x32xbf16>
    %cst_151 = arith.constant dense<0.000000e+00> : vector<8x32xf32>
    %253 = tpu.matmul %250, %252, %cst_151 {dimension_numbers = #tpu.dot_dimension_numbers<[1], [0], [0], [1], [0, 0, 1, 1], [], []>} : vector<8x8xbf16>, vector<8x32xbf16>, vector<8x32xf32> -> vector<8x32xf32>
    %254 = arith.addf %203, %253 : vector<8x32xf32>
    %255 = vector.broadcast %12 : vector<1x32xf32> to vector<8x32xf32>
    %256 = arith.addf %254, %255 : vector<8x32xf32>
    %c0_152 = arith.constant 0 : index
    %c0_153 = arith.constant 0 : index
    %c0_154 = arith.constant 0 : index
    %257 = vector.load %arg20[%c0_152, %c0_153, %c0_154] : memref<2x8x32xf32, #tpu.memory_space<vmem>>, vector<1x8x32xf32>
    %258 = vector.shape_cast %257 : vector<1x8x32xf32> to vector<8x32xf32>
    %259 = vector.shape_cast %256 : vector<8x32xf32> to vector<1x8x32xf32>
    tpu.vector_store %arg20[%c0_152, %c0_153, %c0_154], %259 {strides = array<i32>} : memref<2x8x32xf32, #tpu.memory_space<vmem>>, vector<1x8x32xf32>,
    %c1_155 = arith.constant 1 : index
    %c0_156 = arith.constant 0 : index
    %c0_157 = arith.constant 0 : index
    %260 = vector.load %arg1[%c1_155, %c0_156, %c0_157] : memref<2x8x32xbf16, #tpu.memory_space<vmem>>, vector<1x8x32xbf16>
    %261 = vector.shape_cast %260 : vector<1x8x32xbf16> to vector<8x32xbf16>
    %c1_158 = arith.constant 1 : index
    %c0_159 = arith.constant 0 : index
    %c0_160 = arith.constant 0 : index
    %262 = vector.load %arg2[%c1_158, %c0_159, %c0_160] : memref<2x8x32xbf16, #tpu.memory_space<vmem>>, vector<1x8x32xbf16>
    %263 = vector.shape_cast %262 : vector<1x8x32xbf16> to vector<8x32xbf16>
    %c1_161 = arith.constant 1 : index
    %c0_162 = arith.constant 0 : index
    %c0_163 = arith.constant 0 : index
    %264 = vector.load %arg3[%c1_161, %c0_162, %c0_163] : memref<2x8x8xf32, #tpu.memory_space<vmem>>, vector<1x8x8xf32>
    %265 = vector.shape_cast %264 : vector<1x8x8xf32> to vector<8x8xf32>
    %c1_164 = arith.constant 1 : index
    %c0_165 = arith.constant 0 : index
    %c0_166 = arith.constant 0 : index
    %266 = vector.load %arg4[%c1_164, %c0_165, %c0_166] : memref<2x8x8xf32, #tpu.memory_space<vmem>>, vector<1x8x8xf32>
    %267 = vector.shape_cast %266 : vector<1x8x8xf32> to vector<8x8xf32>
    %cst_167 = arith.constant 1.000000e+00 : f32
    %268 = vector.broadcast %cst_167 : f32 to vector<8x8xf32>
    %269 = arith.subf %267, %268 : vector<8x8xf32>
    %cst_168 = arith.constant 1.000000e+09 : f32
    %270 = vector.broadcast %cst_168 : f32 to vector<8x8xf32>
    %271 = arith.mulf %269, %270 : vector<8x8xf32>
    %272 = vector.shape_cast %265 : vector<8x8xf32> to vector<1x8x8xf32>
    %273 = vector.broadcast %272 : vector<1x8x8xf32> to vector<8x8x8xf32>
    %274 = vector.broadcast %4 : vector<8x1x8xf32> to vector<8x8x8xf32>
    %275 = arith.mulf %273, %274 : vector<8x8x8xf32>
    %cst_169 = arith.constant dense<0.000000e+00> : vector<8x8xf32>
    %276 = vector.multi_reduction <add>, %275, %cst_169 [2] : vector<8x8x8xf32> to vector<8x8xf32>
    %277 = vector.shape_cast %276 : vector<8x8xf32> to vector<8x8x1xf32>
    %278 = vector.shape_cast %277 : vector<8x8x1xf32> to vector<64x1xf32>
    %279 = vector.broadcast %278 : vector<64x1xf32> to vector<64x32xf32>
    %280 = vector.broadcast %5 : vector<1x32xf32> to vector<64x32xf32>
    %281 = arith.subf %279, %280 : vector<64x32xf32>
    %282 = arith.mulf %281, %281 : vector<64x32xf32>
    %cst_170 = arith.constant -4.80500031 : f32
    %283 = vector.broadcast %cst_170 : f32 to vector<64x32xf32>
    %284 = arith.mulf %283, %282 : vector<64x32xf32>
    %285 = math.exp %284 : vector<64x32xf32>
    %cst_171 = arith.constant dense<0.000000e+00> : vector<64x32xf32>
    %286 = tpu.matmul %285, %6, %cst_171 {dimension_numbers = #tpu.dot_dimension_numbers<[1], [0], [0], [1], [0, 0, 1, 1], [], []>} : vector<64x32xf32>, vector<32x32xf32>, vector<64x32xf32> -> vector<64x32xf32>
    %287 = vector.broadcast %7 : vector<1x32xf32> to vector<64x32xf32>
    %288 = arith.addf %286, %287 : vector<64x32xf32>
    %cst_172 = arith.constant 0.000000e+00 : f32
    %289 = vector.broadcast %cst_172 : f32 to vector<64x32xf32>
    %290 = arith.maximumf %288, %289 : vector<64x32xf32>
    %cst_173 = arith.constant dense<0.000000e+00> : vector<64x32xf32>
    %291 = tpu.matmul %290, %8, %cst_173 {dimension_numbers = #tpu.dot_dimension_numbers<[1], [0], [0], [1], [0, 0, 1, 1], [], []>} : vector<64x32xf32>, vector<32x32xf32>, vector<64x32xf32> -> vector<64x32xf32>
    %292 = vector.broadcast %9 : vector<1x32xf32> to vector<64x32xf32>
    %293 = arith.addf %291, %292 : vector<64x32xf32>
    %cst_174 = arith.constant 0.000000e+00 : f32
    %294 = vector.broadcast %cst_174 : f32 to vector<64x32xf32>
    %295 = arith.maximumf %293, %294 : vector<64x32xf32>
    %cst_175 = arith.constant dense<0.000000e+00> : vector<64x4xf32>
    %296 = tpu.matmul %295, %10, %cst_175 {dimension_numbers = #tpu.dot_dimension_numbers<[1], [0], [0], [1], [0, 0, 1, 1], [], []>} : vector<64x32xf32>, vector<32x4xf32>, vector<64x4xf32> -> vector<64x4xf32>
    %297 = vector.broadcast %11 : vector<1x4xf32> to vector<64x4xf32>
    %298 = arith.addf %296, %297 : vector<64x4xf32>
    %c0_176 = arith.constant 0 : index
    %c0_177 = arith.constant 0 : index
    %c0_178 = arith.constant 0 : index
    %299 = vector.load %arg5[%c0_176, %c0_177, %c0_178] : memref<4x32x8xbf16, #tpu.memory_space<vmem>>, vector<1x32x8xbf16>
    %300 = vector.shape_cast %299 : vector<1x32x8xbf16> to vector<32x8xbf16>
    %cst_179 = arith.constant dense<0.000000e+00> : vector<8x8xf32>
    %301 = tpu.matmul %261, %300, %cst_179 {dimension_numbers = #tpu.dot_dimension_numbers<[1], [0], [0], [1], [0, 0, 1, 1], [], []>} : vector<8x32xbf16>, vector<32x8xbf16>, vector<8x8xf32> -> vector<8x8xf32>
    %c0_180 = arith.constant 0 : index
    %c0_181 = arith.constant 0 : index
    %c0_182 = arith.constant 0 : index
    %302 = vector.load %arg6[%c0_180, %c0_181, %c0_182] : memref<4x1x8xf32, #tpu.memory_space<vmem>>, vector<1x1x8xf32>
    %303 = vector.shape_cast %302 : vector<1x1x8xf32> to vector<1x8xf32>
    %304 = vector.broadcast %303 : vector<1x8xf32> to vector<8x8xf32>
    %305 = arith.addf %301, %304 : vector<8x8xf32>
    %c0_183 = arith.constant 0 : index
    %c0_184 = arith.constant 0 : index
    %c0_185 = arith.constant 0 : index
    %306 = vector.load %arg7[%c0_183, %c0_184, %c0_185] : memref<4x32x8xbf16, #tpu.memory_space<vmem>>, vector<1x32x8xbf16>
    %307 = vector.shape_cast %306 : vector<1x32x8xbf16> to vector<32x8xbf16>
    %cst_186 = arith.constant dense<0.000000e+00> : vector<8x8xf32>
    %308 = tpu.matmul %263, %307, %cst_186 {dimension_numbers = #tpu.dot_dimension_numbers<[1], [0], [0], [1], [0, 0, 1, 1], [], []>} : vector<8x32xbf16>, vector<32x8xbf16>, vector<8x8xf32> -> vector<8x8xf32>
    %c0_187 = arith.constant 0 : index
    %c0_188 = arith.constant 0 : index
    %c0_189 = arith.constant 0 : index
    %309 = vector.load %arg8[%c0_187, %c0_188, %c0_189] : memref<4x1x8xf32, #tpu.memory_space<vmem>>, vector<1x1x8xf32>
    %310 = vector.shape_cast %309 : vector<1x1x8xf32> to vector<1x8xf32>
    %311 = vector.broadcast %310 : vector<1x8xf32> to vector<8x8xf32>
    %312 = arith.addf %308, %311 : vector<8x8xf32>
    %c0_190 = arith.constant 0 : index
    %c0_191 = arith.constant 0 : index
    %c0_192 = arith.constant 0 : index
    %313 = vector.load %arg9[%c0_190, %c0_191, %c0_192] : memref<4x32x8xbf16, #tpu.memory_space<vmem>>, vector<1x32x8xbf16>
    %314 = vector.shape_cast %313 : vector<1x32x8xbf16> to vector<32x8xbf16>
    %cst_193 = arith.constant dense<0.000000e+00> : vector<8x8xf32>
    %315 = tpu.matmul %263, %314, %cst_193 {dimension_numbers = #tpu.dot_dimension_numbers<[1], [0], [0], [1], [0, 0, 1, 1], [], []>} : vector<8x32xbf16>, vector<32x8xbf16>, vector<8x8xf32> -> vector<8x8xf32>
    %c0_194 = arith.constant 0 : index
    %c0_195 = arith.constant 0 : index
    %c0_196 = arith.constant 0 : index
    %316 = vector.load %arg10[%c0_194, %c0_195, %c0_196] : memref<4x1x8xf32, #tpu.memory_space<vmem>>, vector<1x1x8xf32>
    %317 = vector.shape_cast %316 : vector<1x1x8xf32> to vector<1x8xf32>
    %318 = vector.broadcast %317 : vector<1x8xf32> to vector<8x8xf32>
    %319 = arith.addf %315, %318 : vector<8x8xf32>
    %320 = vector.extract_strided_slice %298 {offsets = [0, 0], sizes = [64, 1], strides = [1, 1]} : vector<64x4xf32> to vector<64x1xf32>
    %321 = vector.shape_cast %320 : vector<64x1xf32> to vector<8x8x1xf32>
    %322 = vector.broadcast %321 : vector<8x8x1xf32> to vector<8x8x8xf32>
    %323 = vector.broadcast %4 : vector<8x1x8xf32> to vector<8x8x8xf32>
    %324 = arith.mulf %322, %323 : vector<8x8x8xf32>
    %cst_197 = arith.constant dense<0.000000e+00> : vector<8x8xf32>
    %325 = vector.multi_reduction <add>, %324, %cst_197 [0] : vector<8x8x8xf32> to vector<8x8xf32>
    %326 = arith.truncf %305 : vector<8x8xf32> to vector<8x8xbf16>
    %327 = arith.truncf %312 : vector<8x8xf32> to vector<8x8xbf16>
    %cst_198 = arith.constant dense<0.000000e+00> : vector<8x8xf32>
    %328 = tpu.matmul %326, %327, %cst_198 {dimension_numbers = #tpu.dot_dimension_numbers<[1], [1], [0], [0], [0, 0, 1, 0], [], []>} : vector<8x8xbf16>, vector<8x8xbf16>, vector<8x8xf32> -> vector<8x8xf32>
    %329 = arith.addf %328, %325 : vector<8x8xf32>
    %330 = arith.mulf %329, %267 : vector<8x8xf32>
    %331 = arith.addf %330, %271 : vector<8x8xf32>
    %cst_199 = arith.constant dense<0xFF800000> : vector<8xf32>
    %332 = vector.multi_reduction <maximumf>, %331, %cst_199 [1] : vector<8x8xf32> to vector<8xf32>
    %333 = vector.shape_cast %332 : vector<8xf32> to vector<8x1xf32>
    %334 = vector.broadcast %333 : vector<8x1xf32> to vector<8x8xf32>
    %335 = arith.subf %331, %334 : vector<8x8xf32>
    %336 = math.exp %335 : vector<8x8xf32>
    %cst_200 = arith.constant dense<0.000000e+00> : vector<8xf32>
    %337 = vector.multi_reduction <add>, %336, %cst_200 [1] : vector<8x8xf32> to vector<8xf32>
    %338 = vector.shape_cast %337 : vector<8xf32> to vector<8x1xf32>
    %339 = tpu.reciprocal %338 {approx = true} : vector<8x1xf32> -> vector<8x1xf32>
    %340 = vector.broadcast %339 : vector<8x1xf32> to vector<8x8xf32>
    %341 = arith.mulf %336, %340 : vector<8x8xf32>
    %342 = arith.truncf %341 : vector<8x8xf32> to vector<8x8xbf16>
    %343 = arith.truncf %319 : vector<8x8xf32> to vector<8x8xbf16>
    %cst_201 = arith.constant dense<0.000000e+00> : vector<8x8xf32>
    %344 = tpu.matmul %342, %343, %cst_201 {dimension_numbers = #tpu.dot_dimension_numbers<[1], [0], [0], [1], [0, 0, 1, 1], [], []>} : vector<8x8xbf16>, vector<8x8xbf16>, vector<8x8xf32> -> vector<8x8xf32>
    %345 = arith.truncf %344 : vector<8x8xf32> to vector<8x8xbf16>
    %c0_202 = arith.constant 0 : index
    %c0_203 = arith.constant 0 : index
    %c0_204 = arith.constant 0 : index
    %346 = vector.load %arg11[%c0_202, %c0_203, %c0_204] : memref<4x8x32xbf16, #tpu.memory_space<vmem>>, vector<1x8x32xbf16>
    %347 = vector.shape_cast %346 : vector<1x8x32xbf16> to vector<8x32xbf16>
    %cst_205 = arith.constant dense<0.000000e+00> : vector<8x32xf32>
    %348 = tpu.matmul %345, %347, %cst_205 {dimension_numbers = #tpu.dot_dimension_numbers<[1], [0], [0], [1], [0, 0, 1, 1], [], []>} : vector<8x8xbf16>, vector<8x32xbf16>, vector<8x32xf32> -> vector<8x32xf32>
    %c1_206 = arith.constant 1 : index
    %c0_207 = arith.constant 0 : index
    %c0_208 = arith.constant 0 : index
    %349 = vector.load %arg5[%c1_206, %c0_207, %c0_208] : memref<4x32x8xbf16, #tpu.memory_space<vmem>>, vector<1x32x8xbf16>
    %350 = vector.shape_cast %349 : vector<1x32x8xbf16> to vector<32x8xbf16>
    %cst_209 = arith.constant dense<0.000000e+00> : vector<8x8xf32>
    %351 = tpu.matmul %261, %350, %cst_209 {dimension_numbers = #tpu.dot_dimension_numbers<[1], [0], [0], [1], [0, 0, 1, 1], [], []>} : vector<8x32xbf16>, vector<32x8xbf16>, vector<8x8xf32> -> vector<8x8xf32>
    %c1_210 = arith.constant 1 : index
    %c0_211 = arith.constant 0 : index
    %c0_212 = arith.constant 0 : index
    %352 = vector.load %arg6[%c1_210, %c0_211, %c0_212] : memref<4x1x8xf32, #tpu.memory_space<vmem>>, vector<1x1x8xf32>
    %353 = vector.shape_cast %352 : vector<1x1x8xf32> to vector<1x8xf32>
    %354 = vector.broadcast %353 : vector<1x8xf32> to vector<8x8xf32>
    %355 = arith.addf %351, %354 : vector<8x8xf32>
    %c1_213 = arith.constant 1 : index
    %c0_214 = arith.constant 0 : index
    %c0_215 = arith.constant 0 : index
    %356 = vector.load %arg7[%c1_213, %c0_214, %c0_215] : memref<4x32x8xbf16, #tpu.memory_space<vmem>>, vector<1x32x8xbf16>
    %357 = vector.shape_cast %356 : vector<1x32x8xbf16> to vector<32x8xbf16>
    %cst_216 = arith.constant dense<0.000000e+00> : vector<8x8xf32>
    %358 = tpu.matmul %263, %357, %cst_216 {dimension_numbers = #tpu.dot_dimension_numbers<[1], [0], [0], [1], [0, 0, 1, 1], [], []>} : vector<8x32xbf16>, vector<32x8xbf16>, vector<8x8xf32> -> vector<8x8xf32>
    %c1_217 = arith.constant 1 : index
    %c0_218 = arith.constant 0 : index
    %c0_219 = arith.constant 0 : index
    %359 = vector.load %arg8[%c1_217, %c0_218, %c0_219] : memref<4x1x8xf32, #tpu.memory_space<vmem>>, vector<1x1x8xf32>
    %360 = vector.shape_cast %359 : vector<1x1x8xf32> to vector<1x8xf32>
    %361 = vector.broadcast %360 : vector<1x8xf32> to vector<8x8xf32>
    %362 = arith.addf %358, %361 : vector<8x8xf32>
    %c1_220 = arith.constant 1 : index
    %c0_221 = arith.constant 0 : index
    %c0_222 = arith.constant 0 : index
    %363 = vector.load %arg9[%c1_220, %c0_221, %c0_222] : memref<4x32x8xbf16, #tpu.memory_space<vmem>>, vector<1x32x8xbf16>
    %364 = vector.shape_cast %363 : vector<1x32x8xbf16> to vector<32x8xbf16>
    %cst_223 = arith.constant dense<0.000000e+00> : vector<8x8xf32>
    %365 = tpu.matmul %263, %364, %cst_223 {dimension_numbers = #tpu.dot_dimension_numbers<[1], [0], [0], [1], [0, 0, 1, 1], [], []>} : vector<8x32xbf16>, vector<32x8xbf16>, vector<8x8xf32> -> vector<8x8xf32>
    %c1_224 = arith.constant 1 : index
    %c0_225 = arith.constant 0 : index
    %c0_226 = arith.constant 0 : index
    %366 = vector.load %arg10[%c1_224, %c0_225, %c0_226] : memref<4x1x8xf32, #tpu.memory_space<vmem>>, vector<1x1x8xf32>
    %367 = vector.shape_cast %366 : vector<1x1x8xf32> to vector<1x8xf32>
    %368 = vector.broadcast %367 : vector<1x8xf32> to vector<8x8xf32>
    %369 = arith.addf %365, %368 : vector<8x8xf32>
    %370 = vector.extract_strided_slice %298 {offsets = [0, 1], sizes = [64, 1], strides = [1, 1]} : vector<64x4xf32> to vector<64x1xf32>
    %371 = vector.shape_cast %370 : vector<64x1xf32> to vector<8x8x1xf32>
    %372 = vector.broadcast %371 : vector<8x8x1xf32> to vector<8x8x8xf32>
    %373 = vector.broadcast %4 : vector<8x1x8xf32> to vector<8x8x8xf32>
    %374 = arith.mulf %372, %373 : vector<8x8x8xf32>
    %cst_227 = arith.constant dense<0.000000e+00> : vector<8x8xf32>
    %375 = vector.multi_reduction <add>, %374, %cst_227 [0] : vector<8x8x8xf32> to vector<8x8xf32>
    %376 = arith.truncf %355 : vector<8x8xf32> to vector<8x8xbf16>
    %377 = arith.truncf %362 : vector<8x8xf32> to vector<8x8xbf16>
    %cst_228 = arith.constant dense<0.000000e+00> : vector<8x8xf32>
    %378 = tpu.matmul %376, %377, %cst_228 {dimension_numbers = #tpu.dot_dimension_numbers<[1], [1], [0], [0], [0, 0, 1, 0], [], []>} : vector<8x8xbf16>, vector<8x8xbf16>, vector<8x8xf32> -> vector<8x8xf32>
    %379 = arith.addf %378, %375 : vector<8x8xf32>
    %380 = arith.mulf %379, %267 : vector<8x8xf32>
    %381 = arith.addf %380, %271 : vector<8x8xf32>
    %cst_229 = arith.constant dense<0xFF800000> : vector<8xf32>
    %382 = vector.multi_reduction <maximumf>, %381, %cst_229 [1] : vector<8x8xf32> to vector<8xf32>
    %383 = vector.shape_cast %382 : vector<8xf32> to vector<8x1xf32>
    %384 = vector.broadcast %383 : vector<8x1xf32> to vector<8x8xf32>
    %385 = arith.subf %381, %384 : vector<8x8xf32>
    %386 = math.exp %385 : vector<8x8xf32>
    %cst_230 = arith.constant dense<0.000000e+00> : vector<8xf32>
    %387 = vector.multi_reduction <add>, %386, %cst_230 [1] : vector<8x8xf32> to vector<8xf32>
    %388 = vector.shape_cast %387 : vector<8xf32> to vector<8x1xf32>
    %389 = tpu.reciprocal %388 {approx = true} : vector<8x1xf32> -> vector<8x1xf32>
    %390 = vector.broadcast %389 : vector<8x1xf32> to vector<8x8xf32>
    %391 = arith.mulf %386, %390 : vector<8x8xf32>
    %392 = arith.truncf %391 : vector<8x8xf32> to vector<8x8xbf16>
    %393 = arith.truncf %369 : vector<8x8xf32> to vector<8x8xbf16>
    %cst_231 = arith.constant dense<0.000000e+00> : vector<8x8xf32>
    %394 = tpu.matmul %392, %393, %cst_231 {dimension_numbers = #tpu.dot_dimension_numbers<[1], [0], [0], [1], [0, 0, 1, 1], [], []>} : vector<8x8xbf16>, vector<8x8xbf16>, vector<8x8xf32> -> vector<8x8xf32>
    %395 = arith.truncf %394 : vector<8x8xf32> to vector<8x8xbf16>
    %c1_232 = arith.constant 1 : index
    %c0_233 = arith.constant 0 : index
    %c0_234 = arith.constant 0 : index
    %396 = vector.load %arg11[%c1_232, %c0_233, %c0_234] : memref<4x8x32xbf16, #tpu.memory_space<vmem>>, vector<1x8x32xbf16>
    %397 = vector.shape_cast %396 : vector<1x8x32xbf16> to vector<8x32xbf16>
    %cst_235 = arith.constant dense<0.000000e+00> : vector<8x32xf32>
    %398 = tpu.matmul %395, %397, %cst_235 {dimension_numbers = #tpu.dot_dimension_numbers<[1], [0], [0], [1], [0, 0, 1, 1], [], []>} : vector<8x8xbf16>, vector<8x32xbf16>, vector<8x32xf32> -> vector<8x32xf32>
    %399 = arith.addf %348, %398 : vector<8x32xf32>
    %c2_236 = arith.constant 2 : index
    %c0_237 = arith.constant 0 : index
    %c0_238 = arith.constant 0 : index
    %400 = vector.load %arg5[%c2_236, %c0_237, %c0_238] : memref<4x32x8xbf16, #tpu.memory_space<vmem>>, vector<1x32x8xbf16>
    %401 = vector.shape_cast %400 : vector<1x32x8xbf16> to vector<32x8xbf16>
    %cst_239 = arith.constant dense<0.000000e+00> : vector<8x8xf32>
    %402 = tpu.matmul %261, %401, %cst_239 {dimension_numbers = #tpu.dot_dimension_numbers<[1], [0], [0], [1], [0, 0, 1, 1], [], []>} : vector<8x32xbf16>, vector<32x8xbf16>, vector<8x8xf32> -> vector<8x8xf32>
    %c2_240 = arith.constant 2 : index
    %c0_241 = arith.constant 0 : index
    %c0_242 = arith.constant 0 : index
    %403 = vector.load %arg6[%c2_240, %c0_241, %c0_242] : memref<4x1x8xf32, #tpu.memory_space<vmem>>, vector<1x1x8xf32>
    %404 = vector.shape_cast %403 : vector<1x1x8xf32> to vector<1x8xf32>
    %405 = vector.broadcast %404 : vector<1x8xf32> to vector<8x8xf32>
    %406 = arith.addf %402, %405 : vector<8x8xf32>
    %c2_243 = arith.constant 2 : index
    %c0_244 = arith.constant 0 : index
    %c0_245 = arith.constant 0 : index
    %407 = vector.load %arg7[%c2_243, %c0_244, %c0_245] : memref<4x32x8xbf16, #tpu.memory_space<vmem>>, vector<1x32x8xbf16>
    %408 = vector.shape_cast %407 : vector<1x32x8xbf16> to vector<32x8xbf16>
    %cst_246 = arith.constant dense<0.000000e+00> : vector<8x8xf32>
    %409 = tpu.matmul %263, %408, %cst_246 {dimension_numbers = #tpu.dot_dimension_numbers<[1], [0], [0], [1], [0, 0, 1, 1], [], []>} : vector<8x32xbf16>, vector<32x8xbf16>, vector<8x8xf32> -> vector<8x8xf32>
    %c2_247 = arith.constant 2 : index
    %c0_248 = arith.constant 0 : index
    %c0_249 = arith.constant 0 : index
    %410 = vector.load %arg8[%c2_247, %c0_248, %c0_249] : memref<4x1x8xf32, #tpu.memory_space<vmem>>, vector<1x1x8xf32>
    %411 = vector.shape_cast %410 : vector<1x1x8xf32> to vector<1x8xf32>
    %412 = vector.broadcast %411 : vector<1x8xf32> to vector<8x8xf32>
    %413 = arith.addf %409, %412 : vector<8x8xf32>
    %c2_250 = arith.constant 2 : index
    %c0_251 = arith.constant 0 : index
    %c0_252 = arith.constant 0 : index
    %414 = vector.load %arg9[%c2_250, %c0_251, %c0_252] : memref<4x32x8xbf16, #tpu.memory_space<vmem>>, vector<1x32x8xbf16>
    %415 = vector.shape_cast %414 : vector<1x32x8xbf16> to vector<32x8xbf16>
    %cst_253 = arith.constant dense<0.000000e+00> : vector<8x8xf32>
    %416 = tpu.matmul %263, %415, %cst_253 {dimension_numbers = #tpu.dot_dimension_numbers<[1], [0], [0], [1], [0, 0, 1, 1], [], []>} : vector<8x32xbf16>, vector<32x8xbf16>, vector<8x8xf32> -> vector<8x8xf32>
    %c2_254 = arith.constant 2 : index
    %c0_255 = arith.constant 0 : index
    %c0_256 = arith.constant 0 : index
    %417 = vector.load %arg10[%c2_254, %c0_255, %c0_256] : memref<4x1x8xf32, #tpu.memory_space<vmem>>, vector<1x1x8xf32>
    %418 = vector.shape_cast %417 : vector<1x1x8xf32> to vector<1x8xf32>
    %419 = vector.broadcast %418 : vector<1x8xf32> to vector<8x8xf32>
    %420 = arith.addf %416, %419 : vector<8x8xf32>
    %421 = vector.extract_strided_slice %298 {offsets = [0, 2], sizes = [64, 1], strides = [1, 1]} : vector<64x4xf32> to vector<64x1xf32>
    %422 = vector.shape_cast %421 : vector<64x1xf32> to vector<8x8x1xf32>
    %423 = vector.broadcast %422 : vector<8x8x1xf32> to vector<8x8x8xf32>
    %424 = vector.broadcast %4 : vector<8x1x8xf32> to vector<8x8x8xf32>
    %425 = arith.mulf %423, %424 : vector<8x8x8xf32>
    %cst_257 = arith.constant dense<0.000000e+00> : vector<8x8xf32>
    %426 = vector.multi_reduction <add>, %425, %cst_257 [0] : vector<8x8x8xf32> to vector<8x8xf32>
    %427 = arith.truncf %406 : vector<8x8xf32> to vector<8x8xbf16>
    %428 = arith.truncf %413 : vector<8x8xf32> to vector<8x8xbf16>
    %cst_258 = arith.constant dense<0.000000e+00> : vector<8x8xf32>
    %429 = tpu.matmul %427, %428, %cst_258 {dimension_numbers = #tpu.dot_dimension_numbers<[1], [1], [0], [0], [0, 0, 1, 0], [], []>} : vector<8x8xbf16>, vector<8x8xbf16>, vector<8x8xf32> -> vector<8x8xf32>
    %430 = arith.addf %429, %426 : vector<8x8xf32>
    %431 = arith.mulf %430, %267 : vector<8x8xf32>
    %432 = arith.addf %431, %271 : vector<8x8xf32>
    %cst_259 = arith.constant dense<0xFF800000> : vector<8xf32>
    %433 = vector.multi_reduction <maximumf>, %432, %cst_259 [1] : vector<8x8xf32> to vector<8xf32>
    %434 = vector.shape_cast %433 : vector<8xf32> to vector<8x1xf32>
    %435 = vector.broadcast %434 : vector<8x1xf32> to vector<8x8xf32>
    %436 = arith.subf %432, %435 : vector<8x8xf32>
    %437 = math.exp %436 : vector<8x8xf32>
    %cst_260 = arith.constant dense<0.000000e+00> : vector<8xf32>
    %438 = vector.multi_reduction <add>, %437, %cst_260 [1] : vector<8x8xf32> to vector<8xf32>
    %439 = vector.shape_cast %438 : vector<8xf32> to vector<8x1xf32>
    %440 = tpu.reciprocal %439 {approx = true} : vector<8x1xf32> -> vector<8x1xf32>
    %441 = vector.broadcast %440 : vector<8x1xf32> to vector<8x8xf32>
    %442 = arith.mulf %437, %441 : vector<8x8xf32>
    %443 = arith.truncf %442 : vector<8x8xf32> to vector<8x8xbf16>
    %444 = arith.truncf %420 : vector<8x8xf32> to vector<8x8xbf16>
    %cst_261 = arith.constant dense<0.000000e+00> : vector<8x8xf32>
    %445 = tpu.matmul %443, %444, %cst_261 {dimension_numbers = #tpu.dot_dimension_numbers<[1], [0], [0], [1], [0, 0, 1, 1], [], []>} : vector<8x8xbf16>, vector<8x8xbf16>, vector<8x8xf32> -> vector<8x8xf32>
    %446 = arith.truncf %445 : vector<8x8xf32> to vector<8x8xbf16>
    %c2_262 = arith.constant 2 : index
    %c0_263 = arith.constant 0 : index
    %c0_264 = arith.constant 0 : index
    %447 = vector.load %arg11[%c2_262, %c0_263, %c0_264] : memref<4x8x32xbf16, #tpu.memory_space<vmem>>, vector<1x8x32xbf16>
    %448 = vector.shape_cast %447 : vector<1x8x32xbf16> to vector<8x32xbf16>
    %cst_265 = arith.constant dense<0.000000e+00> : vector<8x32xf32>
    %449 = tpu.matmul %446, %448, %cst_265 {dimension_numbers = #tpu.dot_dimension_numbers<[1], [0], [0], [1], [0, 0, 1, 1], [], []>} : vector<8x8xbf16>, vector<8x32xbf16>, vector<8x32xf32> -> vector<8x32xf32>
    %450 = arith.addf %399, %449 : vector<8x32xf32>
    %c3_266 = arith.constant 3 : index
    %c0_267 = arith.constant 0 : index
    %c0_268 = arith.constant 0 : index
    %451 = vector.load %arg5[%c3_266, %c0_267, %c0_268] : memref<4x32x8xbf16, #tpu.memory_space<vmem>>, vector<1x32x8xbf16>
    %452 = vector.shape_cast %451 : vector<1x32x8xbf16> to vector<32x8xbf16>
    %cst_269 = arith.constant dense<0.000000e+00> : vector<8x8xf32>
    %453 = tpu.matmul %261, %452, %cst_269 {dimension_numbers = #tpu.dot_dimension_numbers<[1], [0], [0], [1], [0, 0, 1, 1], [], []>} : vector<8x32xbf16>, vector<32x8xbf16>, vector<8x8xf32> -> vector<8x8xf32>
    %c3_270 = arith.constant 3 : index
    %c0_271 = arith.constant 0 : index
    %c0_272 = arith.constant 0 : index
    %454 = vector.load %arg6[%c3_270, %c0_271, %c0_272] : memref<4x1x8xf32, #tpu.memory_space<vmem>>, vector<1x1x8xf32>
    %455 = vector.shape_cast %454 : vector<1x1x8xf32> to vector<1x8xf32>
    %456 = vector.broadcast %455 : vector<1x8xf32> to vector<8x8xf32>
    %457 = arith.addf %453, %456 : vector<8x8xf32>
    %c3_273 = arith.constant 3 : index
    %c0_274 = arith.constant 0 : index
    %c0_275 = arith.constant 0 : index
    %458 = vector.load %arg7[%c3_273, %c0_274, %c0_275] : memref<4x32x8xbf16, #tpu.memory_space<vmem>>, vector<1x32x8xbf16>
    %459 = vector.shape_cast %458 : vector<1x32x8xbf16> to vector<32x8xbf16>
    %cst_276 = arith.constant dense<0.000000e+00> : vector<8x8xf32>
    %460 = tpu.matmul %263, %459, %cst_276 {dimension_numbers = #tpu.dot_dimension_numbers<[1], [0], [0], [1], [0, 0, 1, 1], [], []>} : vector<8x32xbf16>, vector<32x8xbf16>, vector<8x8xf32> -> vector<8x8xf32>
    %c3_277 = arith.constant 3 : index
    %c0_278 = arith.constant 0 : index
    %c0_279 = arith.constant 0 : index
    %461 = vector.load %arg8[%c3_277, %c0_278, %c0_279] : memref<4x1x8xf32, #tpu.memory_space<vmem>>, vector<1x1x8xf32>
    %462 = vector.shape_cast %461 : vector<1x1x8xf32> to vector<1x8xf32>
    %463 = vector.broadcast %462 : vector<1x8xf32> to vector<8x8xf32>
    %464 = arith.addf %460, %463 : vector<8x8xf32>
    %c3_280 = arith.constant 3 : index
    %c0_281 = arith.constant 0 : index
    %c0_282 = arith.constant 0 : index
    %465 = vector.load %arg9[%c3_280, %c0_281, %c0_282] : memref<4x32x8xbf16, #tpu.memory_space<vmem>>, vector<1x32x8xbf16>
    %466 = vector.shape_cast %465 : vector<1x32x8xbf16> to vector<32x8xbf16>
    %cst_283 = arith.constant dense<0.000000e+00> : vector<8x8xf32>
    %467 = tpu.matmul %263, %466, %cst_283 {dimension_numbers = #tpu.dot_dimension_numbers<[1], [0], [0], [1], [0, 0, 1, 1], [], []>} : vector<8x32xbf16>, vector<32x8xbf16>, vector<8x8xf32> -> vector<8x8xf32>
    %c3_284 = arith.constant 3 : index
    %c0_285 = arith.constant 0 : index
    %c0_286 = arith.constant 0 : index
    %468 = vector.load %arg10[%c3_284, %c0_285, %c0_286] : memref<4x1x8xf32, #tpu.memory_space<vmem>>, vector<1x1x8xf32>
    %469 = vector.shape_cast %468 : vector<1x1x8xf32> to vector<1x8xf32>
    %470 = vector.broadcast %469 : vector<1x8xf32> to vector<8x8xf32>
    %471 = arith.addf %467, %470 : vector<8x8xf32>
    %472 = vector.extract_strided_slice %298 {offsets = [0, 3], sizes = [64, 1], strides = [1, 1]} : vector<64x4xf32> to vector<64x1xf32>
    %473 = vector.shape_cast %472 : vector<64x1xf32> to vector<8x8x1xf32>
    %474 = vector.broadcast %473 : vector<8x8x1xf32> to vector<8x8x8xf32>
    %475 = vector.broadcast %4 : vector<8x1x8xf32> to vector<8x8x8xf32>
    %476 = arith.mulf %474, %475 : vector<8x8x8xf32>
    %cst_287 = arith.constant dense<0.000000e+00> : vector<8x8xf32>
    %477 = vector.multi_reduction <add>, %476, %cst_287 [0] : vector<8x8x8xf32> to vector<8x8xf32>
    %478 = arith.truncf %457 : vector<8x8xf32> to vector<8x8xbf16>
    %479 = arith.truncf %464 : vector<8x8xf32> to vector<8x8xbf16>
    %cst_288 = arith.constant dense<0.000000e+00> : vector<8x8xf32>
    %480 = tpu.matmul %478, %479, %cst_288 {dimension_numbers = #tpu.dot_dimension_numbers<[1], [1], [0], [0], [0, 0, 1, 0], [], []>} : vector<8x8xbf16>, vector<8x8xbf16>, vector<8x8xf32> -> vector<8x8xf32>
    %481 = arith.addf %480, %477 : vector<8x8xf32>
    %482 = arith.mulf %481, %267 : vector<8x8xf32>
    %483 = arith.addf %482, %271 : vector<8x8xf32>
    %cst_289 = arith.constant dense<0xFF800000> : vector<8xf32>
    %484 = vector.multi_reduction <maximumf>, %483, %cst_289 [1] : vector<8x8xf32> to vector<8xf32>
    %485 = vector.shape_cast %484 : vector<8xf32> to vector<8x1xf32>
    %486 = vector.broadcast %485 : vector<8x1xf32> to vector<8x8xf32>
    %487 = arith.subf %483, %486 : vector<8x8xf32>
    %488 = math.exp %487 : vector<8x8xf32>
    %cst_290 = arith.constant dense<0.000000e+00> : vector<8xf32>
    %489 = vector.multi_reduction <add>, %488, %cst_290 [1] : vector<8x8xf32> to vector<8xf32>
    %490 = vector.shape_cast %489 : vector<8xf32> to vector<8x1xf32>
    %491 = tpu.reciprocal %490 {approx = true} : vector<8x1xf32> -> vector<8x1xf32>
    %492 = vector.broadcast %491 : vector<8x1xf32> to vector<8x8xf32>
    %493 = arith.mulf %488, %492 : vector<8x8xf32>
    %494 = arith.truncf %493 : vector<8x8xf32> to vector<8x8xbf16>
    %495 = arith.truncf %471 : vector<8x8xf32> to vector<8x8xbf16>
    %cst_291 = arith.constant dense<0.000000e+00> : vector<8x8xf32>
    %496 = tpu.matmul %494, %495, %cst_291 {dimension_numbers = #tpu.dot_dimension_numbers<[1], [0], [0], [1], [0, 0, 1, 1], [], []>} : vector<8x8xbf16>, vector<8x8xbf16>, vector<8x8xf32> -> vector<8x8xf32>
    %497 = arith.truncf %496 : vector<8x8xf32> to vector<8x8xbf16>
    %c3_292 = arith.constant 3 : index
    %c0_293 = arith.constant 0 : index
    %c0_294 = arith.constant 0 : index
    %498 = vector.load %arg11[%c3_292, %c0_293, %c0_294] : memref<4x8x32xbf16, #tpu.memory_space<vmem>>, vector<1x8x32xbf16>
    %499 = vector.shape_cast %498 : vector<1x8x32xbf16> to vector<8x32xbf16>
    %cst_295 = arith.constant dense<0.000000e+00> : vector<8x32xf32>
    %500 = tpu.matmul %497, %499, %cst_295 {dimension_numbers = #tpu.dot_dimension_numbers<[1], [0], [0], [1], [0, 0, 1, 1], [], []>} : vector<8x8xbf16>, vector<8x32xbf16>, vector<8x32xf32> -> vector<8x32xf32>
    %501 = arith.addf %450, %500 : vector<8x32xf32>
    %502 = vector.broadcast %12 : vector<1x32xf32> to vector<8x32xf32>
    %503 = arith.addf %501, %502 : vector<8x32xf32>
    %c1_296 = arith.constant 1 : index
    %c0_297 = arith.constant 0 : index
    %c0_298 = arith.constant 0 : index
    %504 = vector.load %arg20[%c1_296, %c0_297, %c0_298] : memref<2x8x32xf32, #tpu.memory_space<vmem>>, vector<1x8x32xf32>
    %505 = vector.shape_cast %504 : vector<1x8x32xf32> to vector<8x32xf32>
    %506 = vector.shape_cast %503 : vector<8x32xf32> to vector<1x8x32xf32>
    tpu.vector_store %arg20[%c1_296, %c0_297, %c0_298], %506 {strides = array<i32>} : memref<2x8x32xf32, #tpu.memory_space<vmem>>, vector<1x8x32xf32>,
    return
  }
  func.func @transform_0(%arg0: i32) -> (i32, i32, i32) {
    %c0_i32 = arith.constant 0 : i32
    %c0_i32_0 = arith.constant 0 : i32
    %c0_i32_1 = arith.constant 0 : i32
    return %arg0, %c0_i32, %c0_i32_0 : i32, i32, i32
  }
  func.func @transform_1(%arg0: i32) -> (i32, i32, i32) {
    %c0_i32 = arith.constant 0 : i32
    %c0_i32_0 = arith.constant 0 : i32
    %c0_i32_1 = arith.constant 0 : i32
    return %arg0, %c0_i32, %c0_i32_0 : i32, i32, i32
  }
  func.func @transform_2(%arg0: i32) -> (i32, i32, i32) {
    %c0_i32 = arith.constant 0 : i32
    %c0_i32_0 = arith.constant 0 : i32
    %c0_i32_1 = arith.constant 0 : i32
    return %arg0, %c0_i32, %c0_i32_0 : i32, i32, i32
  }
  func.func @transform_3(%arg0: i32) -> (i32, i32, i32) {
    %c0_i32 = arith.constant 0 : i32
    %c0_i32_0 = arith.constant 0 : i32
    %c0_i32_1 = arith.constant 0 : i32
    return %arg0, %c0_i32, %c0_i32_0 : i32, i32, i32
  }
  func.func @transform_4(%arg0: i32) -> (i32, i32, i32) {
    %c0_i32 = arith.constant 0 : i32
    %c0_i32_0 = arith.constant 0 : i32
    %c0_i32_1 = arith.constant 0 : i32
    %c0_i32_2 = arith.constant 0 : i32
    return %c0_i32, %c0_i32_0, %c0_i32_1 : i32, i32, i32
  }
  func.func @transform_5(%arg0: i32) -> (i32, i32, i32) {
    %c0_i32 = arith.constant 0 : i32
    %c0_i32_0 = arith.constant 0 : i32
    %c0_i32_1 = arith.constant 0 : i32
    %c0_i32_2 = arith.constant 0 : i32
    return %c0_i32, %c0_i32_0, %c0_i32_1 : i32, i32, i32
  }
  func.func @transform_6(%arg0: i32) -> (i32, i32, i32) {
    %c0_i32 = arith.constant 0 : i32
    %c0_i32_0 = arith.constant 0 : i32
    %c0_i32_1 = arith.constant 0 : i32
    %c0_i32_2 = arith.constant 0 : i32
    return %c0_i32, %c0_i32_0, %c0_i32_1 : i32, i32, i32
  }
  func.func @transform_7(%arg0: i32) -> (i32, i32, i32) {
    %c0_i32 = arith.constant 0 : i32
    %c0_i32_0 = arith.constant 0 : i32
    %c0_i32_1 = arith.constant 0 : i32
    %c0_i32_2 = arith.constant 0 : i32
    return %c0_i32, %c0_i32_0, %c0_i32_1 : i32, i32, i32
  }
  func.func @transform_8(%arg0: i32) -> (i32, i32, i32) {
    %c0_i32 = arith.constant 0 : i32
    %c0_i32_0 = arith.constant 0 : i32
    %c0_i32_1 = arith.constant 0 : i32
    %c0_i32_2 = arith.constant 0 : i32
    return %c0_i32, %c0_i32_0, %c0_i32_1 : i32, i32, i32
  }
  func.func @transform_9(%arg0: i32) -> (i32, i32, i32) {
    %c0_i32 = arith.constant 0 : i32
    %c0_i32_0 = arith.constant 0 : i32
    %c0_i32_1 = arith.constant 0 : i32
    %c0_i32_2 = arith.constant 0 : i32
    return %c0_i32, %c0_i32_0, %c0_i32_1 : i32, i32, i32
  }
  func.func @transform_10(%arg0: i32) -> (i32, i32, i32) {
    %c0_i32 = arith.constant 0 : i32
    %c0_i32_0 = arith.constant 0 : i32
    %c0_i32_1 = arith.constant 0 : i32
    %c0_i32_2 = arith.constant 0 : i32
    return %c0_i32, %c0_i32_0, %c0_i32_1 : i32, i32, i32
  }
  func.func @transform_11(%arg0: i32) -> (i32, i32) {
    %c0_i32 = arith.constant 0 : i32
    %c0_i32_0 = arith.constant 0 : i32
    %c0_i32_1 = arith.constant 0 : i32
    return %c0_i32, %c0_i32_0 : i32, i32
  }
  func.func @transform_12(%arg0: i32) -> (i32, i32) {
    %c0_i32 = arith.constant 0 : i32
    %c0_i32_0 = arith.constant 0 : i32
    %c0_i32_1 = arith.constant 0 : i32
    return %c0_i32, %c0_i32_0 : i32, i32
  }
  func.func @transform_13(%arg0: i32) -> (i32, i32) {
    %c0_i32 = arith.constant 0 : i32
    %c0_i32_0 = arith.constant 0 : i32
    %c0_i32_1 = arith.constant 0 : i32
    return %c0_i32, %c0_i32_0 : i32, i32
  }
  func.func @transform_14(%arg0: i32) -> (i32, i32) {
    %c0_i32 = arith.constant 0 : i32
    %c0_i32_0 = arith.constant 0 : i32
    %c0_i32_1 = arith.constant 0 : i32
    return %c0_i32, %c0_i32_0 : i32, i32
  }
  func.func @transform_15(%arg0: i32) -> (i32, i32) {
    %c0_i32 = arith.constant 0 : i32
    %c0_i32_0 = arith.constant 0 : i32
    %c0_i32_1 = arith.constant 0 : i32
    return %c0_i32, %c0_i32_0 : i32, i32
  }
  func.func @transform_16(%arg0: i32) -> (i32, i32) {
    %c0_i32 = arith.constant 0 : i32
    %c0_i32_0 = arith.constant 0 : i32
    %c0_i32_1 = arith.constant 0 : i32
    return %c0_i32, %c0_i32_0 : i32, i32
  }
  func.func @transform_17(%arg0: i32) -> (i32, i32) {
    %c0_i32 = arith.constant 0 : i32
    %c0_i32_0 = arith.constant 0 : i32
    %c0_i32_1 = arith.constant 0 : i32
    return %c0_i32, %c0_i32_0 : i32, i32
  }
  func.func @transform_18(%arg0: i32) -> (i32, i32) {
    %c0_i32 = arith.constant 0 : i32
    %c0_i32_0 = arith.constant 0 : i32
    %c0_i32_1 = arith.constant 0 : i32
    return %c0_i32, %c0_i32_0 : i32, i32
  }
  func.func @transform_19(%arg0: i32) -> (i32, i32, i32) {
    %c0_i32 = arith.constant 0 : i32
    %c0_i32_0 = arith.constant 0 : i32
    %c0_i32_1 = arith.constant 0 : i32
    return %arg0, %c0_i32, %c0_i32_0 : i32, i32, i32
  }
}

</mosaic_0001>

<llo_original>
// kernel: tpu_custom_call.1
$region0: #{tpu_custom_call.1}
  #allocation0 [shape = 'u32[]', space=smem, size = 0x4, offset = 0x4, fixed_abs, tag = 'smem constant byte address 0x4 - core index']
  #allocation1 [shape = 'u32[144,128]{1,0:T(1,128)}', space=vmem, size = 0x12000, scoped, tag = 'internal scratch']
  %s0 = inlined_call_operand.hbm [shape: bf16[2,8,32], index: 0, kind: input, shape index: {}]
  %s1 = inlined_call_operand.hbm [shape: bf16[2,8,32], index: 1, kind: input, shape index: {}]
  %s2 = inlined_call_operand.hbm [shape: f32[2,8,8], index: 2, kind: input, shape index: {}]
  %s3 = inlined_call_operand.hbm [shape: f32[2,8,8], index: 3, kind: input, shape index: {}]
  %s4 = inlined_call_operand.hbm [shape: bf16[4,32,8], index: 4, kind: input, shape index: {}]
  %s5 = inlined_call_operand.hbm [shape: f32[4,1,8], index: 5, kind: input, shape index: {}]
  %s6 = inlined_call_operand.hbm [shape: bf16[4,32,8], index: 6, kind: input, shape index: {}]
  %s7 = inlined_call_operand.hbm [shape: f32[4,1,8], index: 7, kind: input, shape index: {}]
  %s8 = inlined_call_operand.hbm [shape: bf16[4,32,8], index: 8, kind: input, shape index: {}]
  %s9 = inlined_call_operand.hbm [shape: f32[4,1,8], index: 9, kind: input, shape index: {}]
  %s10 = inlined_call_operand.hbm [shape: bf16[4,8,32], index: 10, kind: input, shape index: {}]
  %s11 = inlined_call_operand.hbm [shape: f32[1,32], index: 11, kind: input, shape index: {}]
  %s12 = inlined_call_operand.hbm [shape: f32[1,32], index: 12, kind: input, shape index: {}]
  %s13 = inlined_call_operand.hbm [shape: f32[32,32], index: 13, kind: input, shape index: {}]
  %s14 = inlined_call_operand.hbm [shape: f32[1,32], index: 14, kind: input, shape index: {}]
  %s15 = inlined_call_operand.hbm [shape: f32[32,32], index: 15, kind: input, shape index: {}]
  %s16 = inlined_call_operand.hbm [shape: f32[1,32], index: 16, kind: input, shape index: {}]
  %s17 = inlined_call_operand.hbm [shape: f32[32,4], index: 17, kind: input, shape index: {}]
  %s18 = inlined_call_operand.hbm [shape: f32[1,4], index: 18, kind: input, shape index: {}]
  %s19 = inlined_call_operand.hbm [shape: f32[2,8,32], index: 19, kind: output, shape index: {}]
  %s20 = sld [smem:[#allocation0]]
  $region162: #{tpu_custom_call.1} parent=0
    _
  %s22 = ssub.s32 1, %s20
  %s23 = scalar_select 0, %s22, %s20
  $region1: #{tpu_custom_call.1} parent=0
    #allocation2 [shape = 'u8[4096]{0}', space=vmem, size = 0x1000, scoped, tag = 'input window, operand 0, single buffered']
    #allocation3 [shape = 's32[1]{0}', space=sflag, size = 0x4, scoped, tag = 'scoped memory for tpu_custom_call.1']
    #allocation4 [shape = 's32[1]{0}', space=sflag, size = 0x4, scoped, tag = 'scoped memory for tpu_custom_call.1']
    #allocation5 [shape = 'u8[4096]{0}', space=vmem, size = 0x1000, scoped, tag = 'input window, operand 1, single buffered']
    #allocation6 [shape = 's32[1]{0}', space=sflag, size = 0x4, scoped, tag = 'scoped memory for tpu_custom_call.1']
    #allocation7 [shape = 'u8[8192]{0}', space=vmem, size = 0x2000, scoped, tag = 'input window, operand 2, single buffered']
    #allocation8 [shape = 'u8[8192]{0}', space=vmem, size = 0x2000, scoped, tag = 'input window, operand 3, single buffered']
    #allocation9 [shape = 's32[1]{0}', space=sflag, size = 0x4, scoped, tag = 'scoped memory for tpu_custom_call.1']
    #allocation10 [shape = 'u8[32768]{0}', space=vmem, size = 0x8000, scoped, tag = 'input window, operand 4, single buffered']
    #allocation11 [shape = 'u8[2048]{0}', space=vmem, size = 0x800, scoped, tag = 'input window, operand 5, single buffered']
    #allocation12 [shape = 's32[1]{0}', space=sflag, size = 0x4, scoped, tag = 'scoped memory for tpu_custom_call.1']
    #allocation13 [shape = 'u8[32768]{0}', space=vmem, size = 0x8000, scoped, tag = 'input window, operand 6, single buffered']
    #allocation14 [shape = 'u8[2048]{0}', space=vmem, size = 0x800, scoped, tag = 'input window, operand 7, single buffered']
    #allocation15 [shape = 's32[1]{0}', space=sflag, size = 0x4, scoped, tag = 'scoped memory for tpu_custom_call.1']
    #allocation16 [shape = 'u8[32768]{0}', space=vmem, size = 0x8000, scoped, tag = 'input window, operand 8, single buffered']
    #allocation17 [shape = 'u8[2048]{0}', space=vmem, size = 0x800, scoped, tag = 'input window, operand 9, single buffered']
    #allocation18 [shape = 's32[1]{0}', space=sflag, size = 0x4, scoped, tag = 'scoped memory for tpu_custom_call.1']
    #allocation19 [shape = 'u8[8192]{0}', space=vmem, size = 0x2000, scoped, tag = 'input window, operand 10, single buffered']
    #allocation20 [shape = 'u8[512]{0}', space=vmem, size = 0x400, scoped, tag = 'input window, operand 11, single buffered']
    #allocation21 [shape = 's32[1]{0}', space=sflag, size = 0x4, scoped, tag = 'scoped memory for tpu_custom_call.1']
    #allocation22 [shape = 'u8[512]{0}', space=vmem, size = 0x400, scoped, tag = 'input window, operand 12, single buffered']
    #allocation23 [shape = 'u8[16384]{0}', space=vmem, size = 0x4000, scoped, tag = 'input window, operand 13, single buffered']
    #allocation24 [shape = 's32[1]{0}', space=sflag, size = 0x4, scoped, tag = 'scoped memory for tpu_custom_call.1']
    #allocation25 [shape = 'u8[512]{0}', space=vmem, size = 0x400, scoped, tag = 'input window, operand 14, single buffered']
    #allocation26 [shape = 'u8[16384]{0}', space=vmem, size = 0x4000, scoped, tag = 'input window, operand 15, single buffered']
    #allocation27 [shape = 's32[1]{0}', space=sflag, size = 0x4, scoped, tag = 'scoped memory for tpu_custom_call.1']
    #allocation28 [shape = 'u8[512]{0}', space=vmem, size = 0x400, scoped, tag = 'input window, operand 16, single buffered']
    #allocation29 [shape = 'u8[16384]{0}', space=vmem, size = 0x4000, scoped, tag = 'input window, operand 17, single buffered']
    #allocation30 [shape = 's32[1]{0}', space=sflag, size = 0x4, scoped, tag = 'scoped memory for tpu_custom_call.1']
    #allocation31 [shape = 'u8[512]{0}', space=vmem, size = 0x400, scoped, tag = 'input window, operand 18, single buffered']
    #allocation32 [shape = 'u8[8192]{0}', space=vmem, size = 0x2000, scoped, tag = 'output window, operand 0, single buffered']
    %24 = vsyncpa [#allocation3], 0
    %25 = vsyncpa [#allocation6], 0
    %26 = vsyncpa [#allocation9], 0
    %27 = vsyncpa [#allocation12], 0
    %28 = vsyncpa [#allocation15], 0
    %29 = vsyncpa [#allocation18], 0
    %30 = vsyncpa [#allocation21], 0
    %31 = vsyncpa [#allocation24], 0
    %32 = vsyncpa [#allocation27], 0
    %33 = vsyncpa [#allocation30], 0
    %34 = vsyncpa [#allocation4], 0
    // Predicated region
    $region2: #{tpu_custom_call.1} parent=1 // pred_check
      _
    $region3: #{tpu_custom_call.1} parent=1 // pred_check_branch
      %36 = sbr.rel (0) target = $region5
    $region4: #{tpu_custom_call.1} parent=1 // pred_region
      %s38 = ssub.s32 128, 128
      %39 = vsyncadd [#allocation3], %s38
      %s40 = sshll.u32 [#allocation2], 4
      %s41 = int_to_ptr.vmem [resolvable:$true] %s40
      %46 = dma.hbm_to_vmem [thread:$0]  %s0, 128, %s41, [#allocation3], 64, 64, 4
    $region5: #{tpu_custom_call.1} parent=1 // pred_fallthru
      _
    // Predicated region
    $region6: #{tpu_custom_call.1} parent=1 // pred_check
      _
    $region7: #{tpu_custom_call.1} parent=1 // pred_check_branch
      %48 = sbr.rel (0) target = $region9
    $region8: #{tpu_custom_call.1} parent=1 // pred_region
      %s50 = ssub.s32 128, 128
      %51 = vsyncadd [#allocation6], %s50
      %s52 = sshll.u32 [#allocation5], 4
      %s53 = int_to_ptr.vmem [resolvable:$true] %s52
      %58 = dma.hbm_to_vmem [thread:$0]  %s1, 128, %s53, [#allocation6], 64, 64, 4
    $region9: #{tpu_custom_call.1} parent=1 // pred_fallthru
      _
    // Predicated region
    $region10: #{tpu_custom_call.1} parent=1 // pred_check
      _
    $region11: #{tpu_custom_call.1} parent=1 // pred_check_branch
      %60 = sbr.rel (0) target = $region13
    $region12: #{tpu_custom_call.1} parent=1 // pred_region
      %s62 = ssub.s32 256, 256
      %63 = vsyncadd [#allocation6], %s62
      %s64 = sshll.u32 [#allocation7], 4
      %s65 = int_to_ptr.vmem [resolvable:$true] %s64
      %70 = dma.hbm_to_vmem [thread:$0]  %s2, 256, %s65, [#allocation6], 128, 128, 8
    $region13: #{tpu_custom_call.1} parent=1 // pred_fallthru
      _
    // Predicated region
    $region14: #{tpu_custom_call.1} parent=1 // pred_check
      _
    $region15: #{tpu_custom_call.1} parent=1 // pred_check_branch
      %72 = sbr.rel (0) target = $region17
    $region16: #{tpu_custom_call.1} parent=1 // pred_region
      %s74 = ssub.s32 256, 256
      %75 = vsyncadd [#allocation9], %s74
      %s76 = sshll.u32 [#allocation8], 4
      %s77 = int_to_ptr.vmem [resolvable:$true] %s76
      %82 = dma.hbm_to_vmem [thread:$0]  %s3, 256, %s77, [#allocation9], 128, 128, 8
    $region17: #{tpu_custom_call.1} parent=1 // pred_fallthru
      _
    // Predicated region
    $region18: #{tpu_custom_call.1} parent=1 // pred_check
      _
    $region19: #{tpu_custom_call.1} parent=1 // pred_check_branch
      %84 = sbr.rel (0) target = $region21
    $region20: #{tpu_custom_call.1} parent=1 // pred_region
      %s86 = ssub.s32 1024, 1024
      %87 = vsyncadd [#allocation9], %s86
      %s88 = sshll.u32 [#allocation10], 4
      %s89 = int_to_ptr.vmem [resolvable:$true] %s88
      %94 = dma.hbm_to_vmem [thread:$0]  %s4, 1024, %s89, [#allocation9], 64, 64, 4
    $region21: #{tpu_custom_call.1} parent=1 // pred_fallthru
      _
    // Predicated region
    $region22: #{tpu_custom_call.1} parent=1 // pred_check
      _
    $region23: #{tpu_custom_call.1} parent=1 // pred_check_branch
      %96 = sbr.rel (0) target = $region25
    $region24: #{tpu_custom_call.1} parent=1 // pred_region
      %s98 = ssub.s32 64, 64
      %99 = vsyncadd [#allocation12], %s98
      %s100 = sshll.u32 [#allocation11], 4
      %s101 = int_to_ptr.vmem [resolvable:$true] %s100
      %106 = dma.hbm_to_vmem [thread:$0]  %s5, 64, %s101, [#allocation12], 16, 16, 1
    $region25: #{tpu_custom_call.1} parent=1 // pred_fallthru
      _
    // Predicated region
    $region26: #{tpu_custom_call.1} parent=1 // pred_check
      _
    $region27: #{tpu_custom_call.1} parent=1 // pred_check_branch
      %108 = sbr.rel (0) target = $region29
    $region28: #{tpu_custom_call.1} parent=1 // pred_region
      %s110 = ssub.s32 1024, 1024
      %111 = vsyncadd [#allocation12], %s110
      %s112 = sshll.u32 [#allocation13], 4
      %s113 = int_to_ptr.vmem [resolvable:$true] %s112
      %118 = dma.hbm_to_vmem [thread:$0]  %s6, 1024, %s113, [#allocation12], 64, 64, 4
    $region29: #{tpu_custom_call.1} parent=1 // pred_fallthru
      _
    // Predicated region
    $region30: #{tpu_custom_call.1} parent=1 // pred_check
      _
    $region31: #{tpu_custom_call.1} parent=1 // pred_check_branch
      %120 = sbr.rel (0) target = $region33
    $region32: #{tpu_custom_call.1} parent=1 // pred_region
      %s122 = ssub.s32 64, 64
      %123 = vsyncadd [#allocation15], %s122
      %s124 = sshll.u32 [#allocation14], 4
      %s125 = int_to_ptr.vmem [resolvable:$true] %s124
      %130 = dma.hbm_to_vmem [thread:$0]  %s7, 64, %s125, [#allocation15], 16, 16, 1
    $region33: #{tpu_custom_call.1} parent=1 // pred_fallthru
      _
    // Predicated region
    $region34: #{tpu_custom_call.1} parent=1 // pred_check
      _
    $region35: #{tpu_custom_call.1} parent=1 // pred_check_branch
      %132 = sbr.rel (0) target = $region37
    $region36: #{tpu_custom_call.1} parent=1 // pred_region
      %s134 = ssub.s32 1024, 1024
      %135 = vsyncadd [#allocation15], %s134
      %s136 = sshll.u32 [#allocation16], 4
      %s137 = int_to_ptr.vmem [resolvable:$true] %s136
      %142 = dma.hbm_to_vmem [thread:$0]  %s8, 1024, %s137, [#allocation15], 64, 64, 4
    $region37: #{tpu_custom_call.1} parent=1 // pred_fallthru
      _
    // Predicated region
    $region38: #{tpu_custom_call.1} parent=1 // pred_check
      _
    $region39: #{tpu_custom_call.1} parent=1 // pred_check_branch
      %144 = sbr.rel (0) target = $region41
    $region40: #{tpu_custom_call.1} parent=1 // pred_region
      %s146 = ssub.s32 64, 64
      %147 = vsyncadd [#allocation18], %s146
      %s148 = sshll.u32 [#allocation17], 4
      %s149 = int_to_ptr.vmem [resolvable:$true] %s148
      %154 = dma.hbm_to_vmem [thread:$0]  %s9, 64, %s149, [#allocation18], 16, 16, 1
    $region41: #{tpu_custom_call.1} parent=1 // pred_fallthru
      _
    // Predicated region
    $region42: #{tpu_custom_call.1} parent=1 // pred_check
      _
    $region43: #{tpu_custom_call.1} parent=1 // pred_check_branch
      %156 = sbr.rel (0) target = $region45
    $region44: #{tpu_custom_call.1} parent=1 // pred_region
      %s158 = ssub.s32 256, 256
      %159 = vsyncadd [#allocation18], %s158
      %s160 = sshll.u32 [#allocation19], 4
      %s161 = int_to_ptr.vmem [resolvable:$true] %s160
      %166 = dma.hbm_to_vmem [thread:$0]  %s10, 256, %s161, [#allocation18], 64, 64, 4
    $region45: #{tpu_custom_call.1} parent=1 // pred_fallthru
      _
    // Predicated region
    $region46: #{tpu_custom_call.1} parent=1 // pred_check
      _
    $region47: #{tpu_custom_call.1} parent=1 // pred_check_branch
      %168 = sbr.rel (0) target = $region49
    $region48: #{tpu_custom_call.1} parent=1 // pred_region
      %s170 = ssub.s32 16, 16
      %171 = vsyncadd [#allocation21], %s170
      %s173 = sshll.u32 [#allocation20], 4
      %s174 = int_to_ptr.vmem [resolvable:$true] %s173
      %176 = dma.hbm_to_vmem [thread:$0]  %s11, 16, %s174, [#allocation21]
    $region49: #{tpu_custom_call.1} parent=1 // pred_fallthru
      _
    // Predicated region
    $region50: #{tpu_custom_call.1} parent=1 // pred_check
      _
    $region51: #{tpu_custom_call.1} parent=1 // pred_check_branch
      %178 = sbr.rel (0) target = $region53
    $region52: #{tpu_custom_call.1} parent=1 // pred_region
      %s180 = ssub.s32 16, 16
      %181 = vsyncadd [#allocation21], %s180
      %s183 = sshll.u32 [#allocation22], 4
      %s184 = int_to_ptr.vmem [resolvable:$true] %s183
      %186 = dma.hbm_to_vmem [thread:$0]  %s12, 16, %s184, [#allocation21]
    $region53: #{tpu_custom_call.1} parent=1 // pred_fallthru
      _
    // Predicated region
    $region54: #{tpu_custom_call.1} parent=1 // pred_check
      _
    $region55: #{tpu_custom_call.1} parent=1 // pred_check_branch
      %188 = sbr.rel (0) target = $region57
    $region56: #{tpu_custom_call.1} parent=1 // pred_region
      %s190 = ssub.s32 512, 512
      %191 = vsyncadd [#allocation24], %s190
      %s192 = sshll.u32 [#allocation23], 4
      %s193 = int_to_ptr.vmem [resolvable:$true] %s192
      %198 = dma.hbm_to_vmem [thread:$0]  %s13, 512, %s193, [#allocation24], 128, 128, 8
    $region57: #{tpu_custom_call.1} parent=1 // pred_fallthru
      _
    // Predicated region
    $region58: #{tpu_custom_call.1} parent=1 // pred_check
      _
    $region59: #{tpu_custom_call.1} parent=1 // pred_check_branch
      %200 = sbr.rel (0) target = $region61
    $region60: #{tpu_custom_call.1} parent=1 // pred_region
      %s202 = ssub.s32 16, 16
      %203 = vsyncadd [#allocation24], %s202
      %s205 = sshll.u32 [#allocation25], 4
      %s206 = int_to_ptr.vmem [resolvable:$true] %s205
      %208 = dma.hbm_to_vmem [thread:$0]  %s14, 16, %s206, [#allocation24]
    $region61: #{tpu_custom_call.1} parent=1 // pred_fallthru
      _
    // Predicated region
    $region62: #{tpu_custom_call.1} parent=1 // pred_check
      _
    $region63: #{tpu_custom_call.1} parent=1 // pred_check_branch
      %210 = sbr.rel (0) target = $region65
    $region64: #{tpu_custom_call.1} parent=1 // pred_region
      %s212 = ssub.s32 512, 512
      %213 = vsyncadd [#allocation27], %s212
      %s214 = sshll.u32 [#allocation26], 4
      %s215 = int_to_ptr.vmem [resolvable:$true] %s214
      %220 = dma.hbm_to_vmem [thread:$0]  %s15, 512, %s215, [#allocation27], 128, 128, 8
    $region65: #{tpu_custom_call.1} parent=1 // pred_fallthru
      _
    // Predicated region
    $region66: #{tpu_custom_call.1} parent=1 // pred_check
      _
    $region67: #{tpu_custom_call.1} parent=1 // pred_check_branch
      %222 = sbr.rel (0) target = $region69
    $region68: #{tpu_custom_call.1} parent=1 // pred_region
      %s224 = ssub.s32 16, 16
      %225 = vsyncadd [#allocation27], %s224
      %s227 = sshll.u32 [#allocation28], 4
      %s228 = int_to_ptr.vmem [resolvable:$true] %s227
      %230 = dma.hbm_to_vmem [thread:$0]  %s16, 16, %s228, [#allocation27]
    $region69: #{tpu_custom_call.1} parent=1 // pred_fallthru
      _
    // Predicated region
    $region70: #{tpu_custom_call.1} parent=1 // pred_check
      _
    $region71: #{tpu_custom_call.1} parent=1 // pred_check_branch
      %232 = sbr.rel (0) target = $region73
    $region72: #{tpu_custom_call.1} parent=1 // pred_region
      %s234 = ssub.s32 512, 512
      %235 = vsyncadd [#allocation30], %s234
      %s236 = sshll.u32 [#allocation29], 4
      %s237 = int_to_ptr.vmem [resolvable:$true] %s236
      %242 = dma.hbm_to_vmem [thread:$0]  %s17, 512, %s237, [#allocation30], 128, 128, 8
    $region73: #{tpu_custom_call.1} parent=1 // pred_fallthru
      _
    // Predicated region
    $region74: #{tpu_custom_call.1} parent=1 // pred_check
      _
    $region75: #{tpu_custom_call.1} parent=1 // pred_check_branch
      %244 = sbr.rel (0) target = $region77
    $region76: #{tpu_custom_call.1} parent=1 // pred_region
      %s246 = ssub.s32 16, 16
      %247 = vsyncadd [#allocation30], %s246
      %s249 = sshll.u32 [#allocation31], 4
      %s250 = int_to_ptr.vmem [resolvable:$true] %s249
      %252 = dma.hbm_to_vmem [thread:$0]  %s18, 16, %s250, [#allocation30]
    $region77: #{tpu_custom_call.1} parent=1 // pred_fallthru
      _
    // Predicated region
    $region78: #{tpu_custom_call.1} parent=1 // pred_check
      _
    $region79: #{tpu_custom_call.1} parent=1 // pred_check_branch
      %254 = sbr.rel (0) target = $region81
    $region80: #{tpu_custom_call.1} parent=1 // pred_region
      %255 = dma.done [#allocation3], 128
    $region81: #{tpu_custom_call.1} parent=1 // pred_fallthru
      _
    // Predicated region
    $region82: #{tpu_custom_call.1} parent=1 // pred_check
      _
    $region83: #{tpu_custom_call.1} parent=1 // pred_check_branch
      %257 = sbr.rel (0) target = $region85
    $region84: #{tpu_custom_call.1} parent=1 // pred_region
      %258 = dma.done [#allocation6], 128
    $region85: #{tpu_custom_call.1} parent=1 // pred_fallthru
      _
    // Predicated region
    $region86: #{tpu_custom_call.1} parent=1 // pred_check
      _
    $region87: #{tpu_custom_call.1} parent=1 // pred_check_branch
      %260 = sbr.rel (0) target = $region89
    $region88: #{tpu_custom_call.1} parent=1 // pred_region
      %261 = dma.done [#allocation6], 256
    $region89: #{tpu_custom_call.1} parent=1 // pred_fallthru
      _
    // Predicated region
    $region90: #{tpu_custom_call.1} parent=1 // pred_check
      _
    $region91: #{tpu_custom_call.1} parent=1 // pred_check_branch
      %263 = sbr.rel (0) target = $region93
    $region92: #{tpu_custom_call.1} parent=1 // pred_region
      %264 = dma.done [#allocation9], 256
    $region93: #{tpu_custom_call.1} parent=1 // pred_fallthru
      _
    // Predicated region
    $region94: #{tpu_custom_call.1} parent=1 // pred_check
      _
    $region95: #{tpu_custom_call.1} parent=1 // pred_check_branch
      %266 = sbr.rel (0) target = $region97
    $region96: #{tpu_custom_call.1} parent=1 // pred_region
      %267 = dma.done [#allocation9], 1024
    $region97: #{tpu_custom_call.1} parent=1 // pred_fallthru
      _
    // Predicated region
    $region98: #{tpu_custom_call.1} parent=1 // pred_check
      _
    $region99: #{tpu_custom_call.1} parent=1 // pred_check_branch
      %269 = sbr.rel (0) target = $region101
    $region100: #{tpu_custom_call.1} parent=1 // pred_region
      %270 = dma.done [#allocation12], 64
    $region101: #{tpu_custom_call.1} parent=1 // pred_fallthru
      _
    // Predicated region
    $region102: #{tpu_custom_call.1} parent=1 // pred_check
      _
    $region103: #{tpu_custom_call.1} parent=1 // pred_check_branch
      %272 = sbr.rel (0) target = $region105
    $region104: #{tpu_custom_call.1} parent=1 // pred_region
      %273 = dma.done [#allocation12], 1024
    $region105: #{tpu_custom_call.1} parent=1 // pred_fallthru
      _
    // Predicated region
    $region106: #{tpu_custom_call.1} parent=1 // pred_check
      _
    $region107: #{tpu_custom_call.1} parent=1 // pred_check_branch
      %275 = sbr.rel (0) target = $region109
    $region108: #{tpu_custom_call.1} parent=1 // pred_region
      %276 = dma.done [#allocation15], 64
    $region109: #{tpu_custom_call.1} parent=1 // pred_fallthru
      _
    // Predicated region
    $region110: #{tpu_custom_call.1} parent=1 // pred_check
      _
    $region111: #{tpu_custom_call.1} parent=1 // pred_check_branch
      %278 = sbr.rel (0) target = $region113
    $region112: #{tpu_custom_call.1} parent=1 // pred_region
      %279 = dma.done [#allocation15], 1024
    $region113: #{tpu_custom_call.1} parent=1 // pred_fallthru
      _
    // Predicated region
    $region114: #{tpu_custom_call.1} parent=1 // pred_check
      _
    $region115: #{tpu_custom_call.1} parent=1 // pred_check_branch
      %281 = sbr.rel (0) target = $region117
    $region116: #{tpu_custom_call.1} parent=1 // pred_region
      %282 = dma.done [#allocation18], 64
    $region117: #{tpu_custom_call.1} parent=1 // pred_fallthru
      _
    // Predicated region
    $region118: #{tpu_custom_call.1} parent=1 // pred_check
      _
    $region119: #{tpu_custom_call.1} parent=1 // pred_check_branch
      %284 = sbr.rel (0) target = $region121
    $region120: #{tpu_custom_call.1} parent=1 // pred_region
      %285 = dma.done [#allocation18], 256
    $region121: #{tpu_custom_call.1} parent=1 // pred_fallthru
      _
    // Predicated region
    $region122: #{tpu_custom_call.1} parent=1 // pred_check
      _
    $region123: #{tpu_custom_call.1} parent=1 // pred_check_branch
      %287 = sbr.rel (0) target = $region125
    $region124: #{tpu_custom_call.1} parent=1 // pred_region
      %288 = dma.done [#allocation21], 16
    $region125: #{tpu_custom_call.1} parent=1 // pred_fallthru
      _
    // Predicated region
    $region126: #{tpu_custom_call.1} parent=1 // pred_check
      _
    $region127: #{tpu_custom_call.1} parent=1 // pred_check_branch
      %290 = sbr.rel (0) target = $region129
    $region128: #{tpu_custom_call.1} parent=1 // pred_region
      %291 = dma.done [#allocation21], 16
    $region129: #{tpu_custom_call.1} parent=1 // pred_fallthru
      _
    // Predicated region
    $region130: #{tpu_custom_call.1} parent=1 // pred_check
      _
    $region131: #{tpu_custom_call.1} parent=1 // pred_check_branch
      %293 = sbr.rel (0) target = $region133
    $region132: #{tpu_custom_call.1} parent=1 // pred_region
      %294 = dma.done [#allocation24], 512
    $region133: #{tpu_custom_call.1} parent=1 // pred_fallthru
      _
    // Predicated region
    $region134: #{tpu_custom_call.1} parent=1 // pred_check
      _
    $region135: #{tpu_custom_call.1} parent=1 // pred_check_branch
      %296 = sbr.rel (0) target = $region137
    $region136: #{tpu_custom_call.1} parent=1 // pred_region
      %297 = dma.done [#allocation24], 16
    $region137: #{tpu_custom_call.1} parent=1 // pred_fallthru
      _
    // Predicated region
    $region138: #{tpu_custom_call.1} parent=1 // pred_check
      _
    $region139: #{tpu_custom_call.1} parent=1 // pred_check_branch
      %299 = sbr.rel (0) target = $region141
    $region140: #{tpu_custom_call.1} parent=1 // pred_region
      %300 = dma.done [#allocation27], 512
    $region141: #{tpu_custom_call.1} parent=1 // pred_fallthru
      _
    // Predicated region
    $region142: #{tpu_custom_call.1} parent=1 // pred_check
      _
    $region143: #{tpu_custom_call.1} parent=1 // pred_check_branch
      %302 = sbr.rel (0) target = $region145
    $region144: #{tpu_custom_call.1} parent=1 // pred_region
      %303 = dma.done [#allocation27], 16
    $region145: #{tpu_custom_call.1} parent=1 // pred_fallthru
      _
    // Predicated region
    $region146: #{tpu_custom_call.1} parent=1 // pred_check
      _
    $region147: #{tpu_custom_call.1} parent=1 // pred_check_branch
      %305 = sbr.rel (0) target = $region149
    $region148: #{tpu_custom_call.1} parent=1 // pred_region
      %306 = dma.done [#allocation30], 512
    $region149: #{tpu_custom_call.1} parent=1 // pred_fallthru
      _
    // Predicated region
    $region150: #{tpu_custom_call.1} parent=1 // pred_check
      _
    $region151: #{tpu_custom_call.1} parent=1 // pred_check_branch
      %308 = sbr.rel (0) target = $region153
    $region152: #{tpu_custom_call.1} parent=1 // pred_region
      %309 = dma.done [#allocation30], 16
    $region153: #{tpu_custom_call.1} parent=1 // pred_fallthru
      _
    %v311 = vlaneseq
    %v312 = vand.u32 %v311, 127
    %vm313 = vcmp.eq.s32.totalorder %v312, 0
    %vm314 = vcmp.eq.s32.totalorder %v312, 1
    %vm315 = vcmp.eq.s32.totalorder %v312, 2
    %vm316 = vcmp.eq.s32.totalorder %v312, 3
    %vm317 = vcmp.eq.s32.totalorder %v312, 4
    %vm318 = vcmp.eq.s32.totalorder %v312, 5
    %vm319 = vcmp.eq.s32.totalorder %v312, 6
    %vm320 = vcmp.eq.s32.totalorder %v312, 7
    %v321 = vsel %vm313, 1, 0
    %v322 = vsel %vm314, 1, 0
    %v323 = vsel %vm315, 1, 0
    %v324 = vsel %vm316, 1, 0
    %v325 = vsel %vm317, 1, 0
    %v326 = vsel %vm318, 1, 0
    %v327 = vsel %vm319, 1, 0
    %v328 = vsel %vm320, 1, 0
    %v329 = vcvt.s32.f32 %v321
    %v330 = vcvt.s32.f32 %v322
    %v331 = vcvt.s32.f32 %v323
    %v332 = vcvt.s32.f32 %v324
    %v333 = vcvt.s32.f32 %v325
    %v334 = vcvt.s32.f32 %v326
    %v335 = vcvt.s32.f32 %v327
    %v336 = vcvt.s32.f32 %v328
    %v337 = vld [vmem:[#allocation22] sm:$0x1]
    %v338 = vld [vmem:[#allocation23] sm:$0xff]
    %v339 = vld [vmem:[#allocation23 + $0x8] sm:$0xff]
    %v340 = vld [vmem:[#allocation23 + $0x10] sm:$0xff]
    %v341 = vld [vmem:[#allocation23 + $0x18] sm:$0xff]
    %v342 = vld [vmem:[#allocation25] sm:$0x1]
    %v343 = vld [vmem:[#allocation26] sm:$0xff]
    %v344 = vld [vmem:[#allocation26 + $0x8] sm:$0xff]
    %v345 = vld [vmem:[#allocation26 + $0x10] sm:$0xff]
    %v346 = vld [vmem:[#allocation26 + $0x18] sm:$0xff]
    %v347 = vld [vmem:[#allocation28] sm:$0x1]
    %v348 = vld [vmem:[#allocation29] sm:$0xff]
    %v349 = vld [vmem:[#allocation29 + $0x8] sm:$0xff]
    %v350 = vld [vmem:[#allocation29 + $0x10] sm:$0xff]
    %v351 = vld [vmem:[#allocation29 + $0x18] sm:$0xff]
    %v352 = vld [vmem:[#allocation31] sm:$0x1]
    %v353 = vld [vmem:[#allocation20] sm:$0x1]
    %v354 = vld [vmem:[#allocation2] sm:$0xf]
    %v355 = vld [vmem:[#allocation5] sm:$0xf]
    %v356 = vld [vmem:[#allocation7] sm:$0xff]
    %v357 = vld [vmem:[#allocation8] sm:$0xff]
    %v358 = vsub.f32 %v357, 1.0
    %v359 = vmul.f32 %v358, 1e+09
    %v360 = vmul.f32 %v356, %v329
    %v361 = vmul.f32 %v356, %v330
    %v362 = vmul.f32 %v356, %v331
    %v363 = vmul.f32 %v356, %v332
    %v364 = vmul.f32 %v356, %v333
    %v365 = vmul.f32 %v356, %v334
    %v366 = vmul.f32 %v356, %v335
    %v367 = vmul.f32 %v356, %v336
    %vm368 = vcmask 64512
    %v369 = vsel %vm368, %v360, 0.0
    %370 = vadd.xlane.f32.xlu0 %v369
    %v371 = vpop.xlane.xlu0 %370
    %v372 = vsel %vm368, %v361, 0.0
    %373 = vadd.xlane.f32.xlu0 %v372
    %v374 = vpop.xlane.xlu0 %373
    %v375 = vsel %vm368, %v362, 0.0
    %376 = vadd.xlane.f32.xlu0 %v375
    %v377 = vpop.xlane.xlu0 %376
    %v378 = vsel %vm368, %v363, 0.0
    %379 = vadd.xlane.f32.xlu0 %v378
    %v380 = vpop.xlane.xlu0 %379
    %v381 = vsel %vm368, %v364, 0.0
    %382 = vadd.xlane.f32.xlu0 %v381
    %v383 = vpop.xlane.xlu0 %382
    %v384 = vsel %vm368, %v365, 0.0
    %385 = vadd.xlane.f32.xlu0 %v384
    %v386 = vpop.xlane.xlu0 %385
    %v387 = vsel %vm368, %v366, 0.0
    %388 = vadd.xlane.f32.xlu0 %v387
    %v389 = vpop.xlane.xlu0 %388
    %v390 = vsel %vm368, %v367, 0.0
    %391 = vadd.xlane.f32.xlu0 %v390
    %v392 = vpop.xlane.xlu0 %391
    %v394 = vlaneseq
    %v395 = vshrl.u32 %v394, 7
    %v396 = vsub.s32 0, %v395
    %v397 = vrot.slane %v337, %v396
    %v399 = vsub.f32 %v371, %v397
    %v400 = vsub.f32 %v374, %v397
    %v401 = vsub.f32 %v377, %v397
    %v402 = vsub.f32 %v380, %v397
    %v403 = vsub.f32 %v383, %v397
    %v404 = vsub.f32 %v386, %v397
    %v405 = vsub.f32 %v389, %v397
    %v406 = vsub.f32 %v392, %v397
    %v407 = vmul.f32 %v399, %v399
    %v408 = vmul.f32 %v400, %v400
    %v409 = vmul.f32 %v401, %v401
    %v410 = vmul.f32 %v402, %v402
    %v411 = vmul.f32 %v403, %v403
    %v412 = vmul.f32 %v404, %v404
    %v413 = vmul.f32 %v405, %v405
    %v414 = vmul.f32 %v406, %v406
    %v415 = vmul.f32 %v407, -4.8050003
    %v416 = vmul.f32 %v408, -4.8050003
    %v417 = vmul.f32 %v409, -4.8050003
    %v418 = vmul.f32 %v410, -4.8050003
    %v419 = vmul.f32 %v411, -4.8050003
    %v420 = vmul.f32 %v412, -4.8050003
    %v421 = vmul.f32 %v413, -4.8050003
    %v422 = vmul.f32 %v414, -4.8050003
    %v423 = vmul.f32 %v415, 1.442695
    %v424 = vpow.pop %v423
    %v425 = vmul.f32 %v416, 1.442695
    %v426 = vpow.pop %v425
    %v427 = vmul.f32 %v417, 1.442695
    %v428 = vpow.pop %v427
    %v429 = vmul.f32 %v418, 1.442695
    %v430 = vpow.pop %v429
    %v431 = vmul.f32 %v419, 1.442695
    %v432 = vpow.pop %v431
    %v433 = vmul.f32 %v420, 1.442695
    %v434 = vpow.pop %v433
    %v435 = vmul.f32 %v421, 1.442695
    %v436 = vpow.pop %v435
    %v437 = vmul.f32 %v422, 1.442695
    %v438 = vpow.pop %v437
    %v440 = vlaneseq
    %v441 = vshrl.u32 %v440, 7
    %v442 = vsub.s32 0, %v441
    %v443 = vrot.slane %v342, %v442
    %vm445 = vcmask 261120
    %v447 = vsel %vm445, %v424, 0
    %v450 = vsel %vm445, %v426, 0
    %v453 = vsel %vm445, %v428, 0
    %v456 = vsel %vm445, %v430, 0
    %v459 = vsel %vm445, %v432, 0
    %v462 = vsel %vm445, %v434, 0
    %v465 = vsel %vm445, %v436, 0
    %v468 = vsel %vm445, %v438, 0
    %470 = vmatprep.subr.mxu0 0.0
    %471 = vmatpush1.msra.mxu0 %v338
    %472 = vmatprep.subr.mxu0 0.0
    %473 = vmatpush1.msra.mxu0 %v339
    %474 = vmatprep.subr.mxu0 0.0
    %475 = vmatpush1.msra.mxu0 %v340
    %476 = vmatprep.subr.mxu0 0.0
    %477 = vmatpush1.msra.mxu0 %v341
    %478 = vmatprep.subr.mxu0 0.0
    %479 = vmatpush1.msra.mxu0 0.0
    %480 = vmatprep.subr.mxu0 0.0
    %481 = vmatpush1.msra.mxu0 0.0
    %482 = vmatprep.subr.mxu0 0.0
    %483 = vmatpush1.msra.mxu0 0.0
    %484 = vmatprep.subr.mxu0 0.0
    %485 = vmatpush1.msra.mxu0 0.0
    %486 = vmatprep.subr.mxu0 0.0
    %487 = vmatpush1.msra.mxu0 0.0
    %488 = vmatprep.subr.mxu0 0.0
    %489 = vmatpush1.msra.mxu0 0.0
    %490 = vmatprep.subr.mxu0 0.0
    %491 = vmatpush1.msra.mxu0 0.0
    %492 = vmatprep.subr.mxu0 0.0
    %493 = vmatpush1.msra.mxu0 0.0
    %494 = vmatprep.subr.mxu0 0.0
    %495 = vmatpush1.msra.mxu0 0.0
    %496 = vmatprep.subr.mxu0 0.0
    %497 = vmatpush1.msra.mxu0 0.0
    %498 = vmatprep.subr.mxu0 0.0
    %499 = vmatpush1.msra.mxu0 0.0
    %500 = vmatprep.subr.mxu0 0.0
    %501 = vmatpush1.msra.mxu0 0.0
    %502 = vmatprep.subr.mxu0 0.0
    %503 = vmatpush1.msra.mxu0 0.0
    %504 = vmatprep.subr.mxu0 0.0
    %505 = vmatpush1.msra.mxu0 0.0
    %506 = vmatprep.subr.mxu0 0.0
    %507 = vmatpush1.msra.mxu0 0.0
    %508 = vmatprep.subr.mxu0 0.0
    %509 = vmatpush1.msra.mxu0 0.0
    %510 = vmatprep.subr.mxu0 0.0
    %511 = vmatpush1.msra.mxu0 0.0
    %512 = vmatprep.subr.mxu0 0.0
    %513 = vmatpush1.msra.mxu0 0.0
    %514 = vmatprep.subr.mxu0 0.0
    %515 = vmatpush1.msra.mxu0 0.0
    %516 = vmatprep.subr.mxu0 0.0
    %517 = vmatpush1.msra.mxu0 0.0
    %518 = vmatprep.subr.mxu0 0.0
    %519 = vmatpush1.msra.mxu0 0.0
    %520 = vmatprep.subr.mxu0 0.0
    %521 = vmatpush1.msra.mxu0 0.0
    %522 = vmatprep.subr.mxu0 0.0
    %523 = vmatpush1.msra.mxu0 0.0
    %524 = vmatprep.subr.mxu0 0.0
    %525 = vmatpush1.msra.mxu0 0.0
    %526 = vmatprep.subr.mxu0 0.0
    %527 = vmatpush1.msra.mxu0 0.0
    %528 = vmatprep.subr.mxu0 0.0
    %529 = vmatpush1.msra.mxu0 0.0
    %530 = vmatprep.subr.mxu0 0.0
    %531 = vmatpush1.msra.mxu0 0.0
    %532 = vmatprep.subr.mxu0 0.0
    %533 = vmatpush1.msra.mxu0 0.0
    %534 = vmatprep.mubr.f32.mxu0 0.0
    %535 = vmatmul.mubr.f32.gmra.mrb[0].mxu0 %v447
    %v536 = vpop.f32.mrb[0].mxu0
    %v537 = vadd.f32 %v443, %v536
    %v538 = vpop.f32.mrb[0].mxu0
    %539 = vmatprep.mubr.f32.mxu0 0.0
    %540 = vmatmul.mubr.f32.gmra.mrb[0].mxu0 %v450
    %v541 = vpop.f32.mrb[0].mxu0
    %v542 = vadd.f32 %v443, %v541
    %v543 = vpop.f32.mrb[0].mxu0
    %544 = vmatprep.mubr.f32.mxu0 0.0
    %545 = vmatmul.mubr.f32.gmra.mrb[0].mxu0 %v453
    %v546 = vpop.f32.mrb[0].mxu0
    %v547 = vadd.f32 %v443, %v546
    %v548 = vpop.f32.mrb[0].mxu0
    %549 = vmatprep.mubr.f32.mxu0 0.0
    %550 = vmatmul.mubr.f32.gmra.mrb[0].mxu0 %v456
    %v551 = vpop.f32.mrb[0].mxu0
    %v552 = vadd.f32 %v443, %v551
    %v553 = vpop.f32.mrb[0].mxu0
    %554 = vmatprep.mubr.f32.mxu0 0.0
    %555 = vmatmul.mubr.f32.gmra.mrb[0].mxu0 %v459
    %v556 = vpop.f32.mrb[0].mxu0
    %v557 = vadd.f32 %v443, %v556
    %v558 = vpop.f32.mrb[0].mxu0
    %559 = vmatprep.mubr.f32.mxu0 0.0
    %560 = vmatmul.mubr.f32.gmra.mrb[0].mxu0 %v462
    %v561 = vpop.f32.mrb[0].mxu0
    %v562 = vadd.f32 %v443, %v561
    %v563 = vpop.f32.mrb[0].mxu0
    %564 = vmatprep.mubr.f32.mxu0 0.0
    %565 = vmatmul.mubr.f32.gmra.mrb[0].mxu0 %v465
    %v566 = vpop.f32.mrb[0].mxu0
    %v567 = vadd.f32 %v443, %v566
    %v568 = vpop.f32.mrb[0].mxu0
    %569 = vmatprep.mubr.f32.mxu0 0.0
    %570 = vmatmul.mubr.f32.gmra.mrb[0].mxu0 %v468
    %v571 = vpop.f32.mrb[0].mxu0
    %v572 = vadd.f32 %v443, %v571
    %v573 = vpop.f32.mrb[0].mxu0
    %574 = vdwg.mxu0
    %v575 = vmax.f32 %v537, 0.0
    %v576 = vmax.f32 %v542, 0.0
    %v577 = vmax.f32 %v547, 0.0
    %v578 = vmax.f32 %v552, 0.0
    %v579 = vmax.f32 %v557, 0.0
    %v580 = vmax.f32 %v562, 0.0
    %v581 = vmax.f32 %v567, 0.0
    %v582 = vmax.f32 %v572, 0.0
    %v584 = vlaneseq
    %v585 = vshrl.u32 %v584, 7
    %v586 = vsub.s32 0, %v585
    %v587 = vrot.slane %v347, %v586
    %v590 = vsel %vm445, %v575, 0
    %v593 = vsel %vm445, %v576, 0
    %v596 = vsel %vm445, %v577, 0
    %v599 = vsel %vm445, %v578, 0
    %v602 = vsel %vm445, %v579, 0
    %v605 = vsel %vm445, %v580, 0
    %v608 = vsel %vm445, %v581, 0
    %v611 = vsel %vm445, %v582, 0
    %613 = vmatprep.subr.mxu0 0.0
    %614 = vmatpush1.msra.mxu0 %v343
    %615 = vmatprep.subr.mxu0 0.0
    %616 = vmatpush1.msra.mxu0 %v344
    %617 = vmatprep.subr.mxu0 0.0
    %618 = vmatpush1.msra.mxu0 %v345
    %619 = vmatprep.subr.mxu0 0.0
    %620 = vmatpush1.msra.mxu0 %v346
    %621 = vmatprep.subr.mxu0 0.0
    %622 = vmatpush1.msra.mxu0 0.0
    %623 = vmatprep.subr.mxu0 0.0
    %624 = vmatpush1.msra.mxu0 0.0
    %625 = vmatprep.subr.mxu0 0.0
    %626 = vmatpush1.msra.mxu0 0.0
    %627 = vmatprep.subr.mxu0 0.0
    %628 = vmatpush1.msra.mxu0 0.0
    %629 = vmatprep.subr.mxu0 0.0
    %630 = vmatpush1.msra.mxu0 0.0
    %631 = vmatprep.subr.mxu0 0.0
    %632 = vmatpush1.msra.mxu0 0.0
    %633 = vmatprep.subr.mxu0 0.0
    %634 = vmatpush1.msra.mxu0 0.0
    %635 = vmatprep.subr.mxu0 0.0
    %636 = vmatpush1.msra.mxu0 0.0
    %637 = vmatprep.subr.mxu0 0.0
    %638 = vmatpush1.msra.mxu0 0.0
    %639 = vmatprep.subr.mxu0 0.0
    %640 = vmatpush1.msra.mxu0 0.0
    %641 = vmatprep.subr.mxu0 0.0
    %642 = vmatpush1.msra.mxu0 0.0
    %643 = vmatprep.subr.mxu0 0.0
    %644 = vmatpush1.msra.mxu0 0.0
    %645 = vmatprep.subr.mxu0 0.0
    %646 = vmatpush1.msra.mxu0 0.0
    %647 = vmatprep.subr.mxu0 0.0
    %648 = vmatpush1.msra.mxu0 0.0
    %649 = vmatprep.subr.mxu0 0.0
    %650 = vmatpush1.msra.mxu0 0.0
    %651 = vmatprep.subr.mxu0 0.0
    %652 = vmatpush1.msra.mxu0 0.0
    %653 = vmatprep.subr.mxu0 0.0
    %654 = vmatpush1.msra.mxu0 0.0
    %655 = vmatprep.subr.mxu0 0.0
    %656 = vmatpush1.msra.mxu0 0.0
    %657 = vmatprep.subr.mxu0 0.0
    %658 = vmatpush1.msra.mxu0 0.0
    %659 = vmatprep.subr.mxu0 0.0
    %660 = vmatpush1.msra.mxu0 0.0
    %661 = vmatprep.subr.mxu0 0.0
    %662 = vmatpush1.msra.mxu0 0.0
    %663 = vmatprep.subr.mxu0 0.0
    %664 = vmatpush1.msra.mxu0 0.0
    %665 = vmatprep.subr.mxu0 0.0
    %666 = vmatpush1.msra.mxu0 0.0
    %667 = vmatprep.subr.mxu0 0.0
    %668 = vmatpush1.msra.mxu0 0.0
    %669 = vmatprep.subr.mxu0 0.0
    %670 = vmatpush1.msra.mxu0 0.0
    %671 = vmatprep.subr.mxu0 0.0
    %672 = vmatpush1.msra.mxu0 0.0
    %673 = vmatprep.subr.mxu0 0.0
    %674 = vmatpush1.msra.mxu0 0.0
    %675 = vmatprep.subr.mxu0 0.0
    %676 = vmatpush1.msra.mxu0 0.0
    %677 = vmatprep.mubr.f32.mxu0 0.0
    %678 = vmatmul.mubr.f32.gmra.mrb[0].mxu0 %v590
    %v679 = vpop.f32.mrb[0].mxu0
    %v680 = vadd.f32 %v587, %v679
    %v681 = vpop.f32.mrb[0].mxu0
    %682 = vmatprep.mubr.f32.mxu0 0.0
    %683 = vmatmul.mubr.f32.gmra.mrb[0].mxu0 %v593
    %v684 = vpop.f32.mrb[0].mxu0
    %v685 = vadd.f32 %v587, %v684
    %v686 = vpop.f32.mrb[0].mxu0
    %687 = vmatprep.mubr.f32.mxu0 0.0
    %688 = vmatmul.mubr.f32.gmra.mrb[0].mxu0 %v596
    %v689 = vpop.f32.mrb[0].mxu0
    %v690 = vadd.f32 %v587, %v689
    %v691 = vpop.f32.mrb[0].mxu0
    %692 = vmatprep.mubr.f32.mxu0 0.0
    %693 = vmatmul.mubr.f32.gmra.mrb[0].mxu0 %v599
    %v694 = vpop.f32.mrb[0].mxu0
    %v695 = vadd.f32 %v587, %v694
    %v696 = vpop.f32.mrb[0].mxu0
    %697 = vmatprep.mubr.f32.mxu0 0.0
    %698 = vmatmul.mubr.f32.gmra.mrb[0].mxu0 %v602
    %v699 = vpop.f32.mrb[0].mxu0
    %v700 = vadd.f32 %v587, %v699
    %v701 = vpop.f32.mrb[0].mxu0
    %702 = vmatprep.mubr.f32.mxu0 0.0
    %703 = vmatmul.mubr.f32.gmra.mrb[0].mxu0 %v605
    %v704 = vpop.f32.mrb[0].mxu0
    %v705 = vadd.f32 %v587, %v704
    %v706 = vpop.f32.mrb[0].mxu0
    %707 = vmatprep.mubr.f32.mxu0 0.0
    %708 = vmatmul.mubr.f32.gmra.mrb[0].mxu0 %v608
    %v709 = vpop.f32.mrb[0].mxu0
    %v710 = vadd.f32 %v587, %v709
    %v711 = vpop.f32.mrb[0].mxu0
    %712 = vmatprep.mubr.f32.mxu0 0.0
    %713 = vmatmul.mubr.f32.gmra.mrb[0].mxu0 %v611
    %v714 = vpop.f32.mrb[0].mxu0
    %v715 = vadd.f32 %v587, %v714
    %v716 = vpop.f32.mrb[0].mxu0
    %717 = vdwg.mxu0
    %v718 = vmax.f32 %v680, 0.0
    %v719 = vmax.f32 %v685, 0.0
    %v720 = vmax.f32 %v690, 0.0
    %v721 = vmax.f32 %v695, 0.0
    %v722 = vmax.f32 %v700, 0.0
    %v723 = vmax.f32 %v705, 0.0
    %v724 = vmax.f32 %v710, 0.0
    %v725 = vmax.f32 %v715, 0.0
    %v727 = vlaneseq
    %v728 = vshrl.u32 %v727, 7
    %v729 = vsub.s32 0, %v728
    %v730 = vrot.slane %v352, %v729
    %v733 = vsel %vm445, %v718, 0
    %v736 = vsel %vm445, %v719, 0
    %v739 = vsel %vm445, %v720, 0
    %v742 = vsel %vm445, %v721, 0
    %v745 = vsel %vm445, %v722, 0
    %v748 = vsel %vm445, %v723, 0
    %v751 = vsel %vm445, %v724, 0
    %v754 = vsel %vm445, %v725, 0
    %756 = vmatprep.subr.mxu0 0.0
    %757 = vmatpush1.msra.mxu0 %v348
    %758 = vmatprep.subr.mxu0 0.0
    %759 = vmatpush1.msra.mxu0 %v349
    %760 = vmatprep.subr.mxu0 0.0
    %761 = vmatpush1.msra.mxu0 %v350
    %762 = vmatprep.subr.mxu0 0.0
    %763 = vmatpush1.msra.mxu0 %v351
    %764 = vmatprep.subr.mxu0 0.0
    %765 = vmatpush1.msra.mxu0 0.0
    %766 = vmatprep.subr.mxu0 0.0
    %767 = vmatpush1.msra.mxu0 0.0
    %768 = vmatprep.subr.mxu0 0.0
    %769 = vmatpush1.msra.mxu0 0.0
    %770 = vmatprep.subr.mxu0 0.0
    %771 = vmatpush1.msra.mxu0 0.0
    %772 = vmatprep.subr.mxu0 0.0
    %773 = vmatpush1.msra.mxu0 0.0
    %774 = vmatprep.subr.mxu0 0.0
    %775 = vmatpush1.msra.mxu0 0.0
    %776 = vmatprep.subr.mxu0 0.0
    %777 = vmatpush1.msra.mxu0 0.0
    %778 = vmatprep.subr.mxu0 0.0
    %779 = vmatpush1.msra.mxu0 0.0
    %780 = vmatprep.subr.mxu0 0.0
    %781 = vmatpush1.msra.mxu0 0.0
    %782 = vmatprep.subr.mxu0 0.0
    %783 = vmatpush1.msra.mxu0 0.0
    %784 = vmatprep.subr.mxu0 0.0
    %785 = vmatpush1.msra.mxu0 0.0
    %786 = vmatprep.subr.mxu0 0.0
    %787 = vmatpush1.msra.mxu0 0.0
    %788 = vmatprep.subr.mxu0 0.0
    %789 = vmatpush1.msra.mxu0 0.0
    %790 = vmatprep.subr.mxu0 0.0
    %791 = vmatpush1.msra.mxu0 0.0
    %792 = vmatprep.subr.mxu0 0.0
    %793 = vmatpush1.msra.mxu0 0.0
    %794 = vmatprep.subr.mxu0 0.0
    %795 = vmatpush1.msra.mxu0 0.0
    %796 = vmatprep.subr.mxu0 0.0
    %797 = vmatpush1.msra.mxu0 0.0
    %798 = vmatprep.subr.mxu0 0.0
    %799 = vmatpush1.msra.mxu0 0.0
    %800 = vmatprep.subr.mxu0 0.0
    %801 = vmatpush1.msra.mxu0 0.0
    %802 = vmatprep.subr.mxu0 0.0
    %803 = vmatpush1.msra.mxu0 0.0
    %804 = vmatprep.subr.mxu0 0.0
    %805 = vmatpush1.msra.mxu0 0.0
    %806 = vmatprep.subr.mxu0 0.0
    %807 = vmatpush1.msra.mxu0 0.0
    %808 = vmatprep.subr.mxu0 0.0
    %809 = vmatpush1.msra.mxu0 0.0
    %810 = vmatprep.subr.mxu0 0.0
    %811 = vmatpush1.msra.mxu0 0.0
    %812 = vmatprep.subr.mxu0 0.0
    %813 = vmatpush1.msra.mxu0 0.0
    %814 = vmatprep.subr.mxu0 0.0
    %815 = vmatpush1.msra.mxu0 0.0
    %816 = vmatprep.subr.mxu0 0.0
    %817 = vmatpush1.msra.mxu0 0.0
    %818 = vmatprep.subr.mxu0 0.0
    %819 = vmatpush1.msra.mxu0 0.0
    %820 = vmatprep.mubr.f32.mxu0 0.0
    %821 = vmatmul.mubr.f32.gmra.mrb[0].mxu0 %v733
    %v822 = vpop.f32.mrb[0].mxu0
    %v823 = vadd.f32 %v730, %v822
    %v824 = vpop.f32.mrb[0].mxu0
    %825 = vmatprep.mubr.f32.mxu0 0.0
    %826 = vmatmul.mubr.f32.gmra.mrb[0].mxu0 %v736
    %v827 = vpop.f32.mrb[0].mxu0
    %v828 = vadd.f32 %v730, %v827
    %v829 = vpop.f32.mrb[0].mxu0
    %830 = vmatprep.mubr.f32.mxu0 0.0
    %831 = vmatmul.mubr.f32.gmra.mrb[0].mxu0 %v739
    %v832 = vpop.f32.mrb[0].mxu0
    %v833 = vadd.f32 %v730, %v832
    %v834 = vpop.f32.mrb[0].mxu0
    %835 = vmatprep.mubr.f32.mxu0 0.0
    %836 = vmatmul.mubr.f32.gmra.mrb[0].mxu0 %v742
    %v837 = vpop.f32.mrb[0].mxu0
    %v838 = vadd.f32 %v730, %v837
    %v839 = vpop.f32.mrb[0].mxu0
    %840 = vmatprep.mubr.f32.mxu0 0.0
    %841 = vmatmul.mubr.f32.gmra.mrb[0].mxu0 %v745
    %v842 = vpop.f32.mrb[0].mxu0
    %v843 = vadd.f32 %v730, %v842
    %v844 = vpop.f32.mrb[0].mxu0
    %845 = vmatprep.mubr.f32.mxu0 0.0
    %846 = vmatmul.mubr.f32.gmra.mrb[0].mxu0 %v748
    %v847 = vpop.f32.mrb[0].mxu0
    %v848 = vadd.f32 %v730, %v847
    %v849 = vpop.f32.mrb[0].mxu0
    %850 = vmatprep.mubr.f32.mxu0 0.0
    %851 = vmatmul.mubr.f32.gmra.mrb[0].mxu0 %v751
    %v852 = vpop.f32.mrb[0].mxu0
    %v853 = vadd.f32 %v730, %v852
    %v854 = vpop.f32.mrb[0].mxu0
    %855 = vmatprep.mubr.f32.mxu0 0.0
    %856 = vmatmul.mubr.f32.gmra.mrb[0].mxu0 %v754
    %v857 = vpop.f32.mrb[0].mxu0
    %v858 = vadd.f32 %v730, %v857
    %v859 = vpop.f32.mrb[0].mxu0
    %860 = vdwg.mxu0
    %v861 = vld [vmem:[#allocation10] sm:$0xf]
    %v862 = vld [vmem:[#allocation10 + $0x4] sm:$0xf]
    %v863 = vld [vmem:[#allocation10 + $0x8] sm:$0xf]
    %v864 = vld [vmem:[#allocation10 + $0xc] sm:$0xf]
    %v865 = vld [vmem:[#allocation11] sm:$0x1]
    %v867 = vlaneseq
    %v868 = vshrl.u32 %v867, 7
    %v869 = vsub.s32 0, %v868
    %v870 = vrot.slane %v865, %v869
    %v876 = vunpack.c.l.b16 %v861
    %v877 = vunpack.c.l.b16 %v862
    %v878 = vunpack.c.l.b16 %v863
    %v879 = vunpack.c.l.b16 %v864
    %v880 = vpack.c.b16 %v877, %v876
    %v881 = vpack.c.b16 %v879, %v878
    %v885 = vsel %vm445, %v354, 0
    %887 = vmatprep.subr.bf16.mxu0 0
    %888 = vmatpush1.bf16.msra.mxu0 %v880
    %889 = vmatprep.subr.bf16.mxu0 0
    %890 = vmatpush1.bf16.msra.mxu0 %v881
    %891 = vmatprep.subr.bf16.mxu0 0
    %892 = vmatpush1.bf16.msra.mxu0 0
    %893 = vmatprep.subr.bf16.mxu0 0
    %894 = vmatpush1.bf16.msra.mxu0 0
    %895 = vmatprep.subr.bf16.mxu0 0
    %896 = vmatpush1.bf16.msra.mxu0 0
    %897 = vmatprep.subr.bf16.mxu0 0
    %898 = vmatpush1.bf16.msra.mxu0 0
    %899 = vmatprep.subr.bf16.mxu0 0
    %900 = vmatpush1.bf16.msra.mxu0 0
    %901 = vmatprep.subr.bf16.mxu0 0
    %902 = vmatpush1.bf16.msra.mxu0 0
    %903 = vmatprep.subr.bf16.mxu0 0
    %904 = vmatpush1.bf16.msra.mxu0 0
    %905 = vmatprep.subr.bf16.mxu0 0
    %906 = vmatpush1.bf16.msra.mxu0 0
    %907 = vmatprep.subr.bf16.mxu0 0
    %908 = vmatpush1.bf16.msra.mxu0 0
    %909 = vmatprep.subr.bf16.mxu0 0
    %910 = vmatpush1.bf16.msra.mxu0 0
    %911 = vmatprep.subr.bf16.mxu0 0
    %912 = vmatpush1.bf16.msra.mxu0 0
    %913 = vmatprep.subr.bf16.mxu0 0
    %914 = vmatpush1.bf16.msra.mxu0 0
    %915 = vmatprep.subr.bf16.mxu0 0
    %916 = vmatpush1.bf16.msra.mxu0 0
    %917 = vmatprep.subr.bf16.mxu0 0
    %918 = vmatpush1.bf16.msra.mxu0 0
    %919 = vmatprep.mubr.bf16.mxu0 0
    %920 = vmatmul.mubr.bf16.gmra.mrb[0].mxu0 %v885
    %v921 = vpop.f32.mrb[0].mxu0
    %v922 = vadd.f32 %v870, %v921
    %v923 = vpop.f32.mrb[0].mxu0
    %v924 = vpop.f32.mrb[0].mxu0
    %v925 = vpop.f32.mrb[0].mxu0
    %926 = vdwg.mxu0
    %v927 = vld [vmem:[#allocation13] sm:$0xf]
    %v928 = vld [vmem:[#allocation13 + $0x4] sm:$0xf]
    %v929 = vld [vmem:[#allocation13 + $0x8] sm:$0xf]
    %v930 = vld [vmem:[#allocation13 + $0xc] sm:$0xf]
    %v931 = vld [vmem:[#allocation14] sm:$0x1]
    %v933 = vlaneseq
    %v934 = vshrl.u32 %v933, 7
    %v935 = vsub.s32 0, %v934
    %v936 = vrot.slane %v931, %v935
    %v942 = vunpack.c.l.b16 %v927
    %v943 = vunpack.c.l.b16 %v928
    %v944 = vunpack.c.l.b16 %v929
    %v945 = vunpack.c.l.b16 %v930
    %v946 = vpack.c.b16 %v943, %v942
    %v947 = vpack.c.b16 %v945, %v944
    %v951 = vsel %vm445, %v355, 0
    %953 = vmatprep.subr.bf16.mxu0 0
    %954 = vmatpush1.bf16.msra.mxu0 %v946
    %955 = vmatprep.subr.bf16.mxu0 0
    %956 = vmatpush1.bf16.msra.mxu0 %v947
    %957 = vmatprep.subr.bf16.mxu0 0
    %958 = vmatpush1.bf16.msra.mxu0 0
    %959 = vmatprep.subr.bf16.mxu0 0
    %960 = vmatpush1.bf16.msra.mxu0 0
    %961 = vmatprep.subr.bf16.mxu0 0
    %962 = vmatpush1.bf16.msra.mxu0 0
    %963 = vmatprep.subr.bf16.mxu0 0
    %964 = vmatpush1.bf16.msra.mxu0 0
    %965 = vmatprep.subr.bf16.mxu0 0
    %966 = vmatpush1.bf16.msra.mxu0 0
    %967 = vmatprep.subr.bf16.mxu0 0
    %968 = vmatpush1.bf16.msra.mxu0 0
    %969 = vmatprep.subr.bf16.mxu0 0
    %970 = vmatpush1.bf16.msra.mxu0 0
    %971 = vmatprep.subr.bf16.mxu0 0
    %972 = vmatpush1.bf16.msra.mxu0 0
    %973 = vmatprep.subr.bf16.mxu0 0
    %974 = vmatpush1.bf16.msra.mxu0 0
    %975 = vmatprep.subr.bf16.mxu0 0
    %976 = vmatpush1.bf16.msra.mxu0 0
    %977 = vmatprep.subr.bf16.mxu0 0
    %978 = vmatpush1.bf16.msra.mxu0 0
    %979 = vmatprep.subr.bf16.mxu0 0
    %980 = vmatpush1.bf16.msra.mxu0 0
    %981 = vmatprep.subr.bf16.mxu0 0
    %982 = vmatpush1.bf16.msra.mxu0 0
    %983 = vmatprep.subr.bf16.mxu0 0
    %984 = vmatpush1.bf16.msra.mxu0 0
    %985 = vmatprep.mubr.bf16.mxu0 0
    %986 = vmatmul.mubr.bf16.gmra.mrb[0].mxu0 %v951
    %v987 = vpop.f32.mrb[0].mxu0
    %v988 = vadd.f32 %v936, %v987
    %v989 = vpop.f32.mrb[0].mxu0
    %v990 = vpop.f32.mrb[0].mxu0
    %v991 = vpop.f32.mrb[0].mxu0
    %992 = vdwg.mxu0
    %v993 = vld [vmem:[#allocation16] sm:$0xf]
    %v994 = vld [vmem:[#allocation16 + $0x4] sm:$0xf]
    %v995 = vld [vmem:[#allocation16 + $0x8] sm:$0xf]
    %v996 = vld [vmem:[#allocation16 + $0xc] sm:$0xf]
    %v997 = vld [vmem:[#allocation17] sm:$0x1]
    %v999 = vlaneseq
    %v1000 = vshrl.u32 %v999, 7
    %v1001 = vsub.s32 0, %v1000
    %v1002 = vrot.slane %v997, %v1001
    %v1008 = vunpack.c.l.b16 %v993
    %v1009 = vunpack.c.l.b16 %v994
    %v1010 = vunpack.c.l.b16 %v995
    %v1011 = vunpack.c.l.b16 %v996
    %v1012 = vpack.c.b16 %v1009, %v1008
    %v1013 = vpack.c.b16 %v1011, %v1010
    %1016 = vmatprep.subr.bf16.mxu0 0
    %1017 = vmatpush1.bf16.msra.mxu0 %v1012
    %1018 = vmatprep.subr.bf16.mxu0 0
    %1019 = vmatpush1.bf16.msra.mxu0 %v1013
    %1020 = vmatprep.subr.bf16.mxu0 0
    %1021 = vmatpush1.bf16.msra.mxu0 0
    %1022 = vmatprep.subr.bf16.mxu0 0
    %1023 = vmatpush1.bf16.msra.mxu0 0
    %1024 = vmatprep.subr.bf16.mxu0 0
    %1025 = vmatpush1.bf16.msra.mxu0 0
    %1026 = vmatprep.subr.bf16.mxu0 0
    %1027 = vmatpush1.bf16.msra.mxu0 0
    %1028 = vmatprep.subr.bf16.mxu0 0
    %1029 = vmatpush1.bf16.msra.mxu0 0
    %1030 = vmatprep.subr.bf16.mxu0 0
    %1031 = vmatpush1.bf16.msra.mxu0 0
    %1032 = vmatprep.subr.bf16.mxu0 0
    %1033 = vmatpush1.bf16.msra.mxu0 0
    %1034 = vmatprep.subr.bf16.mxu0 0
    %1035 = vmatpush1.bf16.msra.mxu0 0
    %1036 = vmatprep.subr.bf16.mxu0 0
    %1037 = vmatpush1.bf16.msra.mxu0 0
    %1038 = vmatprep.subr.bf16.mxu0 0
    %1039 = vmatpush1.bf16.msra.mxu0 0
    %1040 = vmatprep.subr.bf16.mxu0 0
    %1041 = vmatpush1.bf16.msra.mxu0 0
    %1042 = vmatprep.subr.bf16.mxu0 0
    %1043 = vmatpush1.bf16.msra.mxu0 0
    %1044 = vmatprep.subr.bf16.mxu0 0
    %1045 = vmatpush1.bf16.msra.mxu0 0
    %1046 = vmatprep.subr.bf16.mxu0 0
    %1047 = vmatpush1.bf16.msra.mxu0 0
    %1048 = vmatprep.mubr.bf16.mxu0 0
    %1049 = vmatmul.mubr.bf16.gmra.mrb[0].mxu0 %v951
    %v1050 = vpop.f32.mrb[0].mxu0
    %v1051 = vadd.f32 %v1002, %v1050
    %v1052 = vpop.f32.mrb[0].mxu0
    %v1053 = vpop.f32.mrb[0].mxu0
    %v1054 = vpop.f32.mrb[0].mxu0
    %1055 = vdwg.mxu0
    %1057 = vset.pattern.permute.xlu0 0
    %1058 = vperm.xlu0 %1057, %v823
    %v1059 = vpop.permute.xlu0 %1058
    %1062 = vset.pattern.permute.xlu0 0
    %1063 = vperm.xlu0 %1062, %v828
    %v1064 = vpop.permute.xlu0 %1063
    %1067 = vset.pattern.permute.xlu0 0
    %1068 = vperm.xlu0 %1067, %v833
    %v1069 = vpop.permute.xlu0 %1068
    %1072 = vset.pattern.permute.xlu0 0
    %1073 = vperm.xlu0 %1072, %v838
    %v1074 = vpop.permute.xlu0 %1073
    %1077 = vset.pattern.permute.xlu0 0
    %1078 = vperm.xlu0 %1077, %v843
    %v1079 = vpop.permute.xlu0 %1078
    %1082 = vset.pattern.permute.xlu0 0
    %1083 = vperm.xlu0 %1082, %v848
    %v1084 = vpop.permute.xlu0 %1083
    %1087 = vset.pattern.permute.xlu0 0
    %1088 = vperm.xlu0 %1087, %v853
    %v1089 = vpop.permute.xlu0 %1088
    %1092 = vset.pattern.permute.xlu0 0
    %1093 = vperm.xlu0 %1092, %v858
    %v1094 = vpop.permute.xlu0 %1093
    %v1096 = vmul.f32 %v1059, %v329
    %v1097 = vmul.f32 %v1064, %v330
    %v1098 = vmul.f32 %v1069, %v331
    %v1099 = vmul.f32 %v1074, %v332
    %v1100 = vmul.f32 %v1079, %v333
    %v1101 = vmul.f32 %v1084, %v334
    %v1102 = vmul.f32 %v1089, %v335
    %v1103 = vmul.f32 %v1094, %v336
    %v1104 = vsel %vm368, %v1096, 0.0
    %v1105 = vsel %vm368, %v1097, 0.0
    %v1106 = vadd.f32 %v1104, %v1105
    %v1107 = vsel %vm368, %v1098, 0.0
    %v1108 = vadd.f32 %v1106, %v1107
    %v1109 = vsel %vm368, %v1099, 0.0
    %v1110 = vadd.f32 %v1108, %v1109
    %v1111 = vsel %vm368, %v1100, 0.0
    %v1112 = vadd.f32 %v1110, %v1111
    %v1113 = vsel %vm368, %v1101, 0.0
    %v1114 = vadd.f32 %v1112, %v1113
    %v1115 = vsel %vm368, %v1102, 0.0
    %v1116 = vadd.f32 %v1114, %v1115
    %v1117 = vsel %vm368, %v1103, 0.0
    %v1118 = vadd.f32 %v1116, %v1117
    %v1119 = vpack.c.bf16 %v922, %v922
    %v1120 = vpack.c.bf16 %v988, %v988
    %v1122 = vsel %vm368, %v1119, 0
    %v1125 = vsel %vm368, %v1120, 0
    %1127 = vmatprep.subr.bf16.mxu0 0
    %1128 = vmatpush1.bf16.xpose.msra.mxu0 %v1125
    %1129 = vmatprep.subr.bf16.mxu0 0
    %1130 = vmatpush1.bf16.xpose.msra.mxu0 0
    %1131 = vmatprep.subr.bf16.mxu0 0
    %1132 = vmatpush1.bf16.xpose.msra.mxu0 0
    %1133 = vmatprep.subr.bf16.mxu0 0
    %1134 = vmatpush1.bf16.xpose.msra.mxu0 0
    %1135 = vmatprep.subr.bf16.mxu0 0
    %1136 = vmatpush1.bf16.xpose.msra.mxu0 0
    %1137 = vmatprep.subr.bf16.mxu0 0
    %1138 = vmatpush1.bf16.xpose.msra.mxu0 0
    %1139 = vmatprep.subr.bf16.mxu0 0
    %1140 = vmatpush1.bf16.xpose.msra.mxu0 0
    %1141 = vmatprep.subr.bf16.mxu0 0
    %1142 = vmatpush1.bf16.xpose.msra.mxu0 0
    %1143 = vmatprep.subr.bf16.mxu0 0
    %1144 = vmatpush1.bf16.xpose.msra.mxu0 0
    %1145 = vmatprep.subr.bf16.mxu0 0
    %1146 = vmatpush1.bf16.xpose.msra.mxu0 0
    %1147 = vmatprep.subr.bf16.mxu0 0
    %1148 = vmatpush1.bf16.xpose.msra.mxu0 0
    %1149 = vmatprep.subr.bf16.mxu0 0
    %1150 = vmatpush1.bf16.xpose.msra.mxu0 0
    %1151 = vmatprep.subr.bf16.mxu0 0
    %1152 = vmatpush1.bf16.xpose.msra.mxu0 0
    %1153 = vmatprep.subr.bf16.mxu0 0
    %1154 = vmatpush1.bf16.xpose.msra.mxu0 0
    %1155 = vmatprep.subr.bf16.mxu0 0
    %1156 = vmatpush1.bf16.xpose.msra.mxu0 0
    %1157 = vmatprep.subr.bf16.mxu0 0
    %1158 = vmatpush1.bf16.xpose.msra.mxu0 0
    %1159 = vmatprep.mubr.bf16.mxu0 0
    %1160 = vmatmul.mubr.bf16.gmra.mrb[0].mxu0 %v1122
    %v1161 = vpop.f32.mrb[0].mxu0
    %v1162 = vadd.f32 %v1118, %v1161
    %v1163 = vpop.f32.mrb[0].mxu0
    %v1164 = vpop.f32.mrb[0].mxu0
    %v1165 = vpop.f32.mrb[0].mxu0
    %1166 = vdwg.mxu0
    %v1167 = vmul.f32 %v1162, %v357
    %v1168 = vadd.f32 %v1167, %v359
    %v1169 = vsel %vm368, %v1168, -inf
    %1170 = vmax.xlane.f32.xlu0 %v1169
    %v1171 = vpop.xlane.xlu0 %1170
    %v1172 = vsub.f32 %v1168, %v1171
    %v1173 = vmul.f32 %v1172, 1.442695
    %v1174 = vpow.pop %v1173
    %v1175 = vsel %vm368, %v1174, 0.0
    %1176 = vadd.xlane.f32.xlu0 %v1175
    %v1177 = vpop.xlane.xlu0 %1176
    %v1178 = vrcp.pop %v1177
    %v1179 = vmul.f32 %v1174, %v1178
    %v1180 = vpack.c.bf16 %v1179, %v1179
    %v1181 = vpack.c.bf16 %v1051, %v1051
    %v1183 = vsel %vm368, %v1180, 0
    %vm1185 = vcmask 1043456
    %v1187 = vsel %vm1185, %v1181, 0
    %1189 = vmatprep.subr.bf16.mxu0 0
    %1190 = vmatpush1.bf16.msra.mxu0 %v1187
    %1191 = vmatprep.subr.bf16.mxu0 0
    %1192 = vmatpush1.bf16.msra.mxu0 0
    %1193 = vmatprep.subr.bf16.mxu0 0
    %1194 = vmatpush1.bf16.msra.mxu0 0
    %1195 = vmatprep.subr.bf16.mxu0 0
    %1196 = vmatpush1.bf16.msra.mxu0 0
    %1197 = vmatprep.subr.bf16.mxu0 0
    %1198 = vmatpush1.bf16.msra.mxu0 0
    %1199 = vmatprep.subr.bf16.mxu0 0
    %1200 = vmatpush1.bf16.msra.mxu0 0
    %1201 = vmatprep.subr.bf16.mxu0 0
    %1202 = vmatpush1.bf16.msra.mxu0 0
    %1203 = vmatprep.subr.bf16.mxu0 0
    %1204 = vmatpush1.bf16.msra.mxu0 0
    %1205 = vmatprep.subr.bf16.mxu0 0
    %1206 = vmatpush1.bf16.msra.mxu0 0
    %1207 = vmatprep.subr.bf16.mxu0 0
    %1208 = vmatpush1.bf16.msra.mxu0 0
    %1209 = vmatprep.subr.bf16.mxu0 0
    %1210 = vmatpush1.bf16.msra.mxu0 0
    %1211 = vmatprep.subr.bf16.mxu0 0
    %1212 = vmatpush1.bf16.msra.mxu0 0
    %1213 = vmatprep.subr.bf16.mxu0 0
    %1214 = vmatpush1.bf16.msra.mxu0 0
    %1215 = vmatprep.subr.bf16.mxu0 0
    %1216 = vmatpush1.bf16.msra.mxu0 0
    %1217 = vmatprep.subr.bf16.mxu0 0
    %1218 = vmatpush1.bf16.msra.mxu0 0
    %1219 = vmatprep.subr.bf16.mxu0 0
    %1220 = vmatpush1.bf16.msra.mxu0 0
    %1221 = vmatprep.mubr.bf16.mxu0 0
    %1222 = vmatmul.mubr.bf16.gmra.mrb[0].mxu0 %v1183
    %v1223 = vpop.f32.mrb[0].mxu0
    %v1224 = vadd.f32 0.0, %v1223
    %v1225 = vpop.f32.mrb[0].mxu0
    %v1226 = vpop.f32.mrb[0].mxu0
    %v1227 = vpop.f32.mrb[0].mxu0
    %1228 = vdwg.mxu0
    %v1229 = vpack.c.bf16 %v1224, %v1224
    %v1230 = vld [vmem:[#allocation19] sm:$0xf]
    %s1231 = scalar_lea.vmem [#allocation10], 16
    %v1232 = vld [vmem:[%s1231] sm:$0xf]
    %v1233 = vld [vmem:[%s1231 + $0x4] sm:$0xf]
    %v1234 = vld [vmem:[%s1231 + $0x8] sm:$0xf]
    %v1235 = vld [vmem:[%s1231 + $0xc] sm:$0xf]
    %s1236 = scalar_lea.vmem [#allocation11], 1
    %v1237 = vld [vmem:[%s1236] sm:$0x1]
    %v1239 = vlaneseq
    %v1240 = vshrl.u32 %v1239, 7
    %v1241 = vsub.s32 0, %v1240
    %v1242 = vrot.slane %v1237, %v1241
    %v1248 = vunpack.c.l.b16 %v1232
    %v1249 = vunpack.c.l.b16 %v1233
    %v1250 = vunpack.c.l.b16 %v1234
    %v1251 = vunpack.c.l.b16 %v1235
    %v1252 = vpack.c.b16 %v1249, %v1248
    %v1253 = vpack.c.b16 %v1251, %v1250
    %1256 = vmatprep.subr.bf16.mxu0 0
    %1257 = vmatpush1.bf16.msra.mxu0 %v1252
    %1258 = vmatprep.subr.bf16.mxu0 0
    %1259 = vmatpush1.bf16.msra.mxu0 %v1253
    %1260 = vmatprep.subr.bf16.mxu0 0
    %1261 = vmatpush1.bf16.msra.mxu0 0
    %1262 = vmatprep.subr.bf16.mxu0 0
    %1263 = vmatpush1.bf16.msra.mxu0 0
    %1264 = vmatprep.subr.bf16.mxu0 0
    %1265 = vmatpush1.bf16.msra.mxu0 0
    %1266 = vmatprep.subr.bf16.mxu0 0
    %1267 = vmatpush1.bf16.msra.mxu0 0
    %1268 = vmatprep.subr.bf16.mxu0 0
    %1269 = vmatpush1.bf16.msra.mxu0 0
    %1270 = vmatprep.subr.bf16.mxu0 0
    %1271 = vmatpush1.bf16.msra.mxu0 0
    %1272 = vmatprep.subr.bf16.mxu0 0
    %1273 = vmatpush1.bf16.msra.mxu0 0
    %1274 = vmatprep.subr.bf16.mxu0 0
    %1275 = vmatpush1.bf16.msra.mxu0 0
    %1276 = vmatprep.subr.bf16.mxu0 0
    %1277 = vmatpush1.bf16.msra.mxu0 0
    %1278 = vmatprep.subr.bf16.mxu0 0
    %1279 = vmatpush1.bf16.msra.mxu0 0
    %1280 = vmatprep.subr.bf16.mxu0 0
    %1281 = vmatpush1.bf16.msra.mxu0 0
    %1282 = vmatprep.subr.bf16.mxu0 0
    %1283 = vmatpush1.bf16.msra.mxu0 0
    %1284 = vmatprep.subr.bf16.mxu0 0
    %1285 = vmatpush1.bf16.msra.mxu0 0
    %1286 = vmatprep.subr.bf16.mxu0 0
    %1287 = vmatpush1.bf16.msra.mxu0 0
    %1288 = vmatprep.mubr.bf16.mxu0 0
    %1289 = vmatmul.mubr.bf16.gmra.mrb[0].mxu0 %v885
    %v1290 = vpop.f32.mrb[0].mxu0
    %v1291 = vadd.f32 %v1242, %v1290
    %v1292 = vpop.f32.mrb[0].mxu0
    %v1293 = vpop.f32.mrb[0].mxu0
    %v1294 = vpop.f32.mrb[0].mxu0
    %1295 = vdwg.mxu0
    %s1296 = scalar_lea.vmem [#allocation13], 16
    %v1297 = vld [vmem:[%s1296] sm:$0xf]
    %v1298 = vld [vmem:[%s1296 + $0x4] sm:$0xf]
    %v1299 = vld [vmem:[%s1296 + $0x8] sm:$0xf]
    %v1300 = vld [vmem:[%s1296 + $0xc] sm:$0xf]
    %s1301 = scalar_lea.vmem [#allocation14], 1
    %v1302 = vld [vmem:[%s1301] sm:$0x1]
    %v1304 = vlaneseq
    %v1305 = vshrl.u32 %v1304, 7
    %v1306 = vsub.s32 0, %v1305
    %v1307 = vrot.slane %v1302, %v1306
    %v1313 = vunpack.c.l.b16 %v1297
    %v1314 = vunpack.c.l.b16 %v1298
    %v1315 = vunpack.c.l.b16 %v1299
    %v1316 = vunpack.c.l.b16 %v1300
    %v1317 = vpack.c.b16 %v1314, %v1313
    %v1318 = vpack.c.b16 %v1316, %v1315
    %1321 = vmatprep.subr.bf16.mxu0 0
    %1322 = vmatpush1.bf16.msra.mxu0 %v1317
    %1323 = vmatprep.subr.bf16.mxu0 0
    %1324 = vmatpush1.bf16.msra.mxu0 %v1318
    %1325 = vmatprep.subr.bf16.mxu0 0
    %1326 = vmatpush1.bf16.msra.mxu0 0
    %1327 = vmatprep.subr.bf16.mxu0 0
    %1328 = vmatpush1.bf16.msra.mxu0 0
    %1329 = vmatprep.subr.bf16.mxu0 0
    %1330 = vmatpush1.bf16.msra.mxu0 0
    %1331 = vmatprep.subr.bf16.mxu0 0
    %1332 = vmatpush1.bf16.msra.mxu0 0
    %1333 = vmatprep.subr.bf16.mxu0 0
    %1334 = vmatpush1.bf16.msra.mxu0 0
    %1335 = vmatprep.subr.bf16.mxu0 0
    %1336 = vmatpush1.bf16.msra.mxu0 0
    %1337 = vmatprep.subr.bf16.mxu0 0
    %1338 = vmatpush1.bf16.msra.mxu0 0
    %1339 = vmatprep.subr.bf16.mxu0 0
    %1340 = vmatpush1.bf16.msra.mxu0 0
    %1341 = vmatprep.subr.bf16.mxu0 0
    %1342 = vmatpush1.bf16.msra.mxu0 0
    %1343 = vmatprep.subr.bf16.mxu0 0
    %1344 = vmatpush1.bf16.msra.mxu0 0
    %1345 = vmatprep.subr.bf16.mxu0 0
    %1346 = vmatpush1.bf16.msra.mxu0 0
    %1347 = vmatprep.subr.bf16.mxu0 0
    %1348 = vmatpush1.bf16.msra.mxu0 0
    %1349 = vmatprep.subr.bf16.mxu0 0
    %1350 = vmatpush1.bf16.msra.mxu0 0
    %1351 = vmatprep.subr.bf16.mxu0 0
    %1352 = vmatpush1.bf16.msra.mxu0 0
    %1353 = vmatprep.mubr.bf16.mxu0 0
    %1354 = vmatmul.mubr.bf16.gmra.mrb[0].mxu0 %v951
    %v1355 = vpop.f32.mrb[0].mxu0
    %v1356 = vadd.f32 %v1307, %v1355
    %v1357 = vpop.f32.mrb[0].mxu0
    %v1358 = vpop.f32.mrb[0].mxu0
    %v1359 = vpop.f32.mrb[0].mxu0
    %1360 = vdwg.mxu0
    %s1361 = scalar_lea.vmem [#allocation16], 16
    %v1362 = vld [vmem:[%s1361] sm:$0xf]
    %v1363 = vld [vmem:[%s1361 + $0x4] sm:$0xf]
    %v1364 = vld [vmem:[%s1361 + $0x8] sm:$0xf]
    %v1365 = vld [vmem:[%s1361 + $0xc] sm:$0xf]
    %s1366 = scalar_lea.vmem [#allocation17], 1
    %v1367 = vld [vmem:[%s1366] sm:$0x1]
    %v1369 = vlaneseq
    %v1370 = vshrl.u32 %v1369, 7
    %v1371 = vsub.s32 0, %v1370
    %v1372 = vrot.slane %v1367, %v1371
    %v1378 = vunpack.c.l.b16 %v1362
    %v1379 = vunpack.c.l.b16 %v1363
    %v1380 = vunpack.c.l.b16 %v1364
    %v1381 = vunpack.c.l.b16 %v1365
    %v1382 = vpack.c.b16 %v1379, %v1378
    %v1383 = vpack.c.b16 %v1381, %v1380
    %1386 = vmatprep.subr.bf16.mxu0 0
    %1387 = vmatpush1.bf16.msra.mxu0 %v1382
    %1388 = vmatprep.subr.bf16.mxu0 0
    %1389 = vmatpush1.bf16.msra.mxu0 %v1383
    %1390 = vmatprep.subr.bf16.mxu0 0
    %1391 = vmatpush1.bf16.msra.mxu0 0
    %1392 = vmatprep.subr.bf16.mxu0 0
    %1393 = vmatpush1.bf16.msra.mxu0 0
    %1394 = vmatprep.subr.bf16.mxu0 0
    %1395 = vmatpush1.bf16.msra.mxu0 0
    %1396 = vmatprep.subr.bf16.mxu0 0
    %1397 = vmatpush1.bf16.msra.mxu0 0
    %1398 = vmatprep.subr.bf16.mxu0 0
    %1399 = vmatpush1.bf16.msra.mxu0 0
    %1400 = vmatprep.subr.bf16.mxu0 0
    %1401 = vmatpush1.bf16.msra.mxu0 0
    %1402 = vmatprep.subr.bf16.mxu0 0
    %1403 = vmatpush1.bf16.msra.mxu0 0
    %1404 = vmatprep.subr.bf16.mxu0 0
    %1405 = vmatpush1.bf16.msra.mxu0 0
    %1406 = vmatprep.subr.bf16.mxu0 0
    %1407 = vmatpush1.bf16.msra.mxu0 0
    %1408 = vmatprep.subr.bf16.mxu0 0
    %1409 = vmatpush1.bf16.msra.mxu0 0
    %1410 = vmatprep.subr.bf16.mxu0 0
    %1411 = vmatpush1.bf16.msra.mxu0 0
    %1412 = vmatprep.subr.bf16.mxu0 0
    %1413 = vmatpush1.bf16.msra.mxu0 0
    %1414 = vmatprep.subr.bf16.mxu0 0
    %1415 = vmatpush1.bf16.msra.mxu0 0
    %1416 = vmatprep.subr.bf16.mxu0 0
    %1417 = vmatpush1.bf16.msra.mxu0 0
    %1418 = vmatprep.mubr.bf16.mxu0 0
    %1419 = vmatmul.mubr.bf16.gmra.mrb[0].mxu0 %v951
    %v1420 = vpop.f32.mrb[0].mxu0
    %v1421 = vadd.f32 %v1372, %v1420
    %v1422 = vpop.f32.mrb[0].mxu0
    %v1423 = vpop.f32.mrb[0].mxu0
    %v1424 = vpop.f32.mrb[0].mxu0
    %1425 = vdwg.mxu0
    %1426 = vset.pattern.permute.xlu0 1
    %1427 = vperm.xlu0 %1426, %v823
    %v1428 = vpop.permute.xlu0 %1427
    %1430 = vset.pattern.permute.xlu0 1
    %1431 = vperm.xlu0 %1430, %v828
    %v1432 = vpop.permute.xlu0 %1431
    %1434 = vset.pattern.permute.xlu0 1
    %1435 = vperm.xlu0 %1434, %v833
    %v1436 = vpop.permute.xlu0 %1435
    %1438 = vset.pattern.permute.xlu0 1
    %1439 = vperm.xlu0 %1438, %v838
    %v1440 = vpop.permute.xlu0 %1439
    %1442 = vset.pattern.permute.xlu0 1
    %1443 = vperm.xlu0 %1442, %v843
    %v1444 = vpop.permute.xlu0 %1443
    %1446 = vset.pattern.permute.xlu0 1
    %1447 = vperm.xlu0 %1446, %v848
    %v1448 = vpop.permute.xlu0 %1447
    %1450 = vset.pattern.permute.xlu0 1
    %1451 = vperm.xlu0 %1450, %v853
    %v1452 = vpop.permute.xlu0 %1451
    %1454 = vset.pattern.permute.xlu0 1
    %1455 = vperm.xlu0 %1454, %v858
    %v1456 = vpop.permute.xlu0 %1455
    %v1458 = vmul.f32 %v1428, %v329
    %v1459 = vmul.f32 %v1432, %v330
    %v1460 = vmul.f32 %v1436, %v331
    %v1461 = vmul.f32 %v1440, %v332
    %v1462 = vmul.f32 %v1444, %v333
    %v1463 = vmul.f32 %v1448, %v334
    %v1464 = vmul.f32 %v1452, %v335
    %v1465 = vmul.f32 %v1456, %v336
    %v1466 = vsel %vm368, %v1458, 0.0
    %v1467 = vsel %vm368, %v1459, 0.0
    %v1468 = vadd.f32 %v1466, %v1467
    %v1469 = vsel %vm368, %v1460, 0.0
    %v1470 = vadd.f32 %v1468, %v1469
    %v1471 = vsel %vm368, %v1461, 0.0
    %v1472 = vadd.f32 %v1470, %v1471
    %v1473 = vsel %vm368, %v1462, 0.0
    %v1474 = vadd.f32 %v1472, %v1473
    %v1475 = vsel %vm368, %v1463, 0.0
    %v1476 = vadd.f32 %v1474, %v1475
    %v1477 = vsel %vm368, %v1464, 0.0
    %v1478 = vadd.f32 %v1476, %v1477
    %v1479 = vsel %vm368, %v1465, 0.0
    %v1480 = vadd.f32 %v1478, %v1479
    %v1481 = vpack.c.bf16 %v1291, %v1291
    %v1482 = vpack.c.bf16 %v1356, %v1356
    %v1484 = vsel %vm368, %v1481, 0
    %v1487 = vsel %vm368, %v1482, 0
    %1489 = vmatprep.subr.bf16.mxu0 0
    %1490 = vmatpush1.bf16.xpose.msra.mxu0 %v1487
    %1491 = vmatprep.subr.bf16.mxu0 0
    %1492 = vmatpush1.bf16.xpose.msra.mxu0 0
    %1493 = vmatprep.subr.bf16.mxu0 0
    %1494 = vmatpush1.bf16.xpose.msra.mxu0 0
    %1495 = vmatprep.subr.bf16.mxu0 0
    %1496 = vmatpush1.bf16.xpose.msra.mxu0 0
    %1497 = vmatprep.subr.bf16.mxu0 0
    %1498 = vmatpush1.bf16.xpose.msra.mxu0 0
    %1499 = vmatprep.subr.bf16.mxu0 0
    %1500 = vmatpush1.bf16.xpose.msra.mxu0 0
    %1501 = vmatprep.subr.bf16.mxu0 0
    %1502 = vmatpush1.bf16.xpose.msra.mxu0 0
    %1503 = vmatprep.subr.bf16.mxu0 0
    %1504 = vmatpush1.bf16.xpose.msra.mxu0 0
    %1505 = vmatprep.subr.bf16.mxu0 0
    %1506 = vmatpush1.bf16.xpose.msra.mxu0 0
    %1507 = vmatprep.subr.bf16.mxu0 0
    %1508 = vmatpush1.bf16.xpose.msra.mxu0 0
    %1509 = vmatprep.subr.bf16.mxu0 0
    %1510 = vmatpush1.bf16.xpose.msra.mxu0 0
    %1511 = vmatprep.subr.bf16.mxu0 0
    %1512 = vmatpush1.bf16.xpose.msra.mxu0 0
    %1513 = vmatprep.subr.bf16.mxu0 0
    %1514 = vmatpush1.bf16.xpose.msra.mxu0 0
    %1515 = vmatprep.subr.bf16.mxu0 0
    %1516 = vmatpush1.bf16.xpose.msra.mxu0 0
    %1517 = vmatprep.subr.bf16.mxu0 0
    %1518 = vmatpush1.bf16.xpose.msra.mxu0 0
    %1519 = vmatprep.subr.bf16.mxu0 0
    %1520 = vmatpush1.bf16.xpose.msra.mxu0 0
    %1521 = vmatprep.mubr.bf16.mxu0 0
    %1522 = vmatmul.mubr.bf16.gmra.mrb[0].mxu0 %v1484
    %v1523 = vpop.f32.mrb[0].mxu0
    %v1524 = vadd.f32 %v1480, %v1523
    %v1525 = vpop.f32.mrb[0].mxu0
    %v1526 = vpop.f32.mrb[0].mxu0
    %v1527 = vpop.f32.mrb[0].mxu0
    %1528 = vdwg.mxu0
    %v1529 = vmul.f32 %v1524, %v357
    %v1530 = vadd.f32 %v1529, %v359
    %v1531 = vsel %vm368, %v1530, -inf
    %1532 = vmax.xlane.f32.xlu0 %v1531
    %v1533 = vpop.xlane.xlu0 %1532
    %v1534 = vsub.f32 %v1530, %v1533
    %v1535 = vmul.f32 %v1534, 1.442695
    %v1536 = vpow.pop %v1535
    %v1537 = vsel %vm368, %v1536, 0.0
    %1538 = vadd.xlane.f32.xlu0 %v1537
    %v1539 = vpop.xlane.xlu0 %1538
    %v1540 = vrcp.pop %v1539
    %v1541 = vmul.f32 %v1536, %v1540
    %v1542 = vpack.c.bf16 %v1541, %v1541
    %v1543 = vpack.c.bf16 %v1421, %v1421
    %v1545 = vsel %vm368, %v1542, 0
    %v1548 = vsel %vm1185, %v1543, 0
    %1550 = vmatprep.subr.bf16.mxu0 0
    %1551 = vmatpush1.bf16.msra.mxu0 %v1548
    %1552 = vmatprep.subr.bf16.mxu0 0
    %1553 = vmatpush1.bf16.msra.mxu0 0
    %1554 = vmatprep.subr.bf16.mxu0 0
    %1555 = vmatpush1.bf16.msra.mxu0 0
    %1556 = vmatprep.subr.bf16.mxu0 0
    %1557 = vmatpush1.bf16.msra.mxu0 0
    %1558 = vmatprep.subr.bf16.mxu0 0
    %1559 = vmatpush1.bf16.msra.mxu0 0
    %1560 = vmatprep.subr.bf16.mxu0 0
    %1561 = vmatpush1.bf16.msra.mxu0 0
    %1562 = vmatprep.subr.bf16.mxu0 0
    %1563 = vmatpush1.bf16.msra.mxu0 0
    %1564 = vmatprep.subr.bf16.mxu0 0
    %1565 = vmatpush1.bf16.msra.mxu0 0
    %1566 = vmatprep.subr.bf16.mxu0 0
    %1567 = vmatpush1.bf16.msra.mxu0 0
    %1568 = vmatprep.subr.bf16.mxu0 0
    %1569 = vmatpush1.bf16.msra.mxu0 0
    %1570 = vmatprep.subr.bf16.mxu0 0
    %1571 = vmatpush1.bf16.msra.mxu0 0
    %1572 = vmatprep.subr.bf16.mxu0 0
    %1573 = vmatpush1.bf16.msra.mxu0 0
    %1574 = vmatprep.subr.bf16.mxu0 0
    %1575 = vmatpush1.bf16.msra.mxu0 0
    %1576 = vmatprep.subr.bf16.mxu0 0
    %1577 = vmatpush1.bf16.msra.mxu0 0
    %1578 = vmatprep.subr.bf16.mxu0 0
    %1579 = vmatpush1.bf16.msra.mxu0 0
    %1580 = vmatprep.subr.bf16.mxu0 0
    %1581 = vmatpush1.bf16.msra.mxu0 0
    %1582 = vmatprep.mubr.bf16.mxu0 0
    %1583 = vmatmul.mubr.bf16.gmra.mrb[0].mxu0 %v1545
    %v1584 = vpop.f32.mrb[0].mxu0
    %v1585 = vadd.f32 0.0, %v1584
    %v1586 = vpop.f32.mrb[0].mxu0
    %v1587 = vpop.f32.mrb[0].mxu0
    %v1588 = vpop.f32.mrb[0].mxu0
    %1589 = vdwg.mxu0
    %v1590 = vpack.c.bf16 %v1585, %v1585
    %s1591 = scalar_lea.vmem [#allocation19], 4
    %v1592 = vld [vmem:[%s1591] sm:$0xf]
    %v1594 = vsel %vm368, %v1590, 0
    %v1597 = vsel %vm1185, %v1592, 0
    %1599 = vmatprep.subr.bf16.mxu0 0
    %1600 = vmatpush1.bf16.msra.mxu0 %v1597
    %1601 = vmatprep.subr.bf16.mxu0 0
    %1602 = vmatpush1.bf16.msra.mxu0 0
    %1603 = vmatprep.subr.bf16.mxu0 0
    %1604 = vmatpush1.bf16.msra.mxu0 0
    %1605 = vmatprep.subr.bf16.mxu0 0
    %1606 = vmatpush1.bf16.msra.mxu0 0
    %1607 = vmatprep.subr.bf16.mxu0 0
    %1608 = vmatpush1.bf16.msra.mxu0 0
    %1609 = vmatprep.subr.bf16.mxu0 0
    %1610 = vmatpush1.bf16.msra.mxu0 0
    %1611 = vmatprep.subr.bf16.mxu0 0
    %1612 = vmatpush1.bf16.msra.mxu0 0
    %1613 = vmatprep.subr.bf16.mxu0 0
    %1614 = vmatpush1.bf16.msra.mxu0 0
    %1615 = vmatprep.subr.bf16.mxu0 0
    %1616 = vmatpush1.bf16.msra.mxu0 0
    %1617 = vmatprep.subr.bf16.mxu0 0
    %1618 = vmatpush1.bf16.msra.mxu0 0
    %1619 = vmatprep.subr.bf16.mxu0 0
    %1620 = vmatpush1.bf16.msra.mxu0 0
    %1621 = vmatprep.subr.bf16.mxu0 0
    %1622 = vmatpush1.bf16.msra.mxu0 0
    %1623 = vmatprep.subr.bf16.mxu0 0
    %1624 = vmatpush1.bf16.msra.mxu0 0
    %1625 = vmatprep.subr.bf16.mxu0 0
    %1626 = vmatpush1.bf16.msra.mxu0 0
    %1627 = vmatprep.subr.bf16.mxu0 0
    %1628 = vmatpush1.bf16.msra.mxu0 0
    %1629 = vmatprep.subr.bf16.mxu0 0
    %1630 = vmatpush1.bf16.msra.mxu0 0
    %1631 = vmatprep.mubr.bf16.mxu0 0
    %1632 = vmatmul.mubr.bf16.gmra.mrb[0].mxu0 %v1594
    %v1633 = vpop.f32.mrb[0].mxu0
    %v1634 = vadd.f32 0.0, %v1633
    %v1635 = vpop.f32.mrb[0].mxu0
    %v1636 = vpop.f32.mrb[0].mxu0
    %v1637 = vpop.f32.mrb[0].mxu0
    %1638 = vdwg.mxu0
    %v1640 = vsel %vm368, %v1229, 0
    %v1643 = vsel %vm1185, %v1230, 0
    %1645 = vmatprep.subr.bf16.mxu0 0
    %1646 = vmatpush1.bf16.msra.mxu0 %v1643
    %1647 = vmatprep.subr.bf16.mxu0 0
    %1648 = vmatpush1.bf16.msra.mxu0 0
    %1649 = vmatprep.subr.bf16.mxu0 0
    %1650 = vmatpush1.bf16.msra.mxu0 0
    %1651 = vmatprep.subr.bf16.mxu0 0
    %1652 = vmatpush1.bf16.msra.mxu0 0
    %1653 = vmatprep.subr.bf16.mxu0 0
    %1654 = vmatpush1.bf16.msra.mxu0 0
    %1655 = vmatprep.subr.bf16.mxu0 0
    %1656 = vmatpush1.bf16.msra.mxu0 0
    %1657 = vmatprep.subr.bf16.mxu0 0
    %1658 = vmatpush1.bf16.msra.mxu0 0
    %1659 = vmatprep.subr.bf16.mxu0 0
    %1660 = vmatpush1.bf16.msra.mxu0 0
    %1661 = vmatprep.subr.bf16.mxu0 0
    %1662 = vmatpush1.bf16.msra.mxu0 0
    %1663 = vmatprep.subr.bf16.mxu0 0
    %1664 = vmatpush1.bf16.msra.mxu0 0
    %1665 = vmatprep.subr.bf16.mxu0 0
    %1666 = vmatpush1.bf16.msra.mxu0 0
    %1667 = vmatprep.subr.bf16.mxu0 0
    %1668 = vmatpush1.bf16.msra.mxu0 0
    %1669 = vmatprep.subr.bf16.mxu0 0
    %1670 = vmatpush1.bf16.msra.mxu0 0
    %1671 = vmatprep.subr.bf16.mxu0 0
    %1672 = vmatpush1.bf16.msra.mxu0 0
    %1673 = vmatprep.subr.bf16.mxu0 0
    %1674 = vmatpush1.bf16.msra.mxu0 0
    %1675 = vmatprep.subr.bf16.mxu0 0
    %1676 = vmatpush1.bf16.msra.mxu0 0
    %1677 = vmatprep.mubr.bf16.mxu0 0
    %1678 = vmatmul.mubr.bf16.gmra.mrb[0].mxu0 %v1640
    %v1679 = vpop.f32.mrb[0].mxu0
    %v1680 = vadd.f32 %v1634, %v1679
    %v1681 = vpop.f32.mrb[0].mxu0
    %v1682 = vpop.f32.mrb[0].mxu0
    %v1683 = vpop.f32.mrb[0].mxu0
    %1684 = vdwg.mxu0
    %s1685 = scalar_lea.vmem [#allocation10], 32
    %v1686 = vld [vmem:[%s1685] sm:$0xf]
    %v1687 = vld [vmem:[%s1685 + $0x4] sm:$0xf]
    %v1688 = vld [vmem:[%s1685 + $0x8] sm:$0xf]
    %v1689 = vld [vmem:[%s1685 + $0xc] sm:$0xf]
    %s1690 = scalar_lea.vmem [#allocation11], 2
    %v1691 = vld [vmem:[%s1690] sm:$0x1]
    %v1693 = vlaneseq
    %v1694 = vshrl.u32 %v1693, 7
    %v1695 = vsub.s32 0, %v1694
    %v1696 = vrot.slane %v1691, %v1695
    %v1702 = vunpack.c.l.b16 %v1686
    %v1703 = vunpack.c.l.b16 %v1687
    %v1704 = vunpack.c.l.b16 %v1688
    %v1705 = vunpack.c.l.b16 %v1689
    %v1706 = vpack.c.b16 %v1703, %v1702
    %v1707 = vpack.c.b16 %v1705, %v1704
    %1710 = vmatprep.subr.bf16.mxu0 0
    %1711 = vmatpush1.bf16.msra.mxu0 %v1706
    %1712 = vmatprep.subr.bf16.mxu0 0
    %1713 = vmatpush1.bf16.msra.mxu0 %v1707
    %1714 = vmatprep.subr.bf16.mxu0 0
    %1715 = vmatpush1.bf16.msra.mxu0 0
    %1716 = vmatprep.subr.bf16.mxu0 0
    %1717 = vmatpush1.bf16.msra.mxu0 0
    %1718 = vmatprep.subr.bf16.mxu0 0
    %1719 = vmatpush1.bf16.msra.mxu0 0
    %1720 = vmatprep.subr.bf16.mxu0 0
    %1721 = vmatpush1.bf16.msra.mxu0 0
    %1722 = vmatprep.subr.bf16.mxu0 0
    %1723 = vmatpush1.bf16.msra.mxu0 0
    %1724 = vmatprep.subr.bf16.mxu0 0
    %1725 = vmatpush1.bf16.msra.mxu0 0
    %1726 = vmatprep.subr.bf16.mxu0 0
    %1727 = vmatpush1.bf16.msra.mxu0 0
    %1728 = vmatprep.subr.bf16.mxu0 0
    %1729 = vmatpush1.bf16.msra.mxu0 0
    %1730 = vmatprep.subr.bf16.mxu0 0
    %1731 = vmatpush1.bf16.msra.mxu0 0
    %1732 = vmatprep.subr.bf16.mxu0 0
    %1733 = vmatpush1.bf16.msra.mxu0 0
    %1734 = vmatprep.subr.bf16.mxu0 0
    %1735 = vmatpush1.bf16.msra.mxu0 0
    %1736 = vmatprep.subr.bf16.mxu0 0
    %1737 = vmatpush1.bf16.msra.mxu0 0
    %1738 = vmatprep.subr.bf16.mxu0 0
    %1739 = vmatpush1.bf16.msra.mxu0 0
    %1740 = vmatprep.subr.bf16.mxu0 0
    %1741 = vmatpush1.bf16.msra.mxu0 0
    %1742 = vmatprep.mubr.bf16.mxu0 0
    %1743 = vmatmul.mubr.bf16.gmra.mrb[0].mxu0 %v885
    %v1744 = vpop.f32.mrb[0].mxu0
    %v1745 = vadd.f32 %v1696, %v1744
    %v1746 = vpop.f32.mrb[0].mxu0
    %v1747 = vpop.f32.mrb[0].mxu0
    %v1748 = vpop.f32.mrb[0].mxu0
    %1749 = vdwg.mxu0
    %s1750 = scalar_lea.vmem [#allocation13], 32
    %v1751 = vld [vmem:[%s1750] sm:$0xf]
    %v1752 = vld [vmem:[%s1750 + $0x4] sm:$0xf]
    %v1753 = vld [vmem:[%s1750 + $0x8] sm:$0xf]
    %v1754 = vld [vmem:[%s1750 + $0xc] sm:$0xf]
    %s1755 = scalar_lea.vmem [#allocation14], 2
    %v1756 = vld [vmem:[%s1755] sm:$0x1]
    %v1758 = vlaneseq
    %v1759 = vshrl.u32 %v1758, 7
    %v1760 = vsub.s32 0, %v1759
    %v1761 = vrot.slane %v1756, %v1760
    %v1767 = vunpack.c.l.b16 %v1751
    %v1768 = vunpack.c.l.b16 %v1752
    %v1769 = vunpack.c.l.b16 %v1753
    %v1770 = vunpack.c.l.b16 %v1754
    %v1771 = vpack.c.b16 %v1768, %v1767
    %v1772 = vpack.c.b16 %v1770, %v1769
    %1775 = vmatprep.subr.bf16.mxu0 0
    %1776 = vmatpush1.bf16.msra.mxu0 %v1771
    %1777 = vmatprep.subr.bf16.mxu0 0
    %1778 = vmatpush1.bf16.msra.mxu0 %v1772
    %1779 = vmatprep.subr.bf16.mxu0 0
    %1780 = vmatpush1.bf16.msra.mxu0 0
    %1781 = vmatprep.subr.bf16.mxu0 0
    %1782 = vmatpush1.bf16.msra.mxu0 0
    %1783 = vmatprep.subr.bf16.mxu0 0
    %1784 = vmatpush1.bf16.msra.mxu0 0
    %1785 = vmatprep.subr.bf16.mxu0 0
    %1786 = vmatpush1.bf16.msra.mxu0 0
    %1787 = vmatprep.subr.bf16.mxu0 0
    %1788 = vmatpush1.bf16.msra.mxu0 0
    %1789 = vmatprep.subr.bf16.mxu0 0
    %1790 = vmatpush1.bf16.msra.mxu0 0
    %1791 = vmatprep.subr.bf16.mxu0 0
    %1792 = vmatpush1.bf16.msra.mxu0 0
    %1793 = vmatprep.subr.bf16.mxu0 0
    %1794 = vmatpush1.bf16.msra.mxu0 0
    %1795 = vmatprep.subr.bf16.mxu0 0
    %1796 = vmatpush1.bf16.msra.mxu0 0
    %1797 = vmatprep.subr.bf16.mxu0 0
    %1798 = vmatpush1.bf16.msra.mxu0 0
    %1799 = vmatprep.subr.bf16.mxu0 0
    %1800 = vmatpush1.bf16.msra.mxu0 0
    %1801 = vmatprep.subr.bf16.mxu0 0
    %1802 = vmatpush1.bf16.msra.mxu0 0
    %1803 = vmatprep.subr.bf16.mxu0 0
    %1804 = vmatpush1.bf16.msra.mxu0 0
    %1805 = vmatprep.subr.bf16.mxu0 0
    %1806 = vmatpush1.bf16.msra.mxu0 0
    %1807 = vmatprep.mubr.bf16.mxu0 0
    %1808 = vmatmul.mubr.bf16.gmra.mrb[0].mxu0 %v951
    %v1809 = vpop.f32.mrb[0].mxu0
    %v1810 = vadd.f32 %v1761, %v1809
    %v1811 = vpop.f32.mrb[0].mxu0
    %v1812 = vpop.f32.mrb[0].mxu0
    %v1813 = vpop.f32.mrb[0].mxu0
    %1814 = vdwg.mxu0
    %s1815 = scalar_lea.vmem [#allocation16], 32
    %v1816 = vld [vmem:[%s1815] sm:$0xf]
    %v1817 = vld [vmem:[%s1815 + $0x4] sm:$0xf]
    %v1818 = vld [vmem:[%s1815 + $0x8] sm:$0xf]
    %v1819 = vld [vmem:[%s1815 + $0xc] sm:$0xf]
    %s1820 = scalar_lea.vmem [#allocation17], 2
    %v1821 = vld [vmem:[%s1820] sm:$0x1]
    %v1823 = vlaneseq
    %v1824 = vshrl.u32 %v1823, 7
    %v1825 = vsub.s32 0, %v1824
    %v1826 = vrot.slane %v1821, %v1825
    %v1832 = vunpack.c.l.b16 %v1816
    %v1833 = vunpack.c.l.b16 %v1817
    %v1834 = vunpack.c.l.b16 %v1818
    %v1835 = vunpack.c.l.b16 %v1819
    %v1836 = vpack.c.b16 %v1833, %v1832
    %v1837 = vpack.c.b16 %v1835, %v1834
    %1840 = vmatprep.subr.bf16.mxu0 0
    %1841 = vmatpush1.bf16.msra.mxu0 %v1836
    %1842 = vmatprep.subr.bf16.mxu0 0
    %1843 = vmatpush1.bf16.msra.mxu0 %v1837
    %1844 = vmatprep.subr.bf16.mxu0 0
    %1845 = vmatpush1.bf16.msra.mxu0 0
    %1846 = vmatprep.subr.bf16.mxu0 0
    %1847 = vmatpush1.bf16.msra.mxu0 0
    %1848 = vmatprep.subr.bf16.mxu0 0
    %1849 = vmatpush1.bf16.msra.mxu0 0
    %1850 = vmatprep.subr.bf16.mxu0 0
    %1851 = vmatpush1.bf16.msra.mxu0 0
    %1852 = vmatprep.subr.bf16.mxu0 0
    %1853 = vmatpush1.bf16.msra.mxu0 0
    %1854 = vmatprep.subr.bf16.mxu0 0
    %1855 = vmatpush1.bf16.msra.mxu0 0
    %1856 = vmatprep.subr.bf16.mxu0 0
    %1857 = vmatpush1.bf16.msra.mxu0 0
    %1858 = vmatprep.subr.bf16.mxu0 0
    %1859 = vmatpush1.bf16.msra.mxu0 0
    %1860 = vmatprep.subr.bf16.mxu0 0
    %1861 = vmatpush1.bf16.msra.mxu0 0
    %1862 = vmatprep.subr.bf16.mxu0 0
    %1863 = vmatpush1.bf16.msra.mxu0 0
    %1864 = vmatprep.subr.bf16.mxu0 0
    %1865 = vmatpush1.bf16.msra.mxu0 0
    %1866 = vmatprep.subr.bf16.mxu0 0
    %1867 = vmatpush1.bf16.msra.mxu0 0
    %1868 = vmatprep.subr.bf16.mxu0 0
    %1869 = vmatpush1.bf16.msra.mxu0 0
    %1870 = vmatprep.subr.bf16.mxu0 0
    %1871 = vmatpush1.bf16.msra.mxu0 0
    %1872 = vmatprep.mubr.bf16.mxu0 0
    %1873 = vmatmul.mubr.bf16.gmra.mrb[0].mxu0 %v951
    %v1874 = vpop.f32.mrb[0].mxu0
    %v1875 = vadd.f32 %v1826, %v1874
    %v1876 = vpop.f32.mrb[0].mxu0
    %v1877 = vpop.f32.mrb[0].mxu0
    %v1878 = vpop.f32.mrb[0].mxu0
    %1879 = vdwg.mxu0
    %1880 = vset.pattern.permute.xlu0 2
    %1881 = vperm.xlu0 %1880, %v823
    %v1882 = vpop.permute.xlu0 %1881
    %1884 = vset.pattern.permute.xlu0 2
    %1885 = vperm.xlu0 %1884, %v828
    %v1886 = vpop.permute.xlu0 %1885
    %1888 = vset.pattern.permute.xlu0 2
    %1889 = vperm.xlu0 %1888, %v833
    %v1890 = vpop.permute.xlu0 %1889
    %1892 = vset.pattern.permute.xlu0 2
    %1893 = vperm.xlu0 %1892, %v838
    %v1894 = vpop.permute.xlu0 %1893
    %1896 = vset.pattern.permute.xlu0 2
    %1897 = vperm.xlu0 %1896, %v843
    %v1898 = vpop.permute.xlu0 %1897
    %1900 = vset.pattern.permute.xlu0 2
    %1901 = vperm.xlu0 %1900, %v848
    %v1902 = vpop.permute.xlu0 %1901
    %1904 = vset.pattern.permute.xlu0 2
    %1905 = vperm.xlu0 %1904, %v853
    %v1906 = vpop.permute.xlu0 %1905
    %1908 = vset.pattern.permute.xlu0 2
    %1909 = vperm.xlu0 %1908, %v858
    %v1910 = vpop.permute.xlu0 %1909
    %v1912 = vmul.f32 %v1882, %v329
    %v1913 = vmul.f32 %v1886, %v330
    %v1914 = vmul.f32 %v1890, %v331
    %v1915 = vmul.f32 %v1894, %v332
    %v1916 = vmul.f32 %v1898, %v333
    %v1917 = vmul.f32 %v1902, %v334
    %v1918 = vmul.f32 %v1906, %v335
    %v1919 = vmul.f32 %v1910, %v336
    %v1920 = vsel %vm368, %v1912, 0.0
    %v1921 = vsel %vm368, %v1913, 0.0
    %v1922 = vadd.f32 %v1920, %v1921
    %v1923 = vsel %vm368, %v1914, 0.0
    %v1924 = vadd.f32 %v1922, %v1923
    %v1925 = vsel %vm368, %v1915, 0.0
    %v1926 = vadd.f32 %v1924, %v1925
    %v1927 = vsel %vm368, %v1916, 0.0
    %v1928 = vadd.f32 %v1926, %v1927
    %v1929 = vsel %vm368, %v1917, 0.0
    %v1930 = vadd.f32 %v1928, %v1929
    %v1931 = vsel %vm368, %v1918, 0.0
    %v1932 = vadd.f32 %v1930, %v1931
    %v1933 = vsel %vm368, %v1919, 0.0
    %v1934 = vadd.f32 %v1932, %v1933
    %v1935 = vpack.c.bf16 %v1745, %v1745
    %v1936 = vpack.c.bf16 %v1810, %v1810
    %v1938 = vsel %vm368, %v1935, 0
    %v1941 = vsel %vm368, %v1936, 0
    %1943 = vmatprep.subr.bf16.mxu0 0
    %1944 = vmatpush1.bf16.xpose.msra.mxu0 %v1941
    %1945 = vmatprep.subr.bf16.mxu0 0
    %1946 = vmatpush1.bf16.xpose.msra.mxu0 0
    %1947 = vmatprep.subr.bf16.mxu0 0
    %1948 = vmatpush1.bf16.xpose.msra.mxu0 0
    %1949 = vmatprep.subr.bf16.mxu0 0
    %1950 = vmatpush1.bf16.xpose.msra.mxu0 0
    %1951 = vmatprep.subr.bf16.mxu0 0
    %1952 = vmatpush1.bf16.xpose.msra.mxu0 0
    %1953 = vmatprep.subr.bf16.mxu0 0
    %1954 = vmatpush1.bf16.xpose.msra.mxu0 0
    %1955 = vmatprep.subr.bf16.mxu0 0
    %1956 = vmatpush1.bf16.xpose.msra.mxu0 0
    %1957 = vmatprep.subr.bf16.mxu0 0
    %1958 = vmatpush1.bf16.xpose.msra.mxu0 0
    %1959 = vmatprep.subr.bf16.mxu0 0
    %1960 = vmatpush1.bf16.xpose.msra.mxu0 0
    %1961 = vmatprep.subr.bf16.mxu0 0
    %1962 = vmatpush1.bf16.xpose.msra.mxu0 0
    %1963 = vmatprep.subr.bf16.mxu0 0
    %1964 = vmatpush1.bf16.xpose.msra.mxu0 0
    %1965 = vmatprep.subr.bf16.mxu0 0
    %1966 = vmatpush1.bf16.xpose.msra.mxu0 0
    %1967 = vmatprep.subr.bf16.mxu0 0
    %1968 = vmatpush1.bf16.xpose.msra.mxu0 0
    %1969 = vmatprep.subr.bf16.mxu0 0
    %1970 = vmatpush1.bf16.xpose.msra.mxu0 0
    %1971 = vmatprep.subr.bf16.mxu0 0
    %1972 = vmatpush1.bf16.xpose.msra.mxu0 0
    %1973 = vmatprep.subr.bf16.mxu0 0
    %1974 = vmatpush1.bf16.xpose.msra.mxu0 0
    %1975 = vmatprep.mubr.bf16.mxu0 0
    %1976 = vmatmul.mubr.bf16.gmra.mrb[0].mxu0 %v1938
    %v1977 = vpop.f32.mrb[0].mxu0
    %v1978 = vadd.f32 %v1934, %v1977
    %v1979 = vpop.f32.mrb[0].mxu0
    %v1980 = vpop.f32.mrb[0].mxu0
    %v1981 = vpop.f32.mrb[0].mxu0
    %1982 = vdwg.mxu0
    %v1983 = vmul.f32 %v1978, %v357
    %v1984 = vadd.f32 %v1983, %v359
    %v1985 = vsel %vm368, %v1984, -inf
    %1986 = vmax.xlane.f32.xlu0 %v1985
    %v1987 = vpop.xlane.xlu0 %1986
    %v1988 = vsub.f32 %v1984, %v1987
    %v1989 = vmul.f32 %v1988, 1.442695
    %v1990 = vpow.pop %v1989
    %v1991 = vsel %vm368, %v1990, 0.0
    %1992 = vadd.xlane.f32.xlu0 %v1991
    %v1993 = vpop.xlane.xlu0 %1992
    %v1994 = vrcp.pop %v1993
    %v1995 = vmul.f32 %v1990, %v1994
    %v1996 = vpack.c.bf16 %v1995, %v1995
    %v1997 = vpack.c.bf16 %v1875, %v1875
    %v1999 = vsel %vm368, %v1996, 0
    %v2002 = vsel %vm1185, %v1997, 0
    %2004 = vmatprep.subr.bf16.mxu0 0
    %2005 = vmatpush1.bf16.msra.mxu0 %v2002
    %2006 = vmatprep.subr.bf16.mxu0 0
    %2007 = vmatpush1.bf16.msra.mxu0 0
    %2008 = vmatprep.subr.bf16.mxu0 0
    %2009 = vmatpush1.bf16.msra.mxu0 0
    %2010 = vmatprep.subr.bf16.mxu0 0
    %2011 = vmatpush1.bf16.msra.mxu0 0
    %2012 = vmatprep.subr.bf16.mxu0 0
    %2013 = vmatpush1.bf16.msra.mxu0 0
    %2014 = vmatprep.subr.bf16.mxu0 0
    %2015 = vmatpush1.bf16.msra.mxu0 0
    %2016 = vmatprep.subr.bf16.mxu0 0
    %2017 = vmatpush1.bf16.msra.mxu0 0
    %2018 = vmatprep.subr.bf16.mxu0 0
    %2019 = vmatpush1.bf16.msra.mxu0 0
    %2020 = vmatprep.subr.bf16.mxu0 0
    %2021 = vmatpush1.bf16.msra.mxu0 0
    %2022 = vmatprep.subr.bf16.mxu0 0
    %2023 = vmatpush1.bf16.msra.mxu0 0
    %2024 = vmatprep.subr.bf16.mxu0 0
    %2025 = vmatpush1.bf16.msra.mxu0 0
    %2026 = vmatprep.subr.bf16.mxu0 0
    %2027 = vmatpush1.bf16.msra.mxu0 0
    %2028 = vmatprep.subr.bf16.mxu0 0
    %2029 = vmatpush1.bf16.msra.mxu0 0
    %2030 = vmatprep.subr.bf16.mxu0 0
    %2031 = vmatpush1.bf16.msra.mxu0 0
    %2032 = vmatprep.subr.bf16.mxu0 0
    %2033 = vmatpush1.bf16.msra.mxu0 0
    %2034 = vmatprep.subr.bf16.mxu0 0
    %2035 = vmatpush1.bf16.msra.mxu0 0
    %2036 = vmatprep.mubr.bf16.mxu0 0
    %2037 = vmatmul.mubr.bf16.gmra.mrb[0].mxu0 %v1999
    %v2038 = vpop.f32.mrb[0].mxu0
    %v2039 = vadd.f32 0.0, %v2038
    %v2040 = vpop.f32.mrb[0].mxu0
    %v2041 = vpop.f32.mrb[0].mxu0
    %v2042 = vpop.f32.mrb[0].mxu0
    %2043 = vdwg.mxu0
    %v2044 = vpack.c.bf16 %v2039, %v2039
    %s2045 = scalar_lea.vmem [#allocation19], 8
    %v2046 = vld [vmem:[%s2045] sm:$0xf]
    %v2048 = vsel %vm368, %v2044, 0
    %v2051 = vsel %vm1185, %v2046, 0
    %2053 = vmatprep.subr.bf16.mxu0 0
    %2054 = vmatpush1.bf16.msra.mxu0 %v2051
    %2055 = vmatprep.subr.bf16.mxu0 0
    %2056 = vmatpush1.bf16.msra.mxu0 0
    %2057 = vmatprep.subr.bf16.mxu0 0
    %2058 = vmatpush1.bf16.msra.mxu0 0
    %2059 = vmatprep.subr.bf16.mxu0 0
    %2060 = vmatpush1.bf16.msra.mxu0 0
    %2061 = vmatprep.subr.bf16.mxu0 0
    %2062 = vmatpush1.bf16.msra.mxu0 0
    %2063 = vmatprep.subr.bf16.mxu0 0
    %2064 = vmatpush1.bf16.msra.mxu0 0
    %2065 = vmatprep.subr.bf16.mxu0 0
    %2066 = vmatpush1.bf16.msra.mxu0 0
    %2067 = vmatprep.subr.bf16.mxu0 0
    %2068 = vmatpush1.bf16.msra.mxu0 0
    %2069 = vmatprep.subr.bf16.mxu0 0
    %2070 = vmatpush1.bf16.msra.mxu0 0
    %2071 = vmatprep.subr.bf16.mxu0 0
    %2072 = vmatpush1.bf16.msra.mxu0 0
    %2073 = vmatprep.subr.bf16.mxu0 0
    %2074 = vmatpush1.bf16.msra.mxu0 0
    %2075 = vmatprep.subr.bf16.mxu0 0
    %2076 = vmatpush1.bf16.msra.mxu0 0
    %2077 = vmatprep.subr.bf16.mxu0 0
    %2078 = vmatpush1.bf16.msra.mxu0 0
    %2079 = vmatprep.subr.bf16.mxu0 0
    %2080 = vmatpush1.bf16.msra.mxu0 0
    %2081 = vmatprep.subr.bf16.mxu0 0
    %2082 = vmatpush1.bf16.msra.mxu0 0
    %2083 = vmatprep.subr.bf16.mxu0 0
    %2084 = vmatpush1.bf16.msra.mxu0 0
    %2085 = vmatprep.mubr.bf16.mxu0 0
    %2086 = vmatmul.mubr.bf16.gmra.mrb[0].mxu0 %v2048
    %v2087 = vpop.f32.mrb[0].mxu0
    %v2088 = vadd.f32 0.0, %v2087
    %v2089 = vpop.f32.mrb[0].mxu0
    %v2090 = vpop.f32.mrb[0].mxu0
    %v2091 = vpop.f32.mrb[0].mxu0
    %2092 = vdwg.mxu0
    %v2093 = vadd.f32 %v1680, %v2088
    %s2094 = scalar_lea.vmem [#allocation10], 48
    %v2095 = vld [vmem:[%s2094] sm:$0xf]
    %v2096 = vld [vmem:[%s2094 + $0x4] sm:$0xf]
    %v2097 = vld [vmem:[%s2094 + $0x8] sm:$0xf]
    %v2098 = vld [vmem:[%s2094 + $0xc] sm:$0xf]
    %s2099 = scalar_lea.vmem [#allocation11], 3
    %v2100 = vld [vmem:[%s2099] sm:$0x1]
    %v2102 = vlaneseq
    %v2103 = vshrl.u32 %v2102, 7
    %v2104 = vsub.s32 0, %v2103
    %v2105 = vrot.slane %v2100, %v2104
    %v2111 = vunpack.c.l.b16 %v2095
    %v2112 = vunpack.c.l.b16 %v2096
    %v2113 = vunpack.c.l.b16 %v2097
    %v2114 = vunpack.c.l.b16 %v2098
    %v2115 = vpack.c.b16 %v2112, %v2111
    %v2116 = vpack.c.b16 %v2114, %v2113
    %2119 = vmatprep.subr.bf16.mxu0 0
    %2120 = vmatpush1.bf16.msra.mxu0 %v2115
    %2121 = vmatprep.subr.bf16.mxu0 0
    %2122 = vmatpush1.bf16.msra.mxu0 %v2116
    %2123 = vmatprep.subr.bf16.mxu0 0
    %2124 = vmatpush1.bf16.msra.mxu0 0
    %2125 = vmatprep.subr.bf16.mxu0 0
    %2126 = vmatpush1.bf16.msra.mxu0 0
    %2127 = vmatprep.subr.bf16.mxu0 0
    %2128 = vmatpush1.bf16.msra.mxu0 0
    %2129 = vmatprep.subr.bf16.mxu0 0
    %2130 = vmatpush1.bf16.msra.mxu0 0
    %2131 = vmatprep.subr.bf16.mxu0 0
    %2132 = vmatpush1.bf16.msra.mxu0 0
    %2133 = vmatprep.subr.bf16.mxu0 0
    %2134 = vmatpush1.bf16.msra.mxu0 0
    %2135 = vmatprep.subr.bf16.mxu0 0
    %2136 = vmatpush1.bf16.msra.mxu0 0
    %2137 = vmatprep.subr.bf16.mxu0 0
    %2138 = vmatpush1.bf16.msra.mxu0 0
    %2139 = vmatprep.subr.bf16.mxu0 0
    %2140 = vmatpush1.bf16.msra.mxu0 0
    %2141 = vmatprep.subr.bf16.mxu0 0
    %2142 = vmatpush1.bf16.msra.mxu0 0
    %2143 = vmatprep.subr.bf16.mxu0 0
    %2144 = vmatpush1.bf16.msra.mxu0 0
    %2145 = vmatprep.subr.bf16.mxu0 0
    %2146 = vmatpush1.bf16.msra.mxu0 0
    %2147 = vmatprep.subr.bf16.mxu0 0
    %2148 = vmatpush1.bf16.msra.mxu0 0
    %2149 = vmatprep.subr.bf16.mxu0 0
    %2150 = vmatpush1.bf16.msra.mxu0 0
    %2151 = vmatprep.mubr.bf16.mxu0 0
    %2152 = vmatmul.mubr.bf16.gmra.mrb[0].mxu0 %v885
    %v2153 = vpop.f32.mrb[0].mxu0
    %v2154 = vadd.f32 %v2105, %v2153
    %v2155 = vpop.f32.mrb[0].mxu0
    %v2156 = vpop.f32.mrb[0].mxu0
    %v2157 = vpop.f32.mrb[0].mxu0
    %2158 = vdwg.mxu0
    %s2159 = scalar_lea.vmem [#allocation13], 48
    %v2160 = vld [vmem:[%s2159] sm:$0xf]
    %v2161 = vld [vmem:[%s2159 + $0x4] sm:$0xf]
    %v2162 = vld [vmem:[%s2159 + $0x8] sm:$0xf]
    %v2163 = vld [vmem:[%s2159 + $0xc] sm:$0xf]
    %s2164 = scalar_lea.vmem [#allocation14], 3
    %v2165 = vld [vmem:[%s2164] sm:$0x1]
    %v2167 = vlaneseq
    %v2168 = vshrl.u32 %v2167, 7
    %v2169 = vsub.s32 0, %v2168
    %v2170 = vrot.slane %v2165, %v2169
    %v2176 = vunpack.c.l.b16 %v2160
    %v2177 = vunpack.c.l.b16 %v2161
    %v2178 = vunpack.c.l.b16 %v2162
    %v2179 = vunpack.c.l.b16 %v2163
    %v2180 = vpack.c.b16 %v2177, %v2176
    %v2181 = vpack.c.b16 %v2179, %v2178
    %2184 = vmatprep.subr.bf16.mxu0 0
    %2185 = vmatpush1.bf16.msra.mxu0 %v2180
    %2186 = vmatprep.subr.bf16.mxu0 0
    %2187 = vmatpush1.bf16.msra.mxu0 %v2181
    %2188 = vmatprep.subr.bf16.mxu0 0
    %2189 = vmatpush1.bf16.msra.mxu0 0
    %2190 = vmatprep.subr.bf16.mxu0 0
    %2191 = vmatpush1.bf16.msra.mxu0 0
    %2192 = vmatprep.subr.bf16.mxu0 0
    %2193 = vmatpush1.bf16.msra.mxu0 0
    %2194 = vmatprep.subr.bf16.mxu0 0
    %2195 = vmatpush1.bf16.msra.mxu0 0
    %2196 = vmatprep.subr.bf16.mxu0 0
    %2197 = vmatpush1.bf16.msra.mxu0 0
    %2198 = vmatprep.subr.bf16.mxu0 0
    %2199 = vmatpush1.bf16.msra.mxu0 0
    %2200 = vmatprep.subr.bf16.mxu0 0
    %2201 = vmatpush1.bf16.msra.mxu0 0
    %2202 = vmatprep.subr.bf16.mxu0 0
    %2203 = vmatpush1.bf16.msra.mxu0 0
    %2204 = vmatprep.subr.bf16.mxu0 0
    %2205 = vmatpush1.bf16.msra.mxu0 0
    %2206 = vmatprep.subr.bf16.mxu0 0
    %2207 = vmatpush1.bf16.msra.mxu0 0
    %2208 = vmatprep.subr.bf16.mxu0 0
    %2209 = vmatpush1.bf16.msra.mxu0 0
    %2210 = vmatprep.subr.bf16.mxu0 0
    %2211 = vmatpush1.bf16.msra.mxu0 0
    %2212 = vmatprep.subr.bf16.mxu0 0
    %2213 = vmatpush1.bf16.msra.mxu0 0
    %2214 = vmatprep.subr.bf16.mxu0 0
    %2215 = vmatpush1.bf16.msra.mxu0 0
    %2216 = vmatprep.mubr.bf16.mxu0 0
    %2217 = vmatmul.mubr.bf16.gmra.mrb[0].mxu0 %v951
    %v2218 = vpop.f32.mrb[0].mxu0
    %v2219 = vadd.f32 %v2170, %v2218
    %v2220 = vpop.f32.mrb[0].mxu0
    %v2221 = vpop.f32.mrb[0].mxu0
    %v2222 = vpop.f32.mrb[0].mxu0
    %2223 = vdwg.mxu0
    %s2224 = scalar_lea.vmem [#allocation16], 48
    %v2225 = vld [vmem:[%s2224] sm:$0xf]
    %v2226 = vld [vmem:[%s2224 + $0x4] sm:$0xf]
    %v2227 = vld [vmem:[%s2224 + $0x8] sm:$0xf]
    %v2228 = vld [vmem:[%s2224 + $0xc] sm:$0xf]
    %s2229 = scalar_lea.vmem [#allocation17], 3
    %v2230 = vld [vmem:[%s2229] sm:$0x1]
    %v2232 = vlaneseq
    %v2233 = vshrl.u32 %v2232, 7
    %v2234 = vsub.s32 0, %v2233
    %v2235 = vrot.slane %v2230, %v2234
    %v2241 = vunpack.c.l.b16 %v2225
    %v2242 = vunpack.c.l.b16 %v2226
    %v2243 = vunpack.c.l.b16 %v2227
    %v2244 = vunpack.c.l.b16 %v2228
    %v2245 = vpack.c.b16 %v2242, %v2241
    %v2246 = vpack.c.b16 %v2244, %v2243
    %2249 = vmatprep.subr.bf16.mxu0 0
    %2250 = vmatpush1.bf16.msra.mxu0 %v2245
    %2251 = vmatprep.subr.bf16.mxu0 0
    %2252 = vmatpush1.bf16.msra.mxu0 %v2246
    %2253 = vmatprep.subr.bf16.mxu0 0
    %2254 = vmatpush1.bf16.msra.mxu0 0
    %2255 = vmatprep.subr.bf16.mxu0 0
    %2256 = vmatpush1.bf16.msra.mxu0 0
    %2257 = vmatprep.subr.bf16.mxu0 0
    %2258 = vmatpush1.bf16.msra.mxu0 0
    %2259 = vmatprep.subr.bf16.mxu0 0
    %2260 = vmatpush1.bf16.msra.mxu0 0
    %2261 = vmatprep.subr.bf16.mxu0 0
    %2262 = vmatpush1.bf16.msra.mxu0 0
    %2263 = vmatprep.subr.bf16.mxu0 0
    %2264 = vmatpush1.bf16.msra.mxu0 0
    %2265 = vmatprep.subr.bf16.mxu0 0
    %2266 = vmatpush1.bf16.msra.mxu0 0
    %2267 = vmatprep.subr.bf16.mxu0 0
    %2268 = vmatpush1.bf16.msra.mxu0 0
    %2269 = vmatprep.subr.bf16.mxu0 0
    %2270 = vmatpush1.bf16.msra.mxu0 0
    %2271 = vmatprep.subr.bf16.mxu0 0
    %2272 = vmatpush1.bf16.msra.mxu0 0
    %2273 = vmatprep.subr.bf16.mxu0 0
    %2274 = vmatpush1.bf16.msra.mxu0 0
    %2275 = vmatprep.subr.bf16.mxu0 0
    %2276 = vmatpush1.bf16.msra.mxu0 0
    %2277 = vmatprep.subr.bf16.mxu0 0
    %2278 = vmatpush1.bf16.msra.mxu0 0
    %2279 = vmatprep.subr.bf16.mxu0 0
    %2280 = vmatpush1.bf16.msra.mxu0 0
    %2281 = vmatprep.mubr.bf16.mxu0 0
    %2282 = vmatmul.mubr.bf16.gmra.mrb[0].mxu0 %v951
    %v2283 = vpop.f32.mrb[0].mxu0
    %v2284 = vadd.f32 %v2235, %v2283
    %v2285 = vpop.f32.mrb[0].mxu0
    %v2286 = vpop.f32.mrb[0].mxu0
    %v2287 = vpop.f32.mrb[0].mxu0
    %2288 = vdwg.mxu0
    %2289 = vset.pattern.permute.xlu0 3
    %2290 = vperm.xlu0 %2289, %v823
    %v2291 = vpop.permute.xlu0 %2290
    %2293 = vset.pattern.permute.xlu0 3
    %2294 = vperm.xlu0 %2293, %v828
    %v2295 = vpop.permute.xlu0 %2294
    %2297 = vset.pattern.permute.xlu0 3
    %2298 = vperm.xlu0 %2297, %v833
    %v2299 = vpop.permute.xlu0 %2298
    %2301 = vset.pattern.permute.xlu0 3
    %2302 = vperm.xlu0 %2301, %v838
    %v2303 = vpop.permute.xlu0 %2302
    %2305 = vset.pattern.permute.xlu0 3
    %2306 = vperm.xlu0 %2305, %v843
    %v2307 = vpop.permute.xlu0 %2306
    %2309 = vset.pattern.permute.xlu0 3
    %2310 = vperm.xlu0 %2309, %v848
    %v2311 = vpop.permute.xlu0 %2310
    %2313 = vset.pattern.permute.xlu0 3
    %2314 = vperm.xlu0 %2313, %v853
    %v2315 = vpop.permute.xlu0 %2314
    %2317 = vset.pattern.permute.xlu0 3
    %2318 = vperm.xlu0 %2317, %v858
    %v2319 = vpop.permute.xlu0 %2318
    %v2321 = vmul.f32 %v2291, %v329
    %v2322 = vmul.f32 %v2295, %v330
    %v2323 = vmul.f32 %v2299, %v331
    %v2324 = vmul.f32 %v2303, %v332
    %v2325 = vmul.f32 %v2307, %v333
    %v2326 = vmul.f32 %v2311, %v334
    %v2327 = vmul.f32 %v2315, %v335
    %v2328 = vmul.f32 %v2319, %v336
    %v2329 = vsel %vm368, %v2321, 0.0
    %v2330 = vsel %vm368, %v2322, 0.0
    %v2331 = vadd.f32 %v2329, %v2330
    %v2332 = vsel %vm368, %v2323, 0.0
    %v2333 = vadd.f32 %v2331, %v2332
    %v2334 = vsel %vm368, %v2324, 0.0
    %v2335 = vadd.f32 %v2333, %v2334
    %v2336 = vsel %vm368, %v2325, 0.0
    %v2337 = vadd.f32 %v2335, %v2336
    %v2338 = vsel %vm368, %v2326, 0.0
    %v2339 = vadd.f32 %v2337, %v2338
    %v2340 = vsel %vm368, %v2327, 0.0
    %v2341 = vadd.f32 %v2339, %v2340
    %v2342 = vsel %vm368, %v2328, 0.0
    %v2343 = vadd.f32 %v2341, %v2342
    %v2344 = vpack.c.bf16 %v2154, %v2154
    %v2345 = vpack.c.bf16 %v2219, %v2219
    %v2347 = vsel %vm368, %v2344, 0
    %v2350 = vsel %vm368, %v2345, 0
    %2352 = vmatprep.subr.bf16.mxu0 0
    %2353 = vmatpush1.bf16.xpose.msra.mxu0 %v2350
    %2354 = vmatprep.subr.bf16.mxu0 0
    %2355 = vmatpush1.bf16.xpose.msra.mxu0 0
    %2356 = vmatprep.subr.bf16.mxu0 0
    %2357 = vmatpush1.bf16.xpose.msra.mxu0 0
    %2358 = vmatprep.subr.bf16.mxu0 0
    %2359 = vmatpush1.bf16.xpose.msra.mxu0 0
    %2360 = vmatprep.subr.bf16.mxu0 0
    %2361 = vmatpush1.bf16.xpose.msra.mxu0 0
    %2362 = vmatprep.subr.bf16.mxu0 0
    %2363 = vmatpush1.bf16.xpose.msra.mxu0 0
    %2364 = vmatprep.subr.bf16.mxu0 0
    %2365 = vmatpush1.bf16.xpose.msra.mxu0 0
    %2366 = vmatprep.subr.bf16.mxu0 0
    %2367 = vmatpush1.bf16.xpose.msra.mxu0 0
    %2368 = vmatprep.subr.bf16.mxu0 0
    %2369 = vmatpush1.bf16.xpose.msra.mxu0 0
    %2370 = vmatprep.subr.bf16.mxu0 0
    %2371 = vmatpush1.bf16.xpose.msra.mxu0 0
    %2372 = vmatprep.subr.bf16.mxu0 0
    %2373 = vmatpush1.bf16.xpose.msra.mxu0 0
    %2374 = vmatprep.subr.bf16.mxu0 0
    %2375 = vmatpush1.bf16.xpose.msra.mxu0 0
    %2376 = vmatprep.subr.bf16.mxu0 0
    %2377 = vmatpush1.bf16.xpose.msra.mxu0 0
    %2378 = vmatprep.subr.bf16.mxu0 0
    %2379 = vmatpush1.bf16.xpose.msra.mxu0 0
    %2380 = vmatprep.subr.bf16.mxu0 0
    %2381 = vmatpush1.bf16.xpose.msra.mxu0 0
    %2382 = vmatprep.subr.bf16.mxu0 0
    %2383 = vmatpush1.bf16.xpose.msra.mxu0 0
    %2384 = vmatprep.mubr.bf16.mxu0 0
    %2385 = vmatmul.mubr.bf16.gmra.mrb[0].mxu0 %v2347
    %v2386 = vpop.f32.mrb[0].mxu0
    %v2387 = vadd.f32 %v2343, %v2386
    %v2388 = vpop.f32.mrb[0].mxu0
    %v2389 = vpop.f32.mrb[0].mxu0
    %v2390 = vpop.f32.mrb[0].mxu0
    %2391 = vdwg.mxu0
    %v2392 = vmul.f32 %v2387, %v357
    %v2393 = vadd.f32 %v2392, %v359
    %v2394 = vsel %vm368, %v2393, -inf
    %2395 = vmax.xlane.f32.xlu0 %v2394
    %v2396 = vpop.xlane.xlu0 %2395
    %v2397 = vsub.f32 %v2393, %v2396
    %v2398 = vmul.f32 %v2397, 1.442695
    %v2399 = vpow.pop %v2398
    %v2400 = vsel %vm368, %v2399, 0.0
    %2401 = vadd.xlane.f32.xlu0 %v2400
    %v2402 = vpop.xlane.xlu0 %2401
    %v2403 = vrcp.pop %v2402
    %v2404 = vmul.f32 %v2399, %v2403
    %v2405 = vpack.c.bf16 %v2404, %v2404
    %v2406 = vpack.c.bf16 %v2284, %v2284
    %v2408 = vsel %vm368, %v2405, 0
    %v2411 = vsel %vm1185, %v2406, 0
    %2413 = vmatprep.subr.bf16.mxu0 0
    %2414 = vmatpush1.bf16.msra.mxu0 %v2411
    %2415 = vmatprep.subr.bf16.mxu0 0
    %2416 = vmatpush1.bf16.msra.mxu0 0
    %2417 = vmatprep.subr.bf16.mxu0 0
    %2418 = vmatpush1.bf16.msra.mxu0 0
    %2419 = vmatprep.subr.bf16.mxu0 0
    %2420 = vmatpush1.bf16.msra.mxu0 0
    %2421 = vmatprep.subr.bf16.mxu0 0
    %2422 = vmatpush1.bf16.msra.mxu0 0
    %2423 = vmatprep.subr.bf16.mxu0 0
    %2424 = vmatpush1.bf16.msra.mxu0 0
    %2425 = vmatprep.subr.bf16.mxu0 0
    %2426 = vmatpush1.bf16.msra.mxu0 0
    %2427 = vmatprep.subr.bf16.mxu0 0
    %2428 = vmatpush1.bf16.msra.mxu0 0
    %2429 = vmatprep.subr.bf16.mxu0 0
    %2430 = vmatpush1.bf16.msra.mxu0 0
    %2431 = vmatprep.subr.bf16.mxu0 0
    %2432 = vmatpush1.bf16.msra.mxu0 0
    %2433 = vmatprep.subr.bf16.mxu0 0
    %2434 = vmatpush1.bf16.msra.mxu0 0
    %2435 = vmatprep.subr.bf16.mxu0 0
    %2436 = vmatpush1.bf16.msra.mxu0 0
    %2437 = vmatprep.subr.bf16.mxu0 0
    %2438 = vmatpush1.bf16.msra.mxu0 0
    %2439 = vmatprep.subr.bf16.mxu0 0
    %2440 = vmatpush1.bf16.msra.mxu0 0
    %2441 = vmatprep.subr.bf16.mxu0 0
    %2442 = vmatpush1.bf16.msra.mxu0 0
    %2443 = vmatprep.subr.bf16.mxu0 0
    %2444 = vmatpush1.bf16.msra.mxu0 0
    %2445 = vmatprep.mubr.bf16.mxu0 0
    %2446 = vmatmul.mubr.bf16.gmra.mrb[0].mxu0 %v2408
    %v2447 = vpop.f32.mrb[0].mxu0
    %v2448 = vadd.f32 0.0, %v2447
    %v2449 = vpop.f32.mrb[0].mxu0
    %v2450 = vpop.f32.mrb[0].mxu0
    %v2451 = vpop.f32.mrb[0].mxu0
    %2452 = vdwg.mxu0
    %v2453 = vpack.c.bf16 %v2448, %v2448
    %s2454 = scalar_lea.vmem [#allocation19], 12
    %v2455 = vld [vmem:[%s2454] sm:$0xf]
    %v2457 = vsel %vm368, %v2453, 0
    %v2460 = vsel %vm1185, %v2455, 0
    %2462 = vmatprep.subr.bf16.mxu0 0
    %2463 = vmatpush1.bf16.msra.mxu0 %v2460
    %2464 = vmatprep.subr.bf16.mxu0 0
    %2465 = vmatpush1.bf16.msra.mxu0 0
    %2466 = vmatprep.subr.bf16.mxu0 0
    %2467 = vmatpush1.bf16.msra.mxu0 0
    %2468 = vmatprep.subr.bf16.mxu0 0
    %2469 = vmatpush1.bf16.msra.mxu0 0
    %2470 = vmatprep.subr.bf16.mxu0 0
    %2471 = vmatpush1.bf16.msra.mxu0 0
    %2472 = vmatprep.subr.bf16.mxu0 0
    %2473 = vmatpush1.bf16.msra.mxu0 0
    %2474 = vmatprep.subr.bf16.mxu0 0
    %2475 = vmatpush1.bf16.msra.mxu0 0
    %2476 = vmatprep.subr.bf16.mxu0 0
    %2477 = vmatpush1.bf16.msra.mxu0 0
    %2478 = vmatprep.subr.bf16.mxu0 0
    %2479 = vmatpush1.bf16.msra.mxu0 0
    %2480 = vmatprep.subr.bf16.mxu0 0
    %2481 = vmatpush1.bf16.msra.mxu0 0
    %2482 = vmatprep.subr.bf16.mxu0 0
    %2483 = vmatpush1.bf16.msra.mxu0 0
    %2484 = vmatprep.subr.bf16.mxu0 0
    %2485 = vmatpush1.bf16.msra.mxu0 0
    %2486 = vmatprep.subr.bf16.mxu0 0
    %2487 = vmatpush1.bf16.msra.mxu0 0
    %2488 = vmatprep.subr.bf16.mxu0 0
    %2489 = vmatpush1.bf16.msra.mxu0 0
    %2490 = vmatprep.subr.bf16.mxu0 0
    %2491 = vmatpush1.bf16.msra.mxu0 0
    %2492 = vmatprep.subr.bf16.mxu0 0
    %2493 = vmatpush1.bf16.msra.mxu0 0
    %2494 = vmatprep.mubr.bf16.mxu0 0
    %2495 = vmatmul.mubr.bf16.gmra.mrb[0].mxu0 %v2457
    %v2496 = vpop.f32.mrb[0].mxu0
    %v2497 = vadd.f32 0.0, %v2496
    %v2498 = vpop.f32.mrb[0].mxu0
    %v2499 = vpop.f32.mrb[0].mxu0
    %v2500 = vpop.f32.mrb[0].mxu0
    %2501 = vdwg.mxu0
    %v2502 = vadd.f32 %v2093, %v2497
    %v2504 = vlaneseq
    %v2505 = vshrl.u32 %v2504, 7
    %v2506 = vsub.s32 0, %v2505
    %v2507 = vrot.slane %v353, %v2506
    %v2509 = vadd.f32 %v2502, %v2507
    %2510 = vst.msk [vmem:[#allocation32] sm:$0xff] %vm445, %v2509
    %s2511 = scalar_lea.vmem [#allocation2], 4
    %v2512 = vld [vmem:[%s2511] sm:$0xf]
    %s2513 = scalar_lea.vmem [#allocation5], 4
    %v2514 = vld [vmem:[%s2513] sm:$0xf]
    %s2515 = scalar_lea.vmem [#allocation7], 8
    %v2516 = vld [vmem:[%s2515] sm:$0xff]
    %s2517 = scalar_lea.vmem [#allocation8], 8
    %v2518 = vld [vmem:[%s2517] sm:$0xff]
    %v2519 = vsub.f32 %v2518, 1.0
    %v2520 = vmul.f32 %v2519, 1e+09
    %v2521 = vmul.f32 %v2516, %v329
    %v2522 = vmul.f32 %v2516, %v330
    %v2523 = vmul.f32 %v2516, %v331
    %v2524 = vmul.f32 %v2516, %v332
    %v2525 = vmul.f32 %v2516, %v333
    %v2526 = vmul.f32 %v2516, %v334
    %v2527 = vmul.f32 %v2516, %v335
    %v2528 = vmul.f32 %v2516, %v336
    %v2529 = vsel %vm368, %v2521, 0.0
    %2530 = vadd.xlane.f32.xlu0 %v2529
    %v2531 = vpop.xlane.xlu0 %2530
    %v2532 = vsel %vm368, %v2522, 0.0
    %2533 = vadd.xlane.f32.xlu0 %v2532
    %v2534 = vpop.xlane.xlu0 %2533
    %v2535 = vsel %vm368, %v2523, 0.0
    %2536 = vadd.xlane.f32.xlu0 %v2535
    %v2537 = vpop.xlane.xlu0 %2536
    %v2538 = vsel %vm368, %v2524, 0.0
    %2539 = vadd.xlane.f32.xlu0 %v2538
    %v2540 = vpop.xlane.xlu0 %2539
    %v2541 = vsel %vm368, %v2525, 0.0
    %2542 = vadd.xlane.f32.xlu0 %v2541
    %v2543 = vpop.xlane.xlu0 %2542
    %v2544 = vsel %vm368, %v2526, 0.0
    %2545 = vadd.xlane.f32.xlu0 %v2544
    %v2546 = vpop.xlane.xlu0 %2545
    %v2547 = vsel %vm368, %v2527, 0.0
    %2548 = vadd.xlane.f32.xlu0 %v2547
    %v2549 = vpop.xlane.xlu0 %2548
    %v2550 = vsel %vm368, %v2528, 0.0
    %2551 = vadd.xlane.f32.xlu0 %v2550
    %v2552 = vpop.xlane.xlu0 %2551
    %v2553 = vsub.f32 %v2531, %v397
    %v2554 = vsub.f32 %v2534, %v397
    %v2555 = vsub.f32 %v2537, %v397
    %v2556 = vsub.f32 %v2540, %v397
    %v2557 = vsub.f32 %v2543, %v397
    %v2558 = vsub.f32 %v2546, %v397
    %v2559 = vsub.f32 %v2549, %v397
    %v2560 = vsub.f32 %v2552, %v397
    %v2561 = vmul.f32 %v2553, %v2553
    %v2562 = vmul.f32 %v2554, %v2554
    %v2563 = vmul.f32 %v2555, %v2555
    %v2564 = vmul.f32 %v2556, %v2556
    %v2565 = vmul.f32 %v2557, %v2557
    %v2566 = vmul.f32 %v2558, %v2558
    %v2567 = vmul.f32 %v2559, %v2559
    %v2568 = vmul.f32 %v2560, %v2560
    %v2569 = vmul.f32 %v2561, -4.8050003
    %v2570 = vmul.f32 %v2562, -4.8050003
    %v2571 = vmul.f32 %v2563, -4.8050003
    %v2572 = vmul.f32 %v2564, -4.8050003
    %v2573 = vmul.f32 %v2565, -4.8050003
    %v2574 = vmul.f32 %v2566, -4.8050003
    %v2575 = vmul.f32 %v2567, -4.8050003
    %v2576 = vmul.f32 %v2568, -4.8050003
    %v2577 = vmul.f32 %v2569, 1.442695
    %v2578 = vpow.pop %v2577
    %v2579 = vmul.f32 %v2570, 1.442695
    %v2580 = vpow.pop %v2579
    %v2581 = vmul.f32 %v2571, 1.442695
    %v2582 = vpow.pop %v2581
    %v2583 = vmul.f32 %v2572, 1.442695
    %v2584 = vpow.pop %v2583
    %v2585 = vmul.f32 %v2573, 1.442695
    %v2586 = vpow.pop %v2585
    %v2587 = vmul.f32 %v2574, 1.442695
    %v2588 = vpow.pop %v2587
    %v2589 = vmul.f32 %v2575, 1.442695
    %v2590 = vpow.pop %v2589
    %v2591 = vmul.f32 %v2576, 1.442695
    %v2592 = vpow.pop %v2591
    %v2594 = vsel %vm445, %v2578, 0
    %v2597 = vsel %vm445, %v2580, 0
    %v2600 = vsel %vm445, %v2582, 0
    %v2603 = vsel %vm445, %v2584, 0
    %v2606 = vsel %vm445, %v2586, 0
    %v2609 = vsel %vm445, %v2588, 0
    %v2612 = vsel %vm445, %v2590, 0
    %v2615 = vsel %vm445, %v2592, 0
    %2617 = vmatprep.subr.mxu0 0.0
    %2618 = vmatpush1.msra.mxu0 %v338
    %2619 = vmatprep.subr.mxu0 0.0
    %2620 = vmatpush1.msra.mxu0 %v339
    %2621 = vmatprep.subr.mxu0 0.0
    %2622 = vmatpush1.msra.mxu0 %v340
    %2623 = vmatprep.subr.mxu0 0.0
    %2624 = vmatpush1.msra.mxu0 %v341
    %2625 = vmatprep.subr.mxu0 0.0
    %2626 = vmatpush1.msra.mxu0 0.0
    %2627 = vmatprep.subr.mxu0 0.0
    %2628 = vmatpush1.msra.mxu0 0.0
    %2629 = vmatprep.subr.mxu0 0.0
    %2630 = vmatpush1.msra.mxu0 0.0
    %2631 = vmatprep.subr.mxu0 0.0
    %2632 = vmatpush1.msra.mxu0 0.0
    %2633 = vmatprep.subr.mxu0 0.0
    %2634 = vmatpush1.msra.mxu0 0.0
    %2635 = vmatprep.subr.mxu0 0.0
    %2636 = vmatpush1.msra.mxu0 0.0
    %2637 = vmatprep.subr.mxu0 0.0
    %2638 = vmatpush1.msra.mxu0 0.0
    %2639 = vmatprep.subr.mxu0 0.0
    %2640 = vmatpush1.msra.mxu0 0.0
    %2641 = vmatprep.subr.mxu0 0.0
    %2642 = vmatpush1.msra.mxu0 0.0
    %2643 = vmatprep.subr.mxu0 0.0
    %2644 = vmatpush1.msra.mxu0 0.0
    %2645 = vmatprep.subr.mxu0 0.0
    %2646 = vmatpush1.msra.mxu0 0.0
    %2647 = vmatprep.subr.mxu0 0.0
    %2648 = vmatpush1.msra.mxu0 0.0
    %2649 = vmatprep.subr.mxu0 0.0
    %2650 = vmatpush1.msra.mxu0 0.0
    %2651 = vmatprep.subr.mxu0 0.0
    %2652 = vmatpush1.msra.mxu0 0.0
    %2653 = vmatprep.subr.mxu0 0.0
    %2654 = vmatpush1.msra.mxu0 0.0
    %2655 = vmatprep.subr.mxu0 0.0
    %2656 = vmatpush1.msra.mxu0 0.0
    %2657 = vmatprep.subr.mxu0 0.0
    %2658 = vmatpush1.msra.mxu0 0.0
    %2659 = vmatprep.subr.mxu0 0.0
    %2660 = vmatpush1.msra.mxu0 0.0
    %2661 = vmatprep.subr.mxu0 0.0
    %2662 = vmatpush1.msra.mxu0 0.0
    %2663 = vmatprep.subr.mxu0 0.0
    %2664 = vmatpush1.msra.mxu0 0.0
    %2665 = vmatprep.subr.mxu0 0.0
    %2666 = vmatpush1.msra.mxu0 0.0
    %2667 = vmatprep.subr.mxu0 0.0
    %2668 = vmatpush1.msra.mxu0 0.0
    %2669 = vmatprep.subr.mxu0 0.0
    %2670 = vmatpush1.msra.mxu0 0.0
    %2671 = vmatprep.subr.mxu0 0.0
    %2672 = vmatpush1.msra.mxu0 0.0
    %2673 = vmatprep.subr.mxu0 0.0
    %2674 = vmatpush1.msra.mxu0 0.0
    %2675 = vmatprep.subr.mxu0 0.0
    %2676 = vmatpush1.msra.mxu0 0.0
    %2677 = vmatprep.subr.mxu0 0.0
    %2678 = vmatpush1.msra.mxu0 0.0
    %2679 = vmatprep.subr.mxu0 0.0
    %2680 = vmatpush1.msra.mxu0 0.0
    %2681 = vmatprep.mubr.f32.mxu0 0.0
    %2682 = vmatmul.mubr.f32.gmra.mrb[0].mxu0 %v2594
    %v2683 = vpop.f32.mrb[0].mxu0
    %v2684 = vadd.f32 %v443, %v2683
    %v2685 = vpop.f32.mrb[0].mxu0
    %2686 = vmatprep.mubr.f32.mxu0 0.0
    %2687 = vmatmul.mubr.f32.gmra.mrb[0].mxu0 %v2597
    %v2688 = vpop.f32.mrb[0].mxu0
    %v2689 = vadd.f32 %v443, %v2688
    %v2690 = vpop.f32.mrb[0].mxu0
    %2691 = vmatprep.mubr.f32.mxu0 0.0
    %2692 = vmatmul.mubr.f32.gmra.mrb[0].mxu0 %v2600
    %v2693 = vpop.f32.mrb[0].mxu0
    %v2694 = vadd.f32 %v443, %v2693
    %v2695 = vpop.f32.mrb[0].mxu0
    %2696 = vmatprep.mubr.f32.mxu0 0.0
    %2697 = vmatmul.mubr.f32.gmra.mrb[0].mxu0 %v2603
    %v2698 = vpop.f32.mrb[0].mxu0
    %v2699 = vadd.f32 %v443, %v2698
    %v2700 = vpop.f32.mrb[0].mxu0
    %2701 = vmatprep.mubr.f32.mxu0 0.0
    %2702 = vmatmul.mubr.f32.gmra.mrb[0].mxu0 %v2606
    %v2703 = vpop.f32.mrb[0].mxu0
    %v2704 = vadd.f32 %v443, %v2703
    %v2705 = vpop.f32.mrb[0].mxu0
    %2706 = vmatprep.mubr.f32.mxu0 0.0
    %2707 = vmatmul.mubr.f32.gmra.mrb[0].mxu0 %v2609
    %v2708 = vpop.f32.mrb[0].mxu0
    %v2709 = vadd.f32 %v443, %v2708
    %v2710 = vpop.f32.mrb[0].mxu0
    %2711 = vmatprep.mubr.f32.mxu0 0.0
    %2712 = vmatmul.mubr.f32.gmra.mrb[0].mxu0 %v2612
    %v2713 = vpop.f32.mrb[0].mxu0
    %v2714 = vadd.f32 %v443, %v2713
    %v2715 = vpop.f32.mrb[0].mxu0
    %2716 = vmatprep.mubr.f32.mxu0 0.0
    %2717 = vmatmul.mubr.f32.gmra.mrb[0].mxu0 %v2615
    %v2718 = vpop.f32.mrb[0].mxu0
    %v2719 = vadd.f32 %v443, %v2718
    %v2720 = vpop.f32.mrb[0].mxu0
    %2721 = vdwg.mxu0
    %v2722 = vmax.f32 %v2684, 0.0
    %v2723 = vmax.f32 %v2689, 0.0
    %v2724 = vmax.f32 %v2694, 0.0
    %v2725 = vmax.f32 %v2699, 0.0
    %v2726 = vmax.f32 %v2704, 0.0
    %v2727 = vmax.f32 %v2709, 0.0
    %v2728 = vmax.f32 %v2714, 0.0
    %v2729 = vmax.f32 %v2719, 0.0
    %v2731 = vsel %vm445, %v2722, 0
    %v2734 = vsel %vm445, %v2723, 0
    %v2737 = vsel %vm445, %v2724, 0
    %v2740 = vsel %vm445, %v2725, 0
    %v2743 = vsel %vm445, %v2726, 0
    %v2746 = vsel %vm445, %v2727, 0
    %v2749 = vsel %vm445, %v2728, 0
    %v2752 = vsel %vm445, %v2729, 0
    %2754 = vmatprep.subr.mxu0 0.0
    %2755 = vmatpush1.msra.mxu0 %v343
    %2756 = vmatprep.subr.mxu0 0.0
    %2757 = vmatpush1.msra.mxu0 %v344
    %2758 = vmatprep.subr.mxu0 0.0
    %2759 = vmatpush1.msra.mxu0 %v345
    %2760 = vmatprep.subr.mxu0 0.0
    %2761 = vmatpush1.msra.mxu0 %v346
    %2762 = vmatprep.subr.mxu0 0.0
    %2763 = vmatpush1.msra.mxu0 0.0
    %2764 = vmatprep.subr.mxu0 0.0
    %2765 = vmatpush1.msra.mxu0 0.0
    %2766 = vmatprep.subr.mxu0 0.0
    %2767 = vmatpush1.msra.mxu0 0.0
    %2768 = vmatprep.subr.mxu0 0.0
    %2769 = vmatpush1.msra.mxu0 0.0
    %2770 = vmatprep.subr.mxu0 0.0
    %2771 = vmatpush1.msra.mxu0 0.0
    %2772 = vmatprep.subr.mxu0 0.0
    %2773 = vmatpush1.msra.mxu0 0.0
    %2774 = vmatprep.subr.mxu0 0.0
    %2775 = vmatpush1.msra.mxu0 0.0
    %2776 = vmatprep.subr.mxu0 0.0
    %2777 = vmatpush1.msra.mxu0 0.0
    %2778 = vmatprep.subr.mxu0 0.0
    %2779 = vmatpush1.msra.mxu0 0.0
    %2780 = vmatprep.subr.mxu0 0.0
    %2781 = vmatpush1.msra.mxu0 0.0
    %2782 = vmatprep.subr.mxu0 0.0
    %2783 = vmatpush1.msra.mxu0 0.0
    %2784 = vmatprep.subr.mxu0 0.0
    %2785 = vmatpush1.msra.mxu0 0.0
    %2786 = vmatprep.subr.mxu0 0.0
    %2787 = vmatpush1.msra.mxu0 0.0
    %2788 = vmatprep.subr.mxu0 0.0
    %2789 = vmatpush1.msra.mxu0 0.0
    %2790 = vmatprep.subr.mxu0 0.0
    %2791 = vmatpush1.msra.mxu0 0.0
    %2792 = vmatprep.subr.mxu0 0.0
    %2793 = vmatpush1.msra.mxu0 0.0
    %2794 = vmatprep.subr.mxu0 0.0
    %2795 = vmatpush1.msra.mxu0 0.0
    %2796 = vmatprep.subr.mxu0 0.0
    %2797 = vmatpush1.msra.mxu0 0.0
    %2798 = vmatprep.subr.mxu0 0.0
    %2799 = vmatpush1.msra.mxu0 0.0
    %2800 = vmatprep.subr.mxu0 0.0
    %2801 = vmatpush1.msra.mxu0 0.0
    %2802 = vmatprep.subr.mxu0 0.0
    %2803 = vmatpush1.msra.mxu0 0.0
    %2804 = vmatprep.subr.mxu0 0.0
    %2805 = vmatpush1.msra.mxu0 0.0
    %2806 = vmatprep.subr.mxu0 0.0
    %2807 = vmatpush1.msra.mxu0 0.0
    %2808 = vmatprep.subr.mxu0 0.0
    %2809 = vmatpush1.msra.mxu0 0.0
    %2810 = vmatprep.subr.mxu0 0.0
    %2811 = vmatpush1.msra.mxu0 0.0
    %2812 = vmatprep.subr.mxu0 0.0
    %2813 = vmatpush1.msra.mxu0 0.0
    %2814 = vmatprep.subr.mxu0 0.0
    %2815 = vmatpush1.msra.mxu0 0.0
    %2816 = vmatprep.subr.mxu0 0.0
    %2817 = vmatpush1.msra.mxu0 0.0
    %2818 = vmatprep.mubr.f32.mxu0 0.0
    %2819 = vmatmul.mubr.f32.gmra.mrb[0].mxu0 %v2731
    %v2820 = vpop.f32.mrb[0].mxu0
    %v2821 = vadd.f32 %v587, %v2820
    %v2822 = vpop.f32.mrb[0].mxu0
    %2823 = vmatprep.mubr.f32.mxu0 0.0
    %2824 = vmatmul.mubr.f32.gmra.mrb[0].mxu0 %v2734
    %v2825 = vpop.f32.mrb[0].mxu0
    %v2826 = vadd.f32 %v587, %v2825
    %v2827 = vpop.f32.mrb[0].mxu0
    %2828 = vmatprep.mubr.f32.mxu0 0.0
    %2829 = vmatmul.mubr.f32.gmra.mrb[0].mxu0 %v2737
    %v2830 = vpop.f32.mrb[0].mxu0
    %v2831 = vadd.f32 %v587, %v2830
    %v2832 = vpop.f32.mrb[0].mxu0
    %2833 = vmatprep.mubr.f32.mxu0 0.0
    %2834 = vmatmul.mubr.f32.gmra.mrb[0].mxu0 %v2740
    %v2835 = vpop.f32.mrb[0].mxu0
    %v2836 = vadd.f32 %v587, %v2835
    %v2837 = vpop.f32.mrb[0].mxu0
    %2838 = vmatprep.mubr.f32.mxu0 0.0
    %2839 = vmatmul.mubr.f32.gmra.mrb[0].mxu0 %v2743
    %v2840 = vpop.f32.mrb[0].mxu0
    %v2841 = vadd.f32 %v587, %v2840
    %v2842 = vpop.f32.mrb[0].mxu0
    %2843 = vmatprep.mubr.f32.mxu0 0.0
    %2844 = vmatmul.mubr.f32.gmra.mrb[0].mxu0 %v2746
    %v2845 = vpop.f32.mrb[0].mxu0
    %v2846 = vadd.f32 %v587, %v2845
    %v2847 = vpop.f32.mrb[0].mxu0
    %2848 = vmatprep.mubr.f32.mxu0 0.0
    %2849 = vmatmul.mubr.f32.gmra.mrb[0].mxu0 %v2749
    %v2850 = vpop.f32.mrb[0].mxu0
    %v2851 = vadd.f32 %v587, %v2850
    %v2852 = vpop.f32.mrb[0].mxu0
    %2853 = vmatprep.mubr.f32.mxu0 0.0
    %2854 = vmatmul.mubr.f32.gmra.mrb[0].mxu0 %v2752
    %v2855 = vpop.f32.mrb[0].mxu0
    %v2856 = vadd.f32 %v587, %v2855
    %v2857 = vpop.f32.mrb[0].mxu0
    %2858 = vdwg.mxu0
    %v2859 = vmax.f32 %v2821, 0.0
    %v2860 = vmax.f32 %v2826, 0.0
    %v2861 = vmax.f32 %v2831, 0.0
    %v2862 = vmax.f32 %v2836, 0.0
    %v2863 = vmax.f32 %v2841, 0.0
    %v2864 = vmax.f32 %v2846, 0.0
    %v2865 = vmax.f32 %v2851, 0.0
    %v2866 = vmax.f32 %v2856, 0.0
    %v2868 = vsel %vm445, %v2859, 0
    %v2871 = vsel %vm445, %v2860, 0
    %v2874 = vsel %vm445, %v2861, 0
    %v2877 = vsel %vm445, %v2862, 0
    %v2880 = vsel %vm445, %v2863, 0
    %v2883 = vsel %vm445, %v2864, 0
    %v2886 = vsel %vm445, %v2865, 0
    %v2889 = vsel %vm445, %v2866, 0
    %2891 = vmatprep.subr.mxu0 0.0
    %2892 = vmatpush1.msra.mxu0 %v348
    %2893 = vmatprep.subr.mxu0 0.0
    %2894 = vmatpush1.msra.mxu0 %v349
    %2895 = vmatprep.subr.mxu0 0.0
    %2896 = vmatpush1.msra.mxu0 %v350
    %2897 = vmatprep.subr.mxu0 0.0
    %2898 = vmatpush1.msra.mxu0 %v351
    %2899 = vmatprep.subr.mxu0 0.0
    %2900 = vmatpush1.msra.mxu0 0.0
    %2901 = vmatprep.subr.mxu0 0.0
    %2902 = vmatpush1.msra.mxu0 0.0
    %2903 = vmatprep.subr.mxu0 0.0
    %2904 = vmatpush1.msra.mxu0 0.0
    %2905 = vmatprep.subr.mxu0 0.0
    %2906 = vmatpush1.msra.mxu0 0.0
    %2907 = vmatprep.subr.mxu0 0.0
    %2908 = vmatpush1.msra.mxu0 0.0
    %2909 = vmatprep.subr.mxu0 0.0
    %2910 = vmatpush1.msra.mxu0 0.0
    %2911 = vmatprep.subr.mxu0 0.0
    %2912 = vmatpush1.msra.mxu0 0.0
    %2913 = vmatprep.subr.mxu0 0.0
    %2914 = vmatpush1.msra.mxu0 0.0
    %2915 = vmatprep.subr.mxu0 0.0
    %2916 = vmatpush1.msra.mxu0 0.0
    %2917 = vmatprep.subr.mxu0 0.0
    %2918 = vmatpush1.msra.mxu0 0.0
    %2919 = vmatprep.subr.mxu0 0.0
    %2920 = vmatpush1.msra.mxu0 0.0
    %2921 = vmatprep.subr.mxu0 0.0
    %2922 = vmatpush1.msra.mxu0 0.0
    %2923 = vmatprep.subr.mxu0 0.0
    %2924 = vmatpush1.msra.mxu0 0.0
    %2925 = vmatprep.subr.mxu0 0.0
    %2926 = vmatpush1.msra.mxu0 0.0
    %2927 = vmatprep.subr.mxu0 0.0
    %2928 = vmatpush1.msra.mxu0 0.0
    %2929 = vmatprep.subr.mxu0 0.0
    %2930 = vmatpush1.msra.mxu0 0.0
    %2931 = vmatprep.subr.mxu0 0.0
    %2932 = vmatpush1.msra.mxu0 0.0
    %2933 = vmatprep.subr.mxu0 0.0
    %2934 = vmatpush1.msra.mxu0 0.0
    %2935 = vmatprep.subr.mxu0 0.0
    %2936 = vmatpush1.msra.mxu0 0.0
    %2937 = vmatprep.subr.mxu0 0.0
    %2938 = vmatpush1.msra.mxu0 0.0
    %2939 = vmatprep.subr.mxu0 0.0
    %2940 = vmatpush1.msra.mxu0 0.0
    %2941 = vmatprep.subr.mxu0 0.0
    %2942 = vmatpush1.msra.mxu0 0.0
    %2943 = vmatprep.subr.mxu0 0.0
    %2944 = vmatpush1.msra.mxu0 0.0
    %2945 = vmatprep.subr.mxu0 0.0
    %2946 = vmatpush1.msra.mxu0 0.0
    %2947 = vmatprep.subr.mxu0 0.0
    %2948 = vmatpush1.msra.mxu0 0.0
    %2949 = vmatprep.subr.mxu0 0.0
    %2950 = vmatpush1.msra.mxu0 0.0
    %2951 = vmatprep.subr.mxu0 0.0
    %2952 = vmatpush1.msra.mxu0 0.0
    %2953 = vmatprep.subr.mxu0 0.0
    %2954 = vmatpush1.msra.mxu0 0.0
    %2955 = vmatprep.mubr.f32.mxu0 0.0
    %2956 = vmatmul.mubr.f32.gmra.mrb[0].mxu0 %v2868
    %v2957 = vpop.f32.mrb[0].mxu0
    %v2958 = vadd.f32 %v730, %v2957
    %v2959 = vpop.f32.mrb[0].mxu0
    %2960 = vmatprep.mubr.f32.mxu0 0.0
    %2961 = vmatmul.mubr.f32.gmra.mrb[0].mxu0 %v2871
    %v2962 = vpop.f32.mrb[0].mxu0
    %v2963 = vadd.f32 %v730, %v2962
    %v2964 = vpop.f32.mrb[0].mxu0
    %2965 = vmatprep.mubr.f32.mxu0 0.0
    %2966 = vmatmul.mubr.f32.gmra.mrb[0].mxu0 %v2874
    %v2967 = vpop.f32.mrb[0].mxu0
    %v2968 = vadd.f32 %v730, %v2967
    %v2969 = vpop.f32.mrb[0].mxu0
    %2970 = vmatprep.mubr.f32.mxu0 0.0
    %2971 = vmatmul.mubr.f32.gmra.mrb[0].mxu0 %v2877
    %v2972 = vpop.f32.mrb[0].mxu0
    %v2973 = vadd.f32 %v730, %v2972
    %v2974 = vpop.f32.mrb[0].mxu0
    %2975 = vmatprep.mubr.f32.mxu0 0.0
    %2976 = vmatmul.mubr.f32.gmra.mrb[0].mxu0 %v2880
    %v2977 = vpop.f32.mrb[0].mxu0
    %v2978 = vadd.f32 %v730, %v2977
    %v2979 = vpop.f32.mrb[0].mxu0
    %2980 = vmatprep.mubr.f32.mxu0 0.0
    %2981 = vmatmul.mubr.f32.gmra.mrb[0].mxu0 %v2883
    %v2982 = vpop.f32.mrb[0].mxu0
    %v2983 = vadd.f32 %v730, %v2982
    %v2984 = vpop.f32.mrb[0].mxu0
    %2985 = vmatprep.mubr.f32.mxu0 0.0
    %2986 = vmatmul.mubr.f32.gmra.mrb[0].mxu0 %v2886
    %v2987 = vpop.f32.mrb[0].mxu0
    %v2988 = vadd.f32 %v730, %v2987
    %v2989 = vpop.f32.mrb[0].mxu0
    %2990 = vmatprep.mubr.f32.mxu0 0.0
    %2991 = vmatmul.mubr.f32.gmra.mrb[0].mxu0 %v2889
    %v2992 = vpop.f32.mrb[0].mxu0
    %v2993 = vadd.f32 %v730, %v2992
    %v2994 = vpop.f32.mrb[0].mxu0
    %2995 = vdwg.mxu0
    %v2996 = vld [vmem:[#allocation10] sm:$0xf]
    %v2997 = vld [vmem:[#allocation10 + $0x4] sm:$0xf]
    %v2998 = vld [vmem:[#allocation10 + $0x8] sm:$0xf]
    %v2999 = vld [vmem:[#allocation10 + $0xc] sm:$0xf]
    %v3000 = vld [vmem:[#allocation11] sm:$0x1]
    %v3002 = vlaneseq
    %v3003 = vshrl.u32 %v3002, 7
    %v3004 = vsub.s32 0, %v3003
    %v3005 = vrot.slane %v3000, %v3004
    %v3011 = vunpack.c.l.b16 %v2996
    %v3012 = vunpack.c.l.b16 %v2997
    %v3013 = vunpack.c.l.b16 %v2998
    %v3014 = vunpack.c.l.b16 %v2999
    %v3015 = vpack.c.b16 %v3012, %v3011
    %v3016 = vpack.c.b16 %v3014, %v3013
    %v3020 = vsel %vm445, %v2512, 0
    %3022 = vmatprep.subr.bf16.mxu0 0
    %3023 = vmatpush1.bf16.msra.mxu0 %v3015
    %3024 = vmatprep.subr.bf16.mxu0 0
    %3025 = vmatpush1.bf16.msra.mxu0 %v3016
    %3026 = vmatprep.subr.bf16.mxu0 0
    %3027 = vmatpush1.bf16.msra.mxu0 0
    %3028 = vmatprep.subr.bf16.mxu0 0
    %3029 = vmatpush1.bf16.msra.mxu0 0
    %3030 = vmatprep.subr.bf16.mxu0 0
    %3031 = vmatpush1.bf16.msra.mxu0 0
    %3032 = vmatprep.subr.bf16.mxu0 0
    %3033 = vmatpush1.bf16.msra.mxu0 0
    %3034 = vmatprep.subr.bf16.mxu0 0
    %3035 = vmatpush1.bf16.msra.mxu0 0
    %3036 = vmatprep.subr.bf16.mxu0 0
    %3037 = vmatpush1.bf16.msra.mxu0 0
    %3038 = vmatprep.subr.bf16.mxu0 0
    %3039 = vmatpush1.bf16.msra.mxu0 0
    %3040 = vmatprep.subr.bf16.mxu0 0
    %3041 = vmatpush1.bf16.msra.mxu0 0
    %3042 = vmatprep.subr.bf16.mxu0 0
    %3043 = vmatpush1.bf16.msra.mxu0 0
    %3044 = vmatprep.subr.bf16.mxu0 0
    %3045 = vmatpush1.bf16.msra.mxu0 0
    %3046 = vmatprep.subr.bf16.mxu0 0
    %3047 = vmatpush1.bf16.msra.mxu0 0
    %3048 = vmatprep.subr.bf16.mxu0 0
    %3049 = vmatpush1.bf16.msra.mxu0 0
    %3050 = vmatprep.subr.bf16.mxu0 0
    %3051 = vmatpush1.bf16.msra.mxu0 0
    %3052 = vmatprep.subr.bf16.mxu0 0
    %3053 = vmatpush1.bf16.msra.mxu0 0
    %3054 = vmatprep.mubr.bf16.mxu0 0
    %3055 = vmatmul.mubr.bf16.gmra.mrb[0].mxu0 %v3020
    %v3056 = vpop.f32.mrb[0].mxu0
    %v3057 = vadd.f32 %v3005, %v3056
    %v3058 = vpop.f32.mrb[0].mxu0
    %v3059 = vpop.f32.mrb[0].mxu0
    %v3060 = vpop.f32.mrb[0].mxu0
    %3061 = vdwg.mxu0
    %v3062 = vld [vmem:[#allocation13] sm:$0xf]
    %v3063 = vld [vmem:[#allocation13 + $0x4] sm:$0xf]
    %v3064 = vld [vmem:[#allocation13 + $0x8] sm:$0xf]
    %v3065 = vld [vmem:[#allocation13 + $0xc] sm:$0xf]
    %v3066 = vld [vmem:[#allocation14] sm:$0x1]
    %v3068 = vlaneseq
    %v3069 = vshrl.u32 %v3068, 7
    %v3070 = vsub.s32 0, %v3069
    %v3071 = vrot.slane %v3066, %v3070
    %v3077 = vunpack.c.l.b16 %v3062
    %v3078 = vunpack.c.l.b16 %v3063
    %v3079 = vunpack.c.l.b16 %v3064
    %v3080 = vunpack.c.l.b16 %v3065
    %v3081 = vpack.c.b16 %v3078, %v3077
    %v3082 = vpack.c.b16 %v3080, %v3079
    %v3086 = vsel %vm445, %v2514, 0
    %3088 = vmatprep.subr.bf16.mxu0 0
    %3089 = vmatpush1.bf16.msra.mxu0 %v3081
    %3090 = vmatprep.subr.bf16.mxu0 0
    %3091 = vmatpush1.bf16.msra.mxu0 %v3082
    %3092 = vmatprep.subr.bf16.mxu0 0
    %3093 = vmatpush1.bf16.msra.mxu0 0
    %3094 = vmatprep.subr.bf16.mxu0 0
    %3095 = vmatpush1.bf16.msra.mxu0 0
    %3096 = vmatprep.subr.bf16.mxu0 0
    %3097 = vmatpush1.bf16.msra.mxu0 0
    %3098 = vmatprep.subr.bf16.mxu0 0
    %3099 = vmatpush1.bf16.msra.mxu0 0
    %3100 = vmatprep.subr.bf16.mxu0 0
    %3101 = vmatpush1.bf16.msra.mxu0 0
    %3102 = vmatprep.subr.bf16.mxu0 0
    %3103 = vmatpush1.bf16.msra.mxu0 0
    %3104 = vmatprep.subr.bf16.mxu0 0
    %3105 = vmatpush1.bf16.msra.mxu0 0
    %3106 = vmatprep.subr.bf16.mxu0 0
    %3107 = vmatpush1.bf16.msra.mxu0 0
    %3108 = vmatprep.subr.bf16.mxu0 0
    %3109 = vmatpush1.bf16.msra.mxu0 0
    %3110 = vmatprep.subr.bf16.mxu0 0
    %3111 = vmatpush1.bf16.msra.mxu0 0
    %3112 = vmatprep.subr.bf16.mxu0 0
    %3113 = vmatpush1.bf16.msra.mxu0 0
    %3114 = vmatprep.subr.bf16.mxu0 0
    %3115 = vmatpush1.bf16.msra.mxu0 0
    %3116 = vmatprep.subr.bf16.mxu0 0
    %3117 = vmatpush1.bf16.msra.mxu0 0
    %3118 = vmatprep.subr.bf16.mxu0 0
    %3119 = vmatpush1.bf16.msra.mxu0 0
    %3120 = vmatprep.mubr.bf16.mxu0 0
    %3121 = vmatmul.mubr.bf16.gmra.mrb[0].mxu0 %v3086
    %v3122 = vpop.f32.mrb[0].mxu0
    %v3123 = vadd.f32 %v3071, %v3122
    %v3124 = vpop.f32.mrb[0].mxu0
    %v3125 = vpop.f32.mrb[0].mxu0
    %v3126 = vpop.f32.mrb[0].mxu0
    %3127 = vdwg.mxu0
    %v3128 = vld [vmem:[#allocation16] sm:$0xf]
    %v3129 = vld [vmem:[#allocation16 + $0x4] sm:$0xf]
    %v3130 = vld [vmem:[#allocation16 + $0x8] sm:$0xf]
    %v3131 = vld [vmem:[#allocation16 + $0xc] sm:$0xf]
    %v3132 = vld [vmem:[#allocation17] sm:$0x1]
    %v3134 = vlaneseq
    %v3135 = vshrl.u32 %v3134, 7
    %v3136 = vsub.s32 0, %v3135
    %v3137 = vrot.slane %v3132, %v3136
    %v3143 = vunpack.c.l.b16 %v3128
    %v3144 = vunpack.c.l.b16 %v3129
    %v3145 = vunpack.c.l.b16 %v3130
    %v3146 = vunpack.c.l.b16 %v3131
    %v3147 = vpack.c.b16 %v3144, %v3143
    %v3148 = vpack.c.b16 %v3146, %v3145
    %3151 = vmatprep.subr.bf16.mxu0 0
    %3152 = vmatpush1.bf16.msra.mxu0 %v3147
    %3153 = vmatprep.subr.bf16.mxu0 0
    %3154 = vmatpush1.bf16.msra.mxu0 %v3148
    %3155 = vmatprep.subr.bf16.mxu0 0
    %3156 = vmatpush1.bf16.msra.mxu0 0
    %3157 = vmatprep.subr.bf16.mxu0 0
    %3158 = vmatpush1.bf16.msra.mxu0 0
    %3159 = vmatprep.subr.bf16.mxu0 0
    %3160 = vmatpush1.bf16.msra.mxu0 0
    %3161 = vmatprep.subr.bf16.mxu0 0
    %3162 = vmatpush1.bf16.msra.mxu0 0
    %3163 = vmatprep.subr.bf16.mxu0 0
    %3164 = vmatpush1.bf16.msra.mxu0 0
    %3165 = vmatprep.subr.bf16.mxu0 0
    %3166 = vmatpush1.bf16.msra.mxu0 0
    %3167 = vmatprep.subr.bf16.mxu0 0
    %3168 = vmatpush1.bf16.msra.mxu0 0
    %3169 = vmatprep.subr.bf16.mxu0 0
    %3170 = vmatpush1.bf16.msra.mxu0 0
    %3171 = vmatprep.subr.bf16.mxu0 0
    %3172 = vmatpush1.bf16.msra.mxu0 0
    %3173 = vmatprep.subr.bf16.mxu0 0
    %3174 = vmatpush1.bf16.msra.mxu0 0
    %3175 = vmatprep.subr.bf16.mxu0 0
    %3176 = vmatpush1.bf16.msra.mxu0 0
    %3177 = vmatprep.subr.bf16.mxu0 0
    %3178 = vmatpush1.bf16.msra.mxu0 0
    %3179 = vmatprep.subr.bf16.mxu0 0
    %3180 = vmatpush1.bf16.msra.mxu0 0
    %3181 = vmatprep.subr.bf16.mxu0 0
    %3182 = vmatpush1.bf16.msra.mxu0 0
    %3183 = vmatprep.mubr.bf16.mxu0 0
    %3184 = vmatmul.mubr.bf16.gmra.mrb[0].mxu0 %v3086
    %v3185 = vpop.f32.mrb[0].mxu0
    %v3186 = vadd.f32 %v3137, %v3185
    %v3187 = vpop.f32.mrb[0].mxu0
    %v3188 = vpop.f32.mrb[0].mxu0
    %v3189 = vpop.f32.mrb[0].mxu0
    %3190 = vdwg.mxu0
    %3192 = vset.pattern.permute.xlu0 0
    %3193 = vperm.xlu0 %3192, %v2958
    %v3194 = vpop.permute.xlu0 %3193
    %3197 = vset.pattern.permute.xlu0 0
    %3198 = vperm.xlu0 %3197, %v2963
    %v3199 = vpop.permute.xlu0 %3198
    %3202 = vset.pattern.permute.xlu0 0
    %3203 = vperm.xlu0 %3202, %v2968
    %v3204 = vpop.permute.xlu0 %3203
    %3207 = vset.pattern.permute.xlu0 0
    %3208 = vperm.xlu0 %3207, %v2973
    %v3209 = vpop.permute.xlu0 %3208
    %3212 = vset.pattern.permute.xlu0 0
    %3213 = vperm.xlu0 %3212, %v2978
    %v3214 = vpop.permute.xlu0 %3213
    %3217 = vset.pattern.permute.xlu0 0
    %3218 = vperm.xlu0 %3217, %v2983
    %v3219 = vpop.permute.xlu0 %3218
    %3222 = vset.pattern.permute.xlu0 0
    %3223 = vperm.xlu0 %3222, %v2988
    %v3224 = vpop.permute.xlu0 %3223
    %3227 = vset.pattern.permute.xlu0 0
    %3228 = vperm.xlu0 %3227, %v2993
    %v3229 = vpop.permute.xlu0 %3228
    %v3231 = vmul.f32 %v3194, %v329
    %v3232 = vmul.f32 %v3199, %v330
    %v3233 = vmul.f32 %v3204, %v331
    %v3234 = vmul.f32 %v3209, %v332
    %v3235 = vmul.f32 %v3214, %v333
    %v3236 = vmul.f32 %v3219, %v334
    %v3237 = vmul.f32 %v3224, %v335
    %v3238 = vmul.f32 %v3229, %v336
    %v3239 = vsel %vm368, %v3231, 0.0
    %v3240 = vsel %vm368, %v3232, 0.0
    %v3241 = vadd.f32 %v3239, %v3240
    %v3242 = vsel %vm368, %v3233, 0.0
    %v3243 = vadd.f32 %v3241, %v3242
    %v3244 = vsel %vm368, %v3234, 0.0
    %v3245 = vadd.f32 %v3243, %v3244
    %v3246 = vsel %vm368, %v3235, 0.0
    %v3247 = vadd.f32 %v3245, %v3246
    %v3248 = vsel %vm368, %v3236, 0.0
    %v3249 = vadd.f32 %v3247, %v3248
    %v3250 = vsel %vm368, %v3237, 0.0
    %v3251 = vadd.f32 %v3249, %v3250
    %v3252 = vsel %vm368, %v3238, 0.0
    %v3253 = vadd.f32 %v3251, %v3252
    %v3254 = vpack.c.bf16 %v3057, %v3057
    %v3255 = vpack.c.bf16 %v3123, %v3123
    %v3257 = vsel %vm368, %v3254, 0
    %v3260 = vsel %vm368, %v3255, 0
    %3262 = vmatprep.subr.bf16.mxu0 0
    %3263 = vmatpush1.bf16.xpose.msra.mxu0 %v3260
    %3264 = vmatprep.subr.bf16.mxu0 0
    %3265 = vmatpush1.bf16.xpose.msra.mxu0 0
    %3266 = vmatprep.subr.bf16.mxu0 0
    %3267 = vmatpush1.bf16.xpose.msra.mxu0 0
    %3268 = vmatprep.subr.bf16.mxu0 0
    %3269 = vmatpush1.bf16.xpose.msra.mxu0 0
    %3270 = vmatprep.subr.bf16.mxu0 0
    %3271 = vmatpush1.bf16.xpose.msra.mxu0 0
    %3272 = vmatprep.subr.bf16.mxu0 0
    %3273 = vmatpush1.bf16.xpose.msra.mxu0 0
    %3274 = vmatprep.subr.bf16.mxu0 0
    %3275 = vmatpush1.bf16.xpose.msra.mxu0 0
    %3276 = vmatprep.subr.bf16.mxu0 0
    %3277 = vmatpush1.bf16.xpose.msra.mxu0 0
    %3278 = vmatprep.subr.bf16.mxu0 0
    %3279 = vmatpush1.bf16.xpose.msra.mxu0 0
    %3280 = vmatprep.subr.bf16.mxu0 0
    %3281 = vmatpush1.bf16.xpose.msra.mxu0 0
    %3282 = vmatprep.subr.bf16.mxu0 0
    %3283 = vmatpush1.bf16.xpose.msra.mxu0 0
    %3284 = vmatprep.subr.bf16.mxu0 0
    %3285 = vmatpush1.bf16.xpose.msra.mxu0 0
    %3286 = vmatprep.subr.bf16.mxu0 0
    %3287 = vmatpush1.bf16.xpose.msra.mxu0 0
    %3288 = vmatprep.subr.bf16.mxu0 0
    %3289 = vmatpush1.bf16.xpose.msra.mxu0 0
    %3290 = vmatprep.subr.bf16.mxu0 0
    %3291 = vmatpush1.bf16.xpose.msra.mxu0 0
    %3292 = vmatprep.subr.bf16.mxu0 0
    %3293 = vmatpush1.bf16.xpose.msra.mxu0 0
    %3294 = vmatprep.mubr.bf16.mxu0 0
    %3295 = vmatmul.mubr.bf16.gmra.mrb[0].mxu0 %v3257
    %v3296 = vpop.f32.mrb[0].mxu0
    %v3297 = vadd.f32 %v3253, %v3296
    %v3298 = vpop.f32.mrb[0].mxu0
    %v3299 = vpop.f32.mrb[0].mxu0
    %v3300 = vpop.f32.mrb[0].mxu0
    %3301 = vdwg.mxu0
    %v3302 = vmul.f32 %v3297, %v2518
    %v3303 = vadd.f32 %v3302, %v2520
    %v3304 = vsel %vm368, %v3303, -inf
    %3305 = vmax.xlane.f32.xlu0 %v3304
    %v3306 = vpop.xlane.xlu0 %3305
    %v3307 = vsub.f32 %v3303, %v3306
    %v3308 = vmul.f32 %v3307, 1.442695
    %v3309 = vpow.pop %v3308
    %v3310 = vsel %vm368, %v3309, 0.0
    %3311 = vadd.xlane.f32.xlu0 %v3310
    %v3312 = vpop.xlane.xlu0 %3311
    %v3313 = vrcp.pop %v3312
    %v3314 = vmul.f32 %v3309, %v3313
    %v3315 = vpack.c.bf16 %v3314, %v3314
    %v3316 = vpack.c.bf16 %v3186, %v3186
    %v3318 = vsel %vm368, %v3315, 0
    %v3321 = vsel %vm1185, %v3316, 0
    %3323 = vmatprep.subr.bf16.mxu0 0
    %3324 = vmatpush1.bf16.msra.mxu0 %v3321
    %3325 = vmatprep.subr.bf16.mxu0 0
    %3326 = vmatpush1.bf16.msra.mxu0 0
    %3327 = vmatprep.subr.bf16.mxu0 0
    %3328 = vmatpush1.bf16.msra.mxu0 0
    %3329 = vmatprep.subr.bf16.mxu0 0
    %3330 = vmatpush1.bf16.msra.mxu0 0
    %3331 = vmatprep.subr.bf16.mxu0 0
    %3332 = vmatpush1.bf16.msra.mxu0 0
    %3333 = vmatprep.subr.bf16.mxu0 0
    %3334 = vmatpush1.bf16.msra.mxu0 0
    %3335 = vmatprep.subr.bf16.mxu0 0
    %3336 = vmatpush1.bf16.msra.mxu0 0
    %3337 = vmatprep.subr.bf16.mxu0 0
    %3338 = vmatpush1.bf16.msra.mxu0 0
    %3339 = vmatprep.subr.bf16.mxu0 0
    %3340 = vmatpush1.bf16.msra.mxu0 0
    %3341 = vmatprep.subr.bf16.mxu0 0
    %3342 = vmatpush1.bf16.msra.mxu0 0
    %3343 = vmatprep.subr.bf16.mxu0 0
    %3344 = vmatpush1.bf16.msra.mxu0 0
    %3345 = vmatprep.subr.bf16.mxu0 0
    %3346 = vmatpush1.bf16.msra.mxu0 0
    %3347 = vmatprep.subr.bf16.mxu0 0
    %3348 = vmatpush1.bf16.msra.mxu0 0
    %3349 = vmatprep.subr.bf16.mxu0 0
    %3350 = vmatpush1.bf16.msra.mxu0 0
    %3351 = vmatprep.subr.bf16.mxu0 0
    %3352 = vmatpush1.bf16.msra.mxu0 0
    %3353 = vmatprep.subr.bf16.mxu0 0
    %3354 = vmatpush1.bf16.msra.mxu0 0
    %3355 = vmatprep.mubr.bf16.mxu0 0
    %3356 = vmatmul.mubr.bf16.gmra.mrb[0].mxu0 %v3318
    %v3357 = vpop.f32.mrb[0].mxu0
    %v3358 = vadd.f32 0.0, %v3357
    %v3359 = vpop.f32.mrb[0].mxu0
    %v3360 = vpop.f32.mrb[0].mxu0
    %v3361 = vpop.f32.mrb[0].mxu0
    %3362 = vdwg.mxu0
    %v3363 = vpack.c.bf16 %v3358, %v3358
    %v3364 = vld [vmem:[#allocation19] sm:$0xf]
    %v3365 = vld [vmem:[%s1231] sm:$0xf]
    %v3366 = vld [vmem:[%s1231 + $0x4] sm:$0xf]
    %v3367 = vld [vmem:[%s1231 + $0x8] sm:$0xf]
    %v3368 = vld [vmem:[%s1231 + $0xc] sm:$0xf]
    %v3369 = vld [vmem:[%s1236] sm:$0x1]
    %v3371 = vlaneseq
    %v3372 = vshrl.u32 %v3371, 7
    %v3373 = vsub.s32 0, %v3372
    %v3374 = vrot.slane %v3369, %v3373
    %v3380 = vunpack.c.l.b16 %v3365
    %v3381 = vunpack.c.l.b16 %v3366
    %v3382 = vunpack.c.l.b16 %v3367
    %v3383 = vunpack.c.l.b16 %v3368
    %v3384 = vpack.c.b16 %v3381, %v3380
    %v3385 = vpack.c.b16 %v3383, %v3382
    %3388 = vmatprep.subr.bf16.mxu0 0
    %3389 = vmatpush1.bf16.msra.mxu0 %v3384
    %3390 = vmatprep.subr.bf16.mxu0 0
    %3391 = vmatpush1.bf16.msra.mxu0 %v3385
    %3392 = vmatprep.subr.bf16.mxu0 0
    %3393 = vmatpush1.bf16.msra.mxu0 0
    %3394 = vmatprep.subr.bf16.mxu0 0
    %3395 = vmatpush1.bf16.msra.mxu0 0
    %3396 = vmatprep.subr.bf16.mxu0 0
    %3397 = vmatpush1.bf16.msra.mxu0 0
    %3398 = vmatprep.subr.bf16.mxu0 0
    %3399 = vmatpush1.bf16.msra.mxu0 0
    %3400 = vmatprep.subr.bf16.mxu0 0
    %3401 = vmatpush1.bf16.msra.mxu0 0
    %3402 = vmatprep.subr.bf16.mxu0 0
    %3403 = vmatpush1.bf16.msra.mxu0 0
    %3404 = vmatprep.subr.bf16.mxu0 0
    %3405 = vmatpush1.bf16.msra.mxu0 0
    %3406 = vmatprep.subr.bf16.mxu0 0
    %3407 = vmatpush1.bf16.msra.mxu0 0
    %3408 = vmatprep.subr.bf16.mxu0 0
    %3409 = vmatpush1.bf16.msra.mxu0 0
    %3410 = vmatprep.subr.bf16.mxu0 0
    %3411 = vmatpush1.bf16.msra.mxu0 0
    %3412 = vmatprep.subr.bf16.mxu0 0
    %3413 = vmatpush1.bf16.msra.mxu0 0
    %3414 = vmatprep.subr.bf16.mxu0 0
    %3415 = vmatpush1.bf16.msra.mxu0 0
    %3416 = vmatprep.subr.bf16.mxu0 0
    %3417 = vmatpush1.bf16.msra.mxu0 0
    %3418 = vmatprep.subr.bf16.mxu0 0
    %3419 = vmatpush1.bf16.msra.mxu0 0
    %3420 = vmatprep.mubr.bf16.mxu0 0
    %3421 = vmatmul.mubr.bf16.gmra.mrb[0].mxu0 %v3020
    %v3422 = vpop.f32.mrb[0].mxu0
    %v3423 = vadd.f32 %v3374, %v3422
    %v3424 = vpop.f32.mrb[0].mxu0
    %v3425 = vpop.f32.mrb[0].mxu0
    %v3426 = vpop.f32.mrb[0].mxu0
    %3427 = vdwg.mxu0
    %v3428 = vld [vmem:[%s1296] sm:$0xf]
    %v3429 = vld [vmem:[%s1296 + $0x4] sm:$0xf]
    %v3430 = vld [vmem:[%s1296 + $0x8] sm:$0xf]
    %v3431 = vld [vmem:[%s1296 + $0xc] sm:$0xf]
    %v3432 = vld [vmem:[%s1301] sm:$0x1]
    %v3434 = vlaneseq
    %v3435 = vshrl.u32 %v3434, 7
    %v3436 = vsub.s32 0, %v3435
    %v3437 = vrot.slane %v3432, %v3436
    %v3443 = vunpack.c.l.b16 %v3428
    %v3444 = vunpack.c.l.b16 %v3429
    %v3445 = vunpack.c.l.b16 %v3430
    %v3446 = vunpack.c.l.b16 %v3431
    %v3447 = vpack.c.b16 %v3444, %v3443
    %v3448 = vpack.c.b16 %v3446, %v3445
    %3451 = vmatprep.subr.bf16.mxu0 0
    %3452 = vmatpush1.bf16.msra.mxu0 %v3447
    %3453 = vmatprep.subr.bf16.mxu0 0
    %3454 = vmatpush1.bf16.msra.mxu0 %v3448
    %3455 = vmatprep.subr.bf16.mxu0 0
    %3456 = vmatpush1.bf16.msra.mxu0 0
    %3457 = vmatprep.subr.bf16.mxu0 0
    %3458 = vmatpush1.bf16.msra.mxu0 0
    %3459 = vmatprep.subr.bf16.mxu0 0
    %3460 = vmatpush1.bf16.msra.mxu0 0
    %3461 = vmatprep.subr.bf16.mxu0 0
    %3462 = vmatpush1.bf16.msra.mxu0 0
    %3463 = vmatprep.subr.bf16.mxu0 0
    %3464 = vmatpush1.bf16.msra.mxu0 0
    %3465 = vmatprep.subr.bf16.mxu0 0
    %3466 = vmatpush1.bf16.msra.mxu0 0
    %3467 = vmatprep.subr.bf16.mxu0 0
    %3468 = vmatpush1.bf16.msra.mxu0 0
    %3469 = vmatprep.subr.bf16.mxu0 0
    %3470 = vmatpush1.bf16.msra.mxu0 0
    %3471 = vmatprep.subr.bf16.mxu0 0
    %3472 = vmatpush1.bf16.msra.mxu0 0
    %3473 = vmatprep.subr.bf16.mxu0 0
    %3474 = vmatpush1.bf16.msra.mxu0 0
    %3475 = vmatprep.subr.bf16.mxu0 0
    %3476 = vmatpush1.bf16.msra.mxu0 0
    %3477 = vmatprep.subr.bf16.mxu0 0
    %3478 = vmatpush1.bf16.msra.mxu0 0
    %3479 = vmatprep.subr.bf16.mxu0 0
    %3480 = vmatpush1.bf16.msra.mxu0 0
    %3481 = vmatprep.subr.bf16.mxu0 0
    %3482 = vmatpush1.bf16.msra.mxu0 0
    %3483 = vmatprep.mubr.bf16.mxu0 0
    %3484 = vmatmul.mubr.bf16.gmra.mrb[0].mxu0 %v3086
    %v3485 = vpop.f32.mrb[0].mxu0
    %v3486 = vadd.f32 %v3437, %v3485
    %v3487 = vpop.f32.mrb[0].mxu0
    %v3488 = vpop.f32.mrb[0].mxu0
    %v3489 = vpop.f32.mrb[0].mxu0
    %3490 = vdwg.mxu0
    %v3491 = vld [vmem:[%s1361] sm:$0xf]
    %v3492 = vld [vmem:[%s1361 + $0x4] sm:$0xf]
    %v3493 = vld [vmem:[%s1361 + $0x8] sm:$0xf]
    %v3494 = vld [vmem:[%s1361 + $0xc] sm:$0xf]
    %v3495 = vld [vmem:[%s1366] sm:$0x1]
    %v3497 = vlaneseq
    %v3498 = vshrl.u32 %v3497, 7
    %v3499 = vsub.s32 0, %v3498
    %v3500 = vrot.slane %v3495, %v3499
    %v3506 = vunpack.c.l.b16 %v3491
    %v3507 = vunpack.c.l.b16 %v3492
    %v3508 = vunpack.c.l.b16 %v3493
    %v3509 = vunpack.c.l.b16 %v3494
    %v3510 = vpack.c.b16 %v3507, %v3506
    %v3511 = vpack.c.b16 %v3509, %v3508
    %3514 = vmatprep.subr.bf16.mxu0 0
    %3515 = vmatpush1.bf16.msra.mxu0 %v3510
    %3516 = vmatprep.subr.bf16.mxu0 0
    %3517 = vmatpush1.bf16.msra.mxu0 %v3511
    %3518 = vmatprep.subr.bf16.mxu0 0
    %3519 = vmatpush1.bf16.msra.mxu0 0
    %3520 = vmatprep.subr.bf16.mxu0 0
    %3521 = vmatpush1.bf16.msra.mxu0 0
    %3522 = vmatprep.subr.bf16.mxu0 0
    %3523 = vmatpush1.bf16.msra.mxu0 0
    %3524 = vmatprep.subr.bf16.mxu0 0
    %3525 = vmatpush1.bf16.msra.mxu0 0
    %3526 = vmatprep.subr.bf16.mxu0 0
    %3527 = vmatpush1.bf16.msra.mxu0 0
    %3528 = vmatprep.subr.bf16.mxu0 0
    %3529 = vmatpush1.bf16.msra.mxu0 0
    %3530 = vmatprep.subr.bf16.mxu0 0
    %3531 = vmatpush1.bf16.msra.mxu0 0
    %3532 = vmatprep.subr.bf16.mxu0 0
    %3533 = vmatpush1.bf16.msra.mxu0 0
    %3534 = vmatprep.subr.bf16.mxu0 0
    %3535 = vmatpush1.bf16.msra.mxu0 0
    %3536 = vmatprep.subr.bf16.mxu0 0
    %3537 = vmatpush1.bf16.msra.mxu0 0
    %3538 = vmatprep.subr.bf16.mxu0 0
    %3539 = vmatpush1.bf16.msra.mxu0 0
    %3540 = vmatprep.subr.bf16.mxu0 0
    %3541 = vmatpush1.bf16.msra.mxu0 0
    %3542 = vmatprep.subr.bf16.mxu0 0
    %3543 = vmatpush1.bf16.msra.mxu0 0
    %3544 = vmatprep.subr.bf16.mxu0 0
    %3545 = vmatpush1.bf16.msra.mxu0 0
    %3546 = vmatprep.mubr.bf16.mxu0 0
    %3547 = vmatmul.mubr.bf16.gmra.mrb[0].mxu0 %v3086
    %v3548 = vpop.f32.mrb[0].mxu0
    %v3549 = vadd.f32 %v3500, %v3548
    %v3550 = vpop.f32.mrb[0].mxu0
    %v3551 = vpop.f32.mrb[0].mxu0
    %v3552 = vpop.f32.mrb[0].mxu0
    %3553 = vdwg.mxu0
    %3554 = vset.pattern.permute.xlu0 1
    %3555 = vperm.xlu0 %3554, %v2958
    %v3556 = vpop.permute.xlu0 %3555
    %3558 = vset.pattern.permute.xlu0 1
    %3559 = vperm.xlu0 %3558, %v2963
    %v3560 = vpop.permute.xlu0 %3559
    %3562 = vset.pattern.permute.xlu0 1
    %3563 = vperm.xlu0 %3562, %v2968
    %v3564 = vpop.permute.xlu0 %3563
    %3566 = vset.pattern.permute.xlu0 1
    %3567 = vperm.xlu0 %3566, %v2973
    %v3568 = vpop.permute.xlu0 %3567
    %3570 = vset.pattern.permute.xlu0 1
    %3571 = vperm.xlu0 %3570, %v2978
    %v3572 = vpop.permute.xlu0 %3571
    %3574 = vset.pattern.permute.xlu0 1
    %3575 = vperm.xlu0 %3574, %v2983
    %v3576 = vpop.permute.xlu0 %3575
    %3578 = vset.pattern.permute.xlu0 1
    %3579 = vperm.xlu0 %3578, %v2988
    %v3580 = vpop.permute.xlu0 %3579
    %3582 = vset.pattern.permute.xlu0 1
    %3583 = vperm.xlu0 %3582, %v2993
    %v3584 = vpop.permute.xlu0 %3583
    %v3586 = vmul.f32 %v3556, %v329
    %v3587 = vmul.f32 %v3560, %v330
    %v3588 = vmul.f32 %v3564, %v331
    %v3589 = vmul.f32 %v3568, %v332
    %v3590 = vmul.f32 %v3572, %v333
    %v3591 = vmul.f32 %v3576, %v334
    %v3592 = vmul.f32 %v3580, %v335
    %v3593 = vmul.f32 %v3584, %v336
    %v3594 = vsel %vm368, %v3586, 0.0
    %v3595 = vsel %vm368, %v3587, 0.0
    %v3596 = vadd.f32 %v3594, %v3595
    %v3597 = vsel %vm368, %v3588, 0.0
    %v3598 = vadd.f32 %v3596, %v3597
    %v3599 = vsel %vm368, %v3589, 0.0
    %v3600 = vadd.f32 %v3598, %v3599
    %v3601 = vsel %vm368, %v3590, 0.0
    %v3602 = vadd.f32 %v3600, %v3601
    %v3603 = vsel %vm368, %v3591, 0.0
    %v3604 = vadd.f32 %v3602, %v3603
    %v3605 = vsel %vm368, %v3592, 0.0
    %v3606 = vadd.f32 %v3604, %v3605
    %v3607 = vsel %vm368, %v3593, 0.0
    %v3608 = vadd.f32 %v3606, %v3607
    %v3609 = vpack.c.bf16 %v3423, %v3423
    %v3610 = vpack.c.bf16 %v3486, %v3486
    %v3612 = vsel %vm368, %v3609, 0
    %v3615 = vsel %vm368, %v3610, 0
    %3617 = vmatprep.subr.bf16.mxu0 0
    %3618 = vmatpush1.bf16.xpose.msra.mxu0 %v3615
    %3619 = vmatprep.subr.bf16.mxu0 0
    %3620 = vmatpush1.bf16.xpose.msra.mxu0 0
    %3621 = vmatprep.subr.bf16.mxu0 0
    %3622 = vmatpush1.bf16.xpose.msra.mxu0 0
    %3623 = vmatprep.subr.bf16.mxu0 0
    %3624 = vmatpush1.bf16.xpose.msra.mxu0 0
    %3625 = vmatprep.subr.bf16.mxu0 0
    %3626 = vmatpush1.bf16.xpose.msra.mxu0 0
    %3627 = vmatprep.subr.bf16.mxu0 0
    %3628 = vmatpush1.bf16.xpose.msra.mxu0 0
    %3629 = vmatprep.subr.bf16.mxu0 0
    %3630 = vmatpush1.bf16.xpose.msra.mxu0 0
    %3631 = vmatprep.subr.bf16.mxu0 0
    %3632 = vmatpush1.bf16.xpose.msra.mxu0 0
    %3633 = vmatprep.subr.bf16.mxu0 0
    %3634 = vmatpush1.bf16.xpose.msra.mxu0 0
    %3635 = vmatprep.subr.bf16.mxu0 0
    %3636 = vmatpush1.bf16.xpose.msra.mxu0 0
    %3637 = vmatprep.subr.bf16.mxu0 0
    %3638 = vmatpush1.bf16.xpose.msra.mxu0 0
    %3639 = vmatprep.subr.bf16.mxu0 0
    %3640 = vmatpush1.bf16.xpose.msra.mxu0 0
    %3641 = vmatprep.subr.bf16.mxu0 0
    %3642 = vmatpush1.bf16.xpose.msra.mxu0 0
    %3643 = vmatprep.subr.bf16.mxu0 0
    %3644 = vmatpush1.bf16.xpose.msra.mxu0 0
    %3645 = vmatprep.subr.bf16.mxu0 0
    %3646 = vmatpush1.bf16.xpose.msra.mxu0 0
    %3647 = vmatprep.subr.bf16.mxu0 0
    %3648 = vmatpush1.bf16.xpose.msra.mxu0 0
    %3649 = vmatprep.mubr.bf16.mxu0 0
    %3650 = vmatmul.mubr.bf16.gmra.mrb[0].mxu0 %v3612
    %v3651 = vpop.f32.mrb[0].mxu0
    %v3652 = vadd.f32 %v3608, %v3651
    %v3653 = vpop.f32.mrb[0].mxu0
    %v3654 = vpop.f32.mrb[0].mxu0
    %v3655 = vpop.f32.mrb[0].mxu0
    %3656 = vdwg.mxu0
    %v3657 = vmul.f32 %v3652, %v2518
    %v3658 = vadd.f32 %v3657, %v2520
    %v3659 = vsel %vm368, %v3658, -inf
    %3660 = vmax.xlane.f32.xlu0 %v3659
    %v3661 = vpop.xlane.xlu0 %3660
    %v3662 = vsub.f32 %v3658, %v3661
    %v3663 = vmul.f32 %v3662, 1.442695
    %v3664 = vpow.pop %v3663
    %v3665 = vsel %vm368, %v3664, 0.0
    %3666 = vadd.xlane.f32.xlu0 %v3665
    %v3667 = vpop.xlane.xlu0 %3666
    %v3668 = vrcp.pop %v3667
    %v3669 = vmul.f32 %v3664, %v3668
    %v3670 = vpack.c.bf16 %v3669, %v3669
    %v3671 = vpack.c.bf16 %v3549, %v3549
    %v3673 = vsel %vm368, %v3670, 0
    %v3676 = vsel %vm1185, %v3671, 0
    %3678 = vmatprep.subr.bf16.mxu0 0
    %3679 = vmatpush1.bf16.msra.mxu0 %v3676
    %3680 = vmatprep.subr.bf16.mxu0 0
    %3681 = vmatpush1.bf16.msra.mxu0 0
    %3682 = vmatprep.subr.bf16.mxu0 0
    %3683 = vmatpush1.bf16.msra.mxu0 0
    %3684 = vmatprep.subr.bf16.mxu0 0
    %3685 = vmatpush1.bf16.msra.mxu0 0
    %3686 = vmatprep.subr.bf16.mxu0 0
    %3687 = vmatpush1.bf16.msra.mxu0 0
    %3688 = vmatprep.subr.bf16.mxu0 0
    %3689 = vmatpush1.bf16.msra.mxu0 0
    %3690 = vmatprep.subr.bf16.mxu0 0
    %3691 = vmatpush1.bf16.msra.mxu0 0
    %3692 = vmatprep.subr.bf16.mxu0 0
    %3693 = vmatpush1.bf16.msra.mxu0 0
    %3694 = vmatprep.subr.bf16.mxu0 0
    %3695 = vmatpush1.bf16.msra.mxu0 0
    %3696 = vmatprep.subr.bf16.mxu0 0
    %3697 = vmatpush1.bf16.msra.mxu0 0
    %3698 = vmatprep.subr.bf16.mxu0 0
    %3699 = vmatpush1.bf16.msra.mxu0 0
    %3700 = vmatprep.subr.bf16.mxu0 0
    %3701 = vmatpush1.bf16.msra.mxu0 0
    %3702 = vmatprep.subr.bf16.mxu0 0
    %3703 = vmatpush1.bf16.msra.mxu0 0
    %3704 = vmatprep.subr.bf16.mxu0 0
    %3705 = vmatpush1.bf16.msra.mxu0 0
    %3706 = vmatprep.subr.bf16.mxu0 0
    %3707 = vmatpush1.bf16.msra.mxu0 0
    %3708 = vmatprep.subr.bf16.mxu0 0
    %3709 = vmatpush1.bf16.msra.mxu0 0
    %3710 = vmatprep.mubr.bf16.mxu0 0
    %3711 = vmatmul.mubr.bf16.gmra.mrb[0].mxu0 %v3673
    %v3712 = vpop.f32.mrb[0].mxu0
    %v3713 = vadd.f32 0.0, %v3712
    %v3714 = vpop.f32.mrb[0].mxu0
    %v3715 = vpop.f32.mrb[0].mxu0
    %v3716 = vpop.f32.mrb[0].mxu0
    %3717 = vdwg.mxu0
    %v3718 = vpack.c.bf16 %v3713, %v3713
    %v3719 = vld [vmem:[%s1591] sm:$0xf]
    %v3721 = vsel %vm368, %v3718, 0
    %v3724 = vsel %vm1185, %v3719, 0
    %3726 = vmatprep.subr.bf16.mxu0 0
    %3727 = vmatpush1.bf16.msra.mxu0 %v3724
    %3728 = vmatprep.subr.bf16.mxu0 0
    %3729 = vmatpush1.bf16.msra.mxu0 0
    %3730 = vmatprep.subr.bf16.mxu0 0
    %3731 = vmatpush1.bf16.msra.mxu0 0
    %3732 = vmatprep.subr.bf16.mxu0 0
    %3733 = vmatpush1.bf16.msra.mxu0 0
    %3734 = vmatprep.subr.bf16.mxu0 0
    %3735 = vmatpush1.bf16.msra.mxu0 0
    %3736 = vmatprep.subr.bf16.mxu0 0
    %3737 = vmatpush1.bf16.msra.mxu0 0
    %3738 = vmatprep.subr.bf16.mxu0 0
    %3739 = vmatpush1.bf16.msra.mxu0 0
    %3740 = vmatprep.subr.bf16.mxu0 0
    %3741 = vmatpush1.bf16.msra.mxu0 0
    %3742 = vmatprep.subr.bf16.mxu0 0
    %3743 = vmatpush1.bf16.msra.mxu0 0
    %3744 = vmatprep.subr.bf16.mxu0 0
    %3745 = vmatpush1.bf16.msra.mxu0 0
    %3746 = vmatprep.subr.bf16.mxu0 0
    %3747 = vmatpush1.bf16.msra.mxu0 0
    %3748 = vmatprep.subr.bf16.mxu0 0
    %3749 = vmatpush1.bf16.msra.mxu0 0
    %3750 = vmatprep.subr.bf16.mxu0 0
    %3751 = vmatpush1.bf16.msra.mxu0 0
    %3752 = vmatprep.subr.bf16.mxu0 0
    %3753 = vmatpush1.bf16.msra.mxu0 0
    %3754 = vmatprep.subr.bf16.mxu0 0
    %3755 = vmatpush1.bf16.msra.mxu0 0
    %3756 = vmatprep.subr.bf16.mxu0 0
    %3757 = vmatpush1.bf16.msra.mxu0 0
    %3758 = vmatprep.mubr.bf16.mxu0 0
    %3759 = vmatmul.mubr.bf16.gmra.mrb[0].mxu0 %v3721
    %v3760 = vpop.f32.mrb[0].mxu0
    %v3761 = vadd.f32 0.0, %v3760
    %v3762 = vpop.f32.mrb[0].mxu0
    %v3763 = vpop.f32.mrb[0].mxu0
    %v3764 = vpop.f32.mrb[0].mxu0
    %3765 = vdwg.mxu0
    %v3767 = vsel %vm368, %v3363, 0
    %v3770 = vsel %vm1185, %v3364, 0
    %3772 = vmatprep.subr.bf16.mxu0 0
    %3773 = vmatpush1.bf16.msra.mxu0 %v3770
    %3774 = vmatprep.subr.bf16.mxu0 0
    %3775 = vmatpush1.bf16.msra.mxu0 0
    %3776 = vmatprep.subr.bf16.mxu0 0
    %3777 = vmatpush1.bf16.msra.mxu0 0
    %3778 = vmatprep.subr.bf16.mxu0 0
    %3779 = vmatpush1.bf16.msra.mxu0 0
    %3780 = vmatprep.subr.bf16.mxu0 0
    %3781 = vmatpush1.bf16.msra.mxu0 0
    %3782 = vmatprep.subr.bf16.mxu0 0
    %3783 = vmatpush1.bf16.msra.mxu0 0
    %3784 = vmatprep.subr.bf16.mxu0 0
    %3785 = vmatpush1.bf16.msra.mxu0 0
    %3786 = vmatprep.subr.bf16.mxu0 0
    %3787 = vmatpush1.bf16.msra.mxu0 0
    %3788 = vmatprep.subr.bf16.mxu0 0
    %3789 = vmatpush1.bf16.msra.mxu0 0
    %3790 = vmatprep.subr.bf16.mxu0 0
    %3791 = vmatpush1.bf16.msra.mxu0 0
    %3792 = vmatprep.subr.bf16.mxu0 0
    %3793 = vmatpush1.bf16.msra.mxu0 0
    %3794 = vmatprep.subr.bf16.mxu0 0
    %3795 = vmatpush1.bf16.msra.mxu0 0
    %3796 = vmatprep.subr.bf16.mxu0 0
    %3797 = vmatpush1.bf16.msra.mxu0 0
    %3798 = vmatprep.subr.bf16.mxu0 0
    %3799 = vmatpush1.bf16.msra.mxu0 0
    %3800 = vmatprep.subr.bf16.mxu0 0
    %3801 = vmatpush1.bf16.msra.mxu0 0
    %3802 = vmatprep.subr.bf16.mxu0 0
    %3803 = vmatpush1.bf16.msra.mxu0 0
    %3804 = vmatprep.mubr.bf16.mxu0 0
    %3805 = vmatmul.mubr.bf16.gmra.mrb[0].mxu0 %v3767
    %v3806 = vpop.f32.mrb[0].mxu0
    %v3807 = vadd.f32 %v3761, %v3806
    %v3808 = vpop.f32.mrb[0].mxu0
    %v3809 = vpop.f32.mrb[0].mxu0
    %v3810 = vpop.f32.mrb[0].mxu0
    %3811 = vdwg.mxu0
    %v3812 = vld [vmem:[%s1685] sm:$0xf]
    %v3813 = vld [vmem:[%s1685 + $0x4] sm:$0xf]
    %v3814 = vld [vmem:[%s1685 + $0x8] sm:$0xf]
    %v3815 = vld [vmem:[%s1685 + $0xc] sm:$0xf]
    %v3816 = vld [vmem:[%s1690] sm:$0x1]
    %v3818 = vlaneseq
    %v3819 = vshrl.u32 %v3818, 7
    %v3820 = vsub.s32 0, %v3819
    %v3821 = vrot.slane %v3816, %v3820
    %v3827 = vunpack.c.l.b16 %v3812
    %v3828 = vunpack.c.l.b16 %v3813
    %v3829 = vunpack.c.l.b16 %v3814
    %v3830 = vunpack.c.l.b16 %v3815
    %v3831 = vpack.c.b16 %v3828, %v3827
    %v3832 = vpack.c.b16 %v3830, %v3829
    %3835 = vmatprep.subr.bf16.mxu0 0
    %3836 = vmatpush1.bf16.msra.mxu0 %v3831
    %3837 = vmatprep.subr.bf16.mxu0 0
    %3838 = vmatpush1.bf16.msra.mxu0 %v3832
    %3839 = vmatprep.subr.bf16.mxu0 0
    %3840 = vmatpush1.bf16.msra.mxu0 0
    %3841 = vmatprep.subr.bf16.mxu0 0
    %3842 = vmatpush1.bf16.msra.mxu0 0
    %3843 = vmatprep.subr.bf16.mxu0 0
    %3844 = vmatpush1.bf16.msra.mxu0 0
    %3845 = vmatprep.subr.bf16.mxu0 0
    %3846 = vmatpush1.bf16.msra.mxu0 0
    %3847 = vmatprep.subr.bf16.mxu0 0
    %3848 = vmatpush1.bf16.msra.mxu0 0
    %3849 = vmatprep.subr.bf16.mxu0 0
    %3850 = vmatpush1.bf16.msra.mxu0 0
    %3851 = vmatprep.subr.bf16.mxu0 0
    %3852 = vmatpush1.bf16.msra.mxu0 0
    %3853 = vmatprep.subr.bf16.mxu0 0
    %3854 = vmatpush1.bf16.msra.mxu0 0
    %3855 = vmatprep.subr.bf16.mxu0 0
    %3856 = vmatpush1.bf16.msra.mxu0 0
    %3857 = vmatprep.subr.bf16.mxu0 0
    %3858 = vmatpush1.bf16.msra.mxu0 0
    %3859 = vmatprep.subr.bf16.mxu0 0
    %3860 = vmatpush1.bf16.msra.mxu0 0
    %3861 = vmatprep.subr.bf16.mxu0 0
    %3862 = vmatpush1.bf16.msra.mxu0 0
    %3863 = vmatprep.subr.bf16.mxu0 0
    %3864 = vmatpush1.bf16.msra.mxu0 0
    %3865 = vmatprep.subr.bf16.mxu0 0
    %3866 = vmatpush1.bf16.msra.mxu0 0
    %3867 = vmatprep.mubr.bf16.mxu0 0
    %3868 = vmatmul.mubr.bf16.gmra.mrb[0].mxu0 %v3020
    %v3869 = vpop.f32.mrb[0].mxu0
    %v3870 = vadd.f32 %v3821, %v3869
    %v3871 = vpop.f32.mrb[0].mxu0
    %v3872 = vpop.f32.mrb[0].mxu0
    %v3873 = vpop.f32.mrb[0].mxu0
    %3874 = vdwg.mxu0
    %v3875 = vld [vmem:[%s1750] sm:$0xf]
    %v3876 = vld [vmem:[%s1750 + $0x4] sm:$0xf]
    %v3877 = vld [vmem:[%s1750 + $0x8] sm:$0xf]
    %v3878 = vld [vmem:[%s1750 + $0xc] sm:$0xf]
    %v3879 = vld [vmem:[%s1755] sm:$0x1]
    %v3881 = vlaneseq
    %v3882 = vshrl.u32 %v3881, 7
    %v3883 = vsub.s32 0, %v3882
    %v3884 = vrot.slane %v3879, %v3883
    %v3890 = vunpack.c.l.b16 %v3875
    %v3891 = vunpack.c.l.b16 %v3876
    %v3892 = vunpack.c.l.b16 %v3877
    %v3893 = vunpack.c.l.b16 %v3878
    %v3894 = vpack.c.b16 %v3891, %v3890
    %v3895 = vpack.c.b16 %v3893, %v3892
    %3898 = vmatprep.subr.bf16.mxu0 0
    %3899 = vmatpush1.bf16.msra.mxu0 %v3894
    %3900 = vmatprep.subr.bf16.mxu0 0
    %3901 = vmatpush1.bf16.msra.mxu0 %v3895
    %3902 = vmatprep.subr.bf16.mxu0 0
    %3903 = vmatpush1.bf16.msra.mxu0 0
    %3904 = vmatprep.subr.bf16.mxu0 0
    %3905 = vmatpush1.bf16.msra.mxu0 0
    %3906 = vmatprep.subr.bf16.mxu0 0
    %3907 = vmatpush1.bf16.msra.mxu0 0
    %3908 = vmatprep.subr.bf16.mxu0 0
    %3909 = vmatpush1.bf16.msra.mxu0 0
    %3910 = vmatprep.subr.bf16.mxu0 0
    %3911 = vmatpush1.bf16.msra.mxu0 0
    %3912 = vmatprep.subr.bf16.mxu0 0
    %3913 = vmatpush1.bf16.msra.mxu0 0
    %3914 = vmatprep.subr.bf16.mxu0 0
    %3915 = vmatpush1.bf16.msra.mxu0 0
    %3916 = vmatprep.subr.bf16.mxu0 0
    %3917 = vmatpush1.bf16.msra.mxu0 0
    %3918 = vmatprep.subr.bf16.mxu0 0
    %3919 = vmatpush1.bf16.msra.mxu0 0
    %3920 = vmatprep.subr.bf16.mxu0 0
    %3921 = vmatpush1.bf16.msra.mxu0 0
    %3922 = vmatprep.subr.bf16.mxu0 0
    %3923 = vmatpush1.bf16.msra.mxu0 0
    %3924 = vmatprep.subr.bf16.mxu0 0
    %3925 = vmatpush1.bf16.msra.mxu0 0
    %3926 = vmatprep.subr.bf16.mxu0 0
    %3927 = vmatpush1.bf16.msra.mxu0 0
    %3928 = vmatprep.subr.bf16.mxu0 0
    %3929 = vmatpush1.bf16.msra.mxu0 0
    %3930 = vmatprep.mubr.bf16.mxu0 0
    %3931 = vmatmul.mubr.bf16.gmra.mrb[0].mxu0 %v3086
    %v3932 = vpop.f32.mrb[0].mxu0
    %v3933 = vadd.f32 %v3884, %v3932
    %v3934 = vpop.f32.mrb[0].mxu0
    %v3935 = vpop.f32.mrb[0].mxu0
    %v3936 = vpop.f32.mrb[0].mxu0
    %3937 = vdwg.mxu0
    %v3938 = vld [vmem:[%s1815] sm:$0xf]
    %v3939 = vld [vmem:[%s1815 + $0x4] sm:$0xf]
    %v3940 = vld [vmem:[%s1815 + $0x8] sm:$0xf]
    %v3941 = vld [vmem:[%s1815 + $0xc] sm:$0xf]
    %v3942 = vld [vmem:[%s1820] sm:$0x1]
    %v3944 = vlaneseq
    %v3945 = vshrl.u32 %v3944, 7
    %v3946 = vsub.s32 0, %v3945
    %v3947 = vrot.slane %v3942, %v3946
    %v3953 = vunpack.c.l.b16 %v3938
    %v3954 = vunpack.c.l.b16 %v3939
    %v3955 = vunpack.c.l.b16 %v3940
    %v3956 = vunpack.c.l.b16 %v3941
    %v3957 = vpack.c.b16 %v3954, %v3953
    %v3958 = vpack.c.b16 %v3956, %v3955
    %3961 = vmatprep.subr.bf16.mxu0 0
    %3962 = vmatpush1.bf16.msra.mxu0 %v3957
    %3963 = vmatprep.subr.bf16.mxu0 0
    %3964 = vmatpush1.bf16.msra.mxu0 %v3958
    %3965 = vmatprep.subr.bf16.mxu0 0
    %3966 = vmatpush1.bf16.msra.mxu0 0
    %3967 = vmatprep.subr.bf16.mxu0 0
    %3968 = vmatpush1.bf16.msra.mxu0 0
    %3969 = vmatprep.subr.bf16.mxu0 0
    %3970 = vmatpush1.bf16.msra.mxu0 0
    %3971 = vmatprep.subr.bf16.mxu0 0
    %3972 = vmatpush1.bf16.msra.mxu0 0
    %3973 = vmatprep.subr.bf16.mxu0 0
    %3974 = vmatpush1.bf16.msra.mxu0 0
    %3975 = vmatprep.subr.bf16.mxu0 0
    %3976 = vmatpush1.bf16.msra.mxu0 0
    %3977 = vmatprep.subr.bf16.mxu0 0
    %3978 = vmatpush1.bf16.msra.mxu0 0
    %3979 = vmatprep.subr.bf16.mxu0 0
    %3980 = vmatpush1.bf16.msra.mxu0 0
    %3981 = vmatprep.subr.bf16.mxu0 0
    %3982 = vmatpush1.bf16.msra.mxu0 0
    %3983 = vmatprep.subr.bf16.mxu0 0
    %3984 = vmatpush1.bf16.msra.mxu0 0
    %3985 = vmatprep.subr.bf16.mxu0 0
    %3986 = vmatpush1.bf16.msra.mxu0 0
    %3987 = vmatprep.subr.bf16.mxu0 0
    %3988 = vmatpush1.bf16.msra.mxu0 0
    %3989 = vmatprep.subr.bf16.mxu0 0
    %3990 = vmatpush1.bf16.msra.mxu0 0
    %3991 = vmatprep.subr.bf16.mxu0 0
    %3992 = vmatpush1.bf16.msra.mxu0 0
    %3993 = vmatprep.mubr.bf16.mxu0 0
    %3994 = vmatmul.mubr.bf16.gmra.mrb[0].mxu0 %v3086
    %v3995 = vpop.f32.mrb[0].mxu0
    %v3996 = vadd.f32 %v3947, %v3995
    %v3997 = vpop.f32.mrb[0].mxu0
    %v3998 = vpop.f32.mrb[0].mxu0
    %v3999 = vpop.f32.mrb[0].mxu0
    %4000 = vdwg.mxu0
    %4001 = vset.pattern.permute.xlu0 2
    %4002 = vperm.xlu0 %4001, %v2958
    %v4003 = vpop.permute.xlu0 %4002
    %4005 = vset.pattern.permute.xlu0 2
    %4006 = vperm.xlu0 %4005, %v2963
    %v4007 = vpop.permute.xlu0 %4006
    %4009 = vset.pattern.permute.xlu0 2
    %4010 = vperm.xlu0 %4009, %v2968
    %v4011 = vpop.permute.xlu0 %4010
    %4013 = vset.pattern.permute.xlu0 2
    %4014 = vperm.xlu0 %4013, %v2973
    %v4015 = vpop.permute.xlu0 %4014
    %4017 = vset.pattern.permute.xlu0 2
    %4018 = vperm.xlu0 %4017, %v2978
    %v4019 = vpop.permute.xlu0 %4018
    %4021 = vset.pattern.permute.xlu0 2
    %4022 = vperm.xlu0 %4021, %v2983
    %v4023 = vpop.permute.xlu0 %4022
    %4025 = vset.pattern.permute.xlu0 2
    %4026 = vperm.xlu0 %4025, %v2988
    %v4027 = vpop.permute.xlu0 %4026
    %4029 = vset.pattern.permute.xlu0 2
    %4030 = vperm.xlu0 %4029, %v2993
    %v4031 = vpop.permute.xlu0 %4030
    %v4033 = vmul.f32 %v4003, %v329
    %v4034 = vmul.f32 %v4007, %v330
    %v4035 = vmul.f32 %v4011, %v331
    %v4036 = vmul.f32 %v4015, %v332
    %v4037 = vmul.f32 %v4019, %v333
    %v4038 = vmul.f32 %v4023, %v334
    %v4039 = vmul.f32 %v4027, %v335
    %v4040 = vmul.f32 %v4031, %v336
    %v4041 = vsel %vm368, %v4033, 0.0
    %v4042 = vsel %vm368, %v4034, 0.0
    %v4043 = vadd.f32 %v4041, %v4042
    %v4044 = vsel %vm368, %v4035, 0.0
    %v4045 = vadd.f32 %v4043, %v4044
    %v4046 = vsel %vm368, %v4036, 0.0
    %v4047 = vadd.f32 %v4045, %v4046
    %v4048 = vsel %vm368, %v4037, 0.0
    %v4049 = vadd.f32 %v4047, %v4048
    %v4050 = vsel %vm368, %v4038, 0.0
    %v4051 = vadd.f32 %v4049, %v4050
    %v4052 = vsel %vm368, %v4039, 0.0
    %v4053 = vadd.f32 %v4051, %v4052
    %v4054 = vsel %vm368, %v4040, 0.0
    %v4055 = vadd.f32 %v4053, %v4054
    %v4056 = vpack.c.bf16 %v3870, %v3870
    %v4057 = vpack.c.bf16 %v3933, %v3933
    %v4059 = vsel %vm368, %v4056, 0
    %v4062 = vsel %vm368, %v4057, 0
    %4064 = vmatprep.subr.bf16.mxu0 0
    %4065 = vmatpush1.bf16.xpose.msra.mxu0 %v4062
    %4066 = vmatprep.subr.bf16.mxu0 0
    %4067 = vmatpush1.bf16.xpose.msra.mxu0 0
    %4068 = vmatprep.subr.bf16.mxu0 0
    %4069 = vmatpush1.bf16.xpose.msra.mxu0 0
    %4070 = vmatprep.subr.bf16.mxu0 0
    %4071 = vmatpush1.bf16.xpose.msra.mxu0 0
    %4072 = vmatprep.subr.bf16.mxu0 0
    %4073 = vmatpush1.bf16.xpose.msra.mxu0 0
    %4074 = vmatprep.subr.bf16.mxu0 0
    %4075 = vmatpush1.bf16.xpose.msra.mxu0 0
    %4076 = vmatprep.subr.bf16.mxu0 0
    %4077 = vmatpush1.bf16.xpose.msra.mxu0 0
    %4078 = vmatprep.subr.bf16.mxu0 0
    %4079 = vmatpush1.bf16.xpose.msra.mxu0 0
    %4080 = vmatprep.subr.bf16.mxu0 0
    %4081 = vmatpush1.bf16.xpose.msra.mxu0 0
    %4082 = vmatprep.subr.bf16.mxu0 0
    %4083 = vmatpush1.bf16.xpose.msra.mxu0 0
    %4084 = vmatprep.subr.bf16.mxu0 0
    %4085 = vmatpush1.bf16.xpose.msra.mxu0 0
    %4086 = vmatprep.subr.bf16.mxu0 0
    %4087 = vmatpush1.bf16.xpose.msra.mxu0 0
    %4088 = vmatprep.subr.bf16.mxu0 0
    %4089 = vmatpush1.bf16.xpose.msra.mxu0 0
    %4090 = vmatprep.subr.bf16.mxu0 0
    %4091 = vmatpush1.bf16.xpose.msra.mxu0 0
    %4092 = vmatprep.subr.bf16.mxu0 0
    %4093 = vmatpush1.bf16.xpose.msra.mxu0 0
    %4094 = vmatprep.subr.bf16.mxu0 0
    %4095 = vmatpush1.bf16.xpose.msra.mxu0 0
    %4096 = vmatprep.mubr.bf16.mxu0 0
    %4097 = vmatmul.mubr.bf16.gmra.mrb[0].mxu0 %v4059
    %v4098 = vpop.f32.mrb[0].mxu0
    %v4099 = vadd.f32 %v4055, %v4098
    %v4100 = vpop.f32.mrb[0].mxu0
    %v4101 = vpop.f32.mrb[0].mxu0
    %v4102 = vpop.f32.mrb[0].mxu0
    %4103 = vdwg.mxu0
    %v4104 = vmul.f32 %v4099, %v2518
    %v4105 = vadd.f32 %v4104, %v2520
    %v4106 = vsel %vm368, %v4105, -inf
    %4107 = vmax.xlane.f32.xlu0 %v4106
    %v4108 = vpop.xlane.xlu0 %4107
    %v4109 = vsub.f32 %v4105, %v4108
    %v4110 = vmul.f32 %v4109, 1.442695
    %v4111 = vpow.pop %v4110
    %v4112 = vsel %vm368, %v4111, 0.0
    %4113 = vadd.xlane.f32.xlu0 %v4112
    %v4114 = vpop.xlane.xlu0 %4113
    %v4115 = vrcp.pop %v4114
    %v4116 = vmul.f32 %v4111, %v4115
    %v4117 = vpack.c.bf16 %v4116, %v4116
    %v4118 = vpack.c.bf16 %v3996, %v3996
    %v4120 = vsel %vm368, %v4117, 0
    %v4123 = vsel %vm1185, %v4118, 0
    %4125 = vmatprep.subr.bf16.mxu0 0
    %4126 = vmatpush1.bf16.msra.mxu0 %v4123
    %4127 = vmatprep.subr.bf16.mxu0 0
    %4128 = vmatpush1.bf16.msra.mxu0 0
    %4129 = vmatprep.subr.bf16.mxu0 0
    %4130 = vmatpush1.bf16.msra.mxu0 0
    %4131 = vmatprep.subr.bf16.mxu0 0
    %4132 = vmatpush1.bf16.msra.mxu0 0
    %4133 = vmatprep.subr.bf16.mxu0 0
    %4134 = vmatpush1.bf16.msra.mxu0 0
    %4135 = vmatprep.subr.bf16.mxu0 0
    %4136 = vmatpush1.bf16.msra.mxu0 0
    %4137 = vmatprep.subr.bf16.mxu0 0
    %4138 = vmatpush1.bf16.msra.mxu0 0
    %4139 = vmatprep.subr.bf16.mxu0 0
    %4140 = vmatpush1.bf16.msra.mxu0 0
    %4141 = vmatprep.subr.bf16.mxu0 0
    %4142 = vmatpush1.bf16.msra.mxu0 0
    %4143 = vmatprep.subr.bf16.mxu0 0
    %4144 = vmatpush1.bf16.msra.mxu0 0
    %4145 = vmatprep.subr.bf16.mxu0 0
    %4146 = vmatpush1.bf16.msra.mxu0 0
    %4147 = vmatprep.subr.bf16.mxu0 0
    %4148 = vmatpush1.bf16.msra.mxu0 0
    %4149 = vmatprep.subr.bf16.mxu0 0
    %4150 = vmatpush1.bf16.msra.mxu0 0
    %4151 = vmatprep.subr.bf16.mxu0 0
    %4152 = vmatpush1.bf16.msra.mxu0 0
    %4153 = vmatprep.subr.bf16.mxu0 0
    %4154 = vmatpush1.bf16.msra.mxu0 0
    %4155 = vmatprep.subr.bf16.mxu0 0
    %4156 = vmatpush1.bf16.msra.mxu0 0
    %4157 = vmatprep.mubr.bf16.mxu0 0
    %4158 = vmatmul.mubr.bf16.gmra.mrb[0].mxu0 %v4120
    %v4159 = vpop.f32.mrb[0].mxu0
    %v4160 = vadd.f32 0.0, %v4159
    %v4161 = vpop.f32.mrb[0].mxu0
    %v4162 = vpop.f32.mrb[0].mxu0
    %v4163 = vpop.f32.mrb[0].mxu0
    %4164 = vdwg.mxu0
    %v4165 = vpack.c.bf16 %v4160, %v4160
    %v4166 = vld [vmem:[%s2045] sm:$0xf]
    %v4168 = vsel %vm368, %v4165, 0
    %v4171 = vsel %vm1185, %v4166, 0
    %4173 = vmatprep.subr.bf16.mxu0 0
    %4174 = vmatpush1.bf16.msra.mxu0 %v4171
    %4175 = vmatprep.subr.bf16.mxu0 0
    %4176 = vmatpush1.bf16.msra.mxu0 0
    %4177 = vmatprep.subr.bf16.mxu0 0
    %4178 = vmatpush1.bf16.msra.mxu0 0
    %4179 = vmatprep.subr.bf16.mxu0 0
    %4180 = vmatpush1.bf16.msra.mxu0 0
    %4181 = vmatprep.subr.bf16.mxu0 0
    %4182 = vmatpush1.bf16.msra.mxu0 0
    %4183 = vmatprep.subr.bf16.mxu0 0
    %4184 = vmatpush1.bf16.msra.mxu0 0
    %4185 = vmatprep.subr.bf16.mxu0 0
    %4186 = vmatpush1.bf16.msra.mxu0 0
    %4187 = vmatprep.subr.bf16.mxu0 0
    %4188 = vmatpush1.bf16.msra.mxu0 0
    %4189 = vmatprep.subr.bf16.mxu0 0
    %4190 = vmatpush1.bf16.msra.mxu0 0
    %4191 = vmatprep.subr.bf16.mxu0 0
    %4192 = vmatpush1.bf16.msra.mxu0 0
    %4193 = vmatprep.subr.bf16.mxu0 0
    %4194 = vmatpush1.bf16.msra.mxu0 0
    %4195 = vmatprep.subr.bf16.mxu0 0
    %4196 = vmatpush1.bf16.msra.mxu0 0
    %4197 = vmatprep.subr.bf16.mxu0 0
    %4198 = vmatpush1.bf16.msra.mxu0 0
    %4199 = vmatprep.subr.bf16.mxu0 0
    %4200 = vmatpush1.bf16.msra.mxu0 0
    %4201 = vmatprep.subr.bf16.mxu0 0
    %4202 = vmatpush1.bf16.msra.mxu0 0
    %4203 = vmatprep.subr.bf16.mxu0 0
    %4204 = vmatpush1.bf16.msra.mxu0 0
    %4205 = vmatprep.mubr.bf16.mxu0 0
    %4206 = vmatmul.mubr.bf16.gmra.mrb[0].mxu0 %v4168
    %v4207 = vpop.f32.mrb[0].mxu0
    %v4208 = vadd.f32 0.0, %v4207
    %v4209 = vpop.f32.mrb[0].mxu0
    %v4210 = vpop.f32.mrb[0].mxu0
    %v4211 = vpop.f32.mrb[0].mxu0
    %4212 = vdwg.mxu0
    %v4213 = vadd.f32 %v3807, %v4208
    %v4214 = vld [vmem:[%s2094] sm:$0xf]
    %v4215 = vld [vmem:[%s2094 + $0x4] sm:$0xf]
    %v4216 = vld [vmem:[%s2094 + $0x8] sm:$0xf]
    %v4217 = vld [vmem:[%s2094 + $0xc] sm:$0xf]
    %v4218 = vld [vmem:[%s2099] sm:$0x1]
    %v4220 = vlaneseq
    %v4221 = vshrl.u32 %v4220, 7
    %v4222 = vsub.s32 0, %v4221
    %v4223 = vrot.slane %v4218, %v4222
    %v4229 = vunpack.c.l.b16 %v4214
    %v4230 = vunpack.c.l.b16 %v4215
    %v4231 = vunpack.c.l.b16 %v4216
    %v4232 = vunpack.c.l.b16 %v4217
    %v4233 = vpack.c.b16 %v4230, %v4229
    %v4234 = vpack.c.b16 %v4232, %v4231
    %4237 = vmatprep.subr.bf16.mxu0 0
    %4238 = vmatpush1.bf16.msra.mxu0 %v4233
    %4239 = vmatprep.subr.bf16.mxu0 0
    %4240 = vmatpush1.bf16.msra.mxu0 %v4234
    %4241 = vmatprep.subr.bf16.mxu0 0
    %4242 = vmatpush1.bf16.msra.mxu0 0
    %4243 = vmatprep.subr.bf16.mxu0 0
    %4244 = vmatpush1.bf16.msra.mxu0 0
    %4245 = vmatprep.subr.bf16.mxu0 0
    %4246 = vmatpush1.bf16.msra.mxu0 0
    %4247 = vmatprep.subr.bf16.mxu0 0
    %4248 = vmatpush1.bf16.msra.mxu0 0
    %4249 = vmatprep.subr.bf16.mxu0 0
    %4250 = vmatpush1.bf16.msra.mxu0 0
    %4251 = vmatprep.subr.bf16.mxu0 0
    %4252 = vmatpush1.bf16.msra.mxu0 0
    %4253 = vmatprep.subr.bf16.mxu0 0
    %4254 = vmatpush1.bf16.msra.mxu0 0
    %4255 = vmatprep.subr.bf16.mxu0 0
    %4256 = vmatpush1.bf16.msra.mxu0 0
    %4257 = vmatprep.subr.bf16.mxu0 0
    %4258 = vmatpush1.bf16.msra.mxu0 0
    %4259 = vmatprep.subr.bf16.mxu0 0
    %4260 = vmatpush1.bf16.msra.mxu0 0
    %4261 = vmatprep.subr.bf16.mxu0 0
    %4262 = vmatpush1.bf16.msra.mxu0 0
    %4263 = vmatprep.subr.bf16.mxu0 0
    %4264 = vmatpush1.bf16.msra.mxu0 0
    %4265 = vmatprep.subr.bf16.mxu0 0
    %4266 = vmatpush1.bf16.msra.mxu0 0
    %4267 = vmatprep.subr.bf16.mxu0 0
    %4268 = vmatpush1.bf16.msra.mxu0 0
    %4269 = vmatprep.mubr.bf16.mxu0 0
    %4270 = vmatmul.mubr.bf16.gmra.mrb[0].mxu0 %v3020
    %v4271 = vpop.f32.mrb[0].mxu0
    %v4272 = vadd.f32 %v4223, %v4271
    %v4273 = vpop.f32.mrb[0].mxu0
    %v4274 = vpop.f32.mrb[0].mxu0
    %v4275 = vpop.f32.mrb[0].mxu0
    %4276 = vdwg.mxu0
    %v4277 = vld [vmem:[%s2159] sm:$0xf]
    %v4278 = vld [vmem:[%s2159 + $0x4] sm:$0xf]
    %v4279 = vld [vmem:[%s2159 + $0x8] sm:$0xf]
    %v4280 = vld [vmem:[%s2159 + $0xc] sm:$0xf]
    %v4281 = vld [vmem:[%s2164] sm:$0x1]
    %v4283 = vlaneseq
    %v4284 = vshrl.u32 %v4283, 7
    %v4285 = vsub.s32 0, %v4284
    %v4286 = vrot.slane %v4281, %v4285
    %v4292 = vunpack.c.l.b16 %v4277
    %v4293 = vunpack.c.l.b16 %v4278
    %v4294 = vunpack.c.l.b16 %v4279
    %v4295 = vunpack.c.l.b16 %v4280
    %v4296 = vpack.c.b16 %v4293, %v4292
    %v4297 = vpack.c.b16 %v4295, %v4294
    %4300 = vmatprep.subr.bf16.mxu0 0
    %4301 = vmatpush1.bf16.msra.mxu0 %v4296
    %4302 = vmatprep.subr.bf16.mxu0 0
    %4303 = vmatpush1.bf16.msra.mxu0 %v4297
    %4304 = vmatprep.subr.bf16.mxu0 0
    %4305 = vmatpush1.bf16.msra.mxu0 0
    %4306 = vmatprep.subr.bf16.mxu0 0
    %4307 = vmatpush1.bf16.msra.mxu0 0
    %4308 = vmatprep.subr.bf16.mxu0 0
    %4309 = vmatpush1.bf16.msra.mxu0 0
    %4310 = vmatprep.subr.bf16.mxu0 0
    %4311 = vmatpush1.bf16.msra.mxu0 0
    %4312 = vmatprep.subr.bf16.mxu0 0
    %4313 = vmatpush1.bf16.msra.mxu0 0
    %4314 = vmatprep.subr.bf16.mxu0 0
    %4315 = vmatpush1.bf16.msra.mxu0 0
    %4316 = vmatprep.subr.bf16.mxu0 0
    %4317 = vmatpush1.bf16.msra.mxu0 0
    %4318 = vmatprep.subr.bf16.mxu0 0
    %4319 = vmatpush1.bf16.msra.mxu0 0
    %4320 = vmatprep.subr.bf16.mxu0 0
    %4321 = vmatpush1.bf16.msra.mxu0 0
    %4322 = vmatprep.subr.bf16.mxu0 0
    %4323 = vmatpush1.bf16.msra.mxu0 0
    %4324 = vmatprep.subr.bf16.mxu0 0
    %4325 = vmatpush1.bf16.msra.mxu0 0
    %4326 = vmatprep.subr.bf16.mxu0 0
    %4327 = vmatpush1.bf16.msra.mxu0 0
    %4328 = vmatprep.subr.bf16.mxu0 0
    %4329 = vmatpush1.bf16.msra.mxu0 0
    %4330 = vmatprep.subr.bf16.mxu0 0
    %4331 = vmatpush1.bf16.msra.mxu0 0
    %4332 = vmatprep.mubr.bf16.mxu0 0
    %4333 = vmatmul.mubr.bf16.gmra.mrb[0].mxu0 %v3086
    %v4334 = vpop.f32.mrb[0].mxu0
    %v4335 = vadd.f32 %v4286, %v4334
    %v4336 = vpop.f32.mrb[0].mxu0
    %v4337 = vpop.f32.mrb[0].mxu0
    %v4338 = vpop.f32.mrb[0].mxu0
    %4339 = vdwg.mxu0
    %v4340 = vld [vmem:[%s2224] sm:$0xf]
    %v4341 = vld [vmem:[%s2224 + $0x4] sm:$0xf]
    %v4342 = vld [vmem:[%s2224 + $0x8] sm:$0xf]
    %v4343 = vld [vmem:[%s2224 + $0xc] sm:$0xf]
    %v4344 = vld [vmem:[%s2229] sm:$0x1]
    %v4346 = vlaneseq
    %v4347 = vshrl.u32 %v4346, 7
    %v4348 = vsub.s32 0, %v4347
    %v4349 = vrot.slane %v4344, %v4348
    %v4355 = vunpack.c.l.b16 %v4340
    %v4356 = vunpack.c.l.b16 %v4341
    %v4357 = vunpack.c.l.b16 %v4342
    %v4358 = vunpack.c.l.b16 %v4343
    %v4359 = vpack.c.b16 %v4356, %v4355
    %v4360 = vpack.c.b16 %v4358, %v4357
    %4363 = vmatprep.subr.bf16.mxu0 0
    %4364 = vmatpush1.bf16.msra.mxu0 %v4359
    %4365 = vmatprep.subr.bf16.mxu0 0
    %4366 = vmatpush1.bf16.msra.mxu0 %v4360
    %4367 = vmatprep.subr.bf16.mxu0 0
    %4368 = vmatpush1.bf16.msra.mxu0 0
    %4369 = vmatprep.subr.bf16.mxu0 0
    %4370 = vmatpush1.bf16.msra.mxu0 0
    %4371 = vmatprep.subr.bf16.mxu0 0
    %4372 = vmatpush1.bf16.msra.mxu0 0
    %4373 = vmatprep.subr.bf16.mxu0 0
    %4374 = vmatpush1.bf16.msra.mxu0 0
    %4375 = vmatprep.subr.bf16.mxu0 0
    %4376 = vmatpush1.bf16.msra.mxu0 0
    %4377 = vmatprep.subr.bf16.mxu0 0
    %4378 = vmatpush1.bf16.msra.mxu0 0
    %4379 = vmatprep.subr.bf16.mxu0 0
    %4380 = vmatpush1.bf16.msra.mxu0 0
    %4381 = vmatprep.subr.bf16.mxu0 0
    %4382 = vmatpush1.bf16.msra.mxu0 0
    %4383 = vmatprep.subr.bf16.mxu0 0
    %4384 = vmatpush1.bf16.msra.mxu0 0
    %4385 = vmatprep.subr.bf16.mxu0 0
    %4386 = vmatpush1.bf16.msra.mxu0 0
    %4387 = vmatprep.subr.bf16.mxu0 0
    %4388 = vmatpush1.bf16.msra.mxu0 0
    %4389 = vmatprep.subr.bf16.mxu0 0
    %4390 = vmatpush1.bf16.msra.mxu0 0
    %4391 = vmatprep.subr.bf16.mxu0 0
    %4392 = vmatpush1.bf16.msra.mxu0 0
    %4393 = vmatprep.subr.bf16.mxu0 0
    %4394 = vmatpush1.bf16.msra.mxu0 0
    %4395 = vmatprep.mubr.bf16.mxu0 0
    %4396 = vmatmul.mubr.bf16.gmra.mrb[0].mxu0 %v3086
    %v4397 = vpop.f32.mrb[0].mxu0
    %v4398 = vadd.f32 %v4349, %v4397
    %v4399 = vpop.f32.mrb[0].mxu0
    %v4400 = vpop.f32.mrb[0].mxu0
    %v4401 = vpop.f32.mrb[0].mxu0
    %4402 = vdwg.mxu0
    %4403 = vset.pattern.permute.xlu0 3
    %4404 = vperm.xlu0 %4403, %v2958
    %v4405 = vpop.permute.xlu0 %4404
    %4407 = vset.pattern.permute.xlu0 3
    %4408 = vperm.xlu0 %4407, %v2963
    %v4409 = vpop.permute.xlu0 %4408
    %4411 = vset.pattern.permute.xlu0 3
    %4412 = vperm.xlu0 %4411, %v2968
    %v4413 = vpop.permute.xlu0 %4412
    %4415 = vset.pattern.permute.xlu0 3
    %4416 = vperm.xlu0 %4415, %v2973
    %v4417 = vpop.permute.xlu0 %4416
    %4419 = vset.pattern.permute.xlu0 3
    %4420 = vperm.xlu0 %4419, %v2978
    %v4421 = vpop.permute.xlu0 %4420
    %4423 = vset.pattern.permute.xlu0 3
    %4424 = vperm.xlu0 %4423, %v2983
    %v4425 = vpop.permute.xlu0 %4424
    %4427 = vset.pattern.permute.xlu0 3
    %4428 = vperm.xlu0 %4427, %v2988
    %v4429 = vpop.permute.xlu0 %4428
    %4431 = vset.pattern.permute.xlu0 3
    %4432 = vperm.xlu0 %4431, %v2993
    %v4433 = vpop.permute.xlu0 %4432
    %v4435 = vmul.f32 %v4405, %v329
    %v4436 = vmul.f32 %v4409, %v330
    %v4437 = vmul.f32 %v4413, %v331
    %v4438 = vmul.f32 %v4417, %v332
    %v4439 = vmul.f32 %v4421, %v333
    %v4440 = vmul.f32 %v4425, %v334
    %v4441 = vmul.f32 %v4429, %v335
    %v4442 = vmul.f32 %v4433, %v336
    %v4443 = vsel %vm368, %v4435, 0.0
    %v4444 = vsel %vm368, %v4436, 0.0
    %v4445 = vadd.f32 %v4443, %v4444
    %v4446 = vsel %vm368, %v4437, 0.0
    %v4447 = vadd.f32 %v4445, %v4446
    %v4448 = vsel %vm368, %v4438, 0.0
    %v4449 = vadd.f32 %v4447, %v4448
    %v4450 = vsel %vm368, %v4439, 0.0
    %v4451 = vadd.f32 %v4449, %v4450
    %v4452 = vsel %vm368, %v4440, 0.0
    %v4453 = vadd.f32 %v4451, %v4452
    %v4454 = vsel %vm368, %v4441, 0.0
    %v4455 = vadd.f32 %v4453, %v4454
    %v4456 = vsel %vm368, %v4442, 0.0
    %v4457 = vadd.f32 %v4455, %v4456
    %v4458 = vpack.c.bf16 %v4272, %v4272
    %v4459 = vpack.c.bf16 %v4335, %v4335
    %v4461 = vsel %vm368, %v4458, 0
    %v4464 = vsel %vm368, %v4459, 0
    %4466 = vmatprep.subr.bf16.mxu0 0
    %4467 = vmatpush1.bf16.xpose.msra.mxu0 %v4464
    %4468 = vmatprep.subr.bf16.mxu0 0
    %4469 = vmatpush1.bf16.xpose.msra.mxu0 0
    %4470 = vmatprep.subr.bf16.mxu0 0
    %4471 = vmatpush1.bf16.xpose.msra.mxu0 0
    %4472 = vmatprep.subr.bf16.mxu0 0
    %4473 = vmatpush1.bf16.xpose.msra.mxu0 0
    %4474 = vmatprep.subr.bf16.mxu0 0
    %4475 = vmatpush1.bf16.xpose.msra.mxu0 0
    %4476 = vmatprep.subr.bf16.mxu0 0
    %4477 = vmatpush1.bf16.xpose.msra.mxu0 0
    %4478 = vmatprep.subr.bf16.mxu0 0
    %4479 = vmatpush1.bf16.xpose.msra.mxu0 0
    %4480 = vmatprep.subr.bf16.mxu0 0
    %4481 = vmatpush1.bf16.xpose.msra.mxu0 0
    %4482 = vmatprep.subr.bf16.mxu0 0
    %4483 = vmatpush1.bf16.xpose.msra.mxu0 0
    %4484 = vmatprep.subr.bf16.mxu0 0
    %4485 = vmatpush1.bf16.xpose.msra.mxu0 0
    %4486 = vmatprep.subr.bf16.mxu0 0
    %4487 = vmatpush1.bf16.xpose.msra.mxu0 0
    %4488 = vmatprep.subr.bf16.mxu0 0
    %4489 = vmatpush1.bf16.xpose.msra.mxu0 0
    %4490 = vmatprep.subr.bf16.mxu0 0
    %4491 = vmatpush1.bf16.xpose.msra.mxu0 0
    %4492 = vmatprep.subr.bf16.mxu0 0
    %4493 = vmatpush1.bf16.xpose.msra.mxu0 0
    %4494 = vmatprep.subr.bf16.mxu0 0
    %4495 = vmatpush1.bf16.xpose.msra.mxu0 0
    %4496 = vmatprep.subr.bf16.mxu0 0
    %4497 = vmatpush1.bf16.xpose.msra.mxu0 0
    %4498 = vmatprep.mubr.bf16.mxu0 0
    %4499 = vmatmul.mubr.bf16.gmra.mrb[0].mxu0 %v4461
    %v4500 = vpop.f32.mrb[0].mxu0
    %v4501 = vadd.f32 %v4457, %v4500
    %v4502 = vpop.f32.mrb[0].mxu0
    %v4503 = vpop.f32.mrb[0].mxu0
    %v4504 = vpop.f32.mrb[0].mxu0
    %4505 = vdwg.mxu0
    %v4506 = vmul.f32 %v4501, %v2518
    %v4507 = vadd.f32 %v4506, %v2520
    %v4508 = vsel %vm368, %v4507, -inf
    %4509 = vmax.xlane.f32.xlu0 %v4508
    %v4510 = vpop.xlane.xlu0 %4509
    %v4511 = vsub.f32 %v4507, %v4510
    %v4512 = vmul.f32 %v4511, 1.442695
    %v4513 = vpow.pop %v4512
    %v4514 = vsel %vm368, %v4513, 0.0
    %4515 = vadd.xlane.f32.xlu0 %v4514
    %v4516 = vpop.xlane.xlu0 %4515
    %v4517 = vrcp.pop %v4516
    %v4518 = vmul.f32 %v4513, %v4517
    %v4519 = vpack.c.bf16 %v4518, %v4518
    %v4520 = vpack.c.bf16 %v4398, %v4398
    %v4522 = vsel %vm368, %v4519, 0
    %v4525 = vsel %vm1185, %v4520, 0
    %4527 = vmatprep.subr.bf16.mxu0 0
    %4528 = vmatpush1.bf16.msra.mxu0 %v4525
    %4529 = vmatprep.subr.bf16.mxu0 0
    %4530 = vmatpush1.bf16.msra.mxu0 0
    %4531 = vmatprep.subr.bf16.mxu0 0
    %4532 = vmatpush1.bf16.msra.mxu0 0
    %4533 = vmatprep.subr.bf16.mxu0 0
    %4534 = vmatpush1.bf16.msra.mxu0 0
    %4535 = vmatprep.subr.bf16.mxu0 0
    %4536 = vmatpush1.bf16.msra.mxu0 0
    %4537 = vmatprep.subr.bf16.mxu0 0
    %4538 = vmatpush1.bf16.msra.mxu0 0
    %4539 = vmatprep.subr.bf16.mxu0 0
    %4540 = vmatpush1.bf16.msra.mxu0 0
    %4541 = vmatprep.subr.bf16.mxu0 0
    %4542 = vmatpush1.bf16.msra.mxu0 0
    %4543 = vmatprep.subr.bf16.mxu0 0
    %4544 = vmatpush1.bf16.msra.mxu0 0
    %4545 = vmatprep.subr.bf16.mxu0 0
    %4546 = vmatpush1.bf16.msra.mxu0 0
    %4547 = vmatprep.subr.bf16.mxu0 0
    %4548 = vmatpush1.bf16.msra.mxu0 0
    %4549 = vmatprep.subr.bf16.mxu0 0
    %4550 = vmatpush1.bf16.msra.mxu0 0
    %4551 = vmatprep.subr.bf16.mxu0 0
    %4552 = vmatpush1.bf16.msra.mxu0 0
    %4553 = vmatprep.subr.bf16.mxu0 0
    %4554 = vmatpush1.bf16.msra.mxu0 0
    %4555 = vmatprep.subr.bf16.mxu0 0
    %4556 = vmatpush1.bf16.msra.mxu0 0
    %4557 = vmatprep.subr.bf16.mxu0 0
    %4558 = vmatpush1.bf16.msra.mxu0 0
    %4559 = vmatprep.mubr.bf16.mxu0 0
    %4560 = vmatmul.mubr.bf16.gmra.mrb[0].mxu0 %v4522
    %v4561 = vpop.f32.mrb[0].mxu0
    %v4562 = vadd.f32 0.0, %v4561
    %v4563 = vpop.f32.mrb[0].mxu0
    %v4564 = vpop.f32.mrb[0].mxu0
    %v4565 = vpop.f32.mrb[0].mxu0
    %4566 = vdwg.mxu0
    %v4567 = vpack.c.bf16 %v4562, %v4562
    %v4568 = vld [vmem:[%s2454] sm:$0xf]
    %v4570 = vsel %vm368, %v4567, 0
    %v4573 = vsel %vm1185, %v4568, 0
    %4575 = vmatprep.subr.bf16.mxu0 0
    %4576 = vmatpush1.bf16.msra.mxu0 %v4573
    %4577 = vmatprep.subr.bf16.mxu0 0
    %4578 = vmatpush1.bf16.msra.mxu0 0
    %4579 = vmatprep.subr.bf16.mxu0 0
    %4580 = vmatpush1.bf16.msra.mxu0 0
    %4581 = vmatprep.subr.bf16.mxu0 0
    %4582 = vmatpush1.bf16.msra.mxu0 0
    %4583 = vmatprep.subr.bf16.mxu0 0
    %4584 = vmatpush1.bf16.msra.mxu0 0
    %4585 = vmatprep.subr.bf16.mxu0 0
    %4586 = vmatpush1.bf16.msra.mxu0 0
    %4587 = vmatprep.subr.bf16.mxu0 0
    %4588 = vmatpush1.bf16.msra.mxu0 0
    %4589 = vmatprep.subr.bf16.mxu0 0
    %4590 = vmatpush1.bf16.msra.mxu0 0
    %4591 = vmatprep.subr.bf16.mxu0 0
    %4592 = vmatpush1.bf16.msra.mxu0 0
    %4593 = vmatprep.subr.bf16.mxu0 0
    %4594 = vmatpush1.bf16.msra.mxu0 0
    %4595 = vmatprep.subr.bf16.mxu0 0
    %4596 = vmatpush1.bf16.msra.mxu0 0
    %4597 = vmatprep.subr.bf16.mxu0 0
    %4598 = vmatpush1.bf16.msra.mxu0 0
    %4599 = vmatprep.subr.bf16.mxu0 0
    %4600 = vmatpush1.bf16.msra.mxu0 0
    %4601 = vmatprep.subr.bf16.mxu0 0
    %4602 = vmatpush1.bf16.msra.mxu0 0
    %4603 = vmatprep.subr.bf16.mxu0 0
    %4604 = vmatpush1.bf16.msra.mxu0 0
    %4605 = vmatprep.subr.bf16.mxu0 0
    %4606 = vmatpush1.bf16.msra.mxu0 0
    %4607 = vmatprep.mubr.bf16.mxu0 0
    %4608 = vmatmul.mubr.bf16.gmra.mrb[0].mxu0 %v4570
    %v4609 = vpop.f32.mrb[0].mxu0
    %v4610 = vadd.f32 0.0, %v4609
    %v4611 = vpop.f32.mrb[0].mxu0
    %v4612 = vpop.f32.mrb[0].mxu0
    %v4613 = vpop.f32.mrb[0].mxu0
    %4614 = vdwg.mxu0
    %v4615 = vadd.f32 %v4213, %v4610
    %v4616 = vadd.f32 %v4615, %v2507
    %s4617 = scalar_lea.vmem [#allocation32], 8
    %4618 = vst.msk [vmem:[%s4617] sm:$0xff] %vm445, %v4616
    // Predicated region
    $region154: #{tpu_custom_call.1} parent=1 // pred_check
      _
    $region155: #{tpu_custom_call.1} parent=1 // pred_check_branch
      %4620 = sbr.rel (0) target = $region157
    $region156: #{tpu_custom_call.1} parent=1 // pred_region
      %s4622 = ssub.s32 256, 256
      %4623 = vsyncadd [#allocation4], %s4622
      %s4624 = sshll.u32 [#allocation32], 4
      %s4625 = int_to_ptr.vmem [resolvable:$true] %s4624
      %4630 = dma.vmem_to_hbm [thread:$0]  %s4625, 256, %s19, [#allocation4], 128, 128, 8
    $region157: #{tpu_custom_call.1} parent=1 // pred_fallthru
      _
    // Predicated region
    $region158: #{tpu_custom_call.1} parent=1 // pred_check
      _
    $region159: #{tpu_custom_call.1} parent=1 // pred_check_branch
      %4632 = sbr.rel (0) target = $region161
    $region160: #{tpu_custom_call.1} parent=1 // pred_region
      %4633 = dma.done [#allocation4], 256
    $region161: #{tpu_custom_call.1} parent=1 // pred_fallthru
      _
    %4634 = vsyncpa [#allocation3], 1
    %4635 = vsyncpa [#allocation6], 1
    %4636 = vsyncpa [#allocation9], 1
    %4637 = vsyncpa [#allocation12], 1
    %4638 = vsyncpa [#allocation15], 1
    %4639 = vsyncpa [#allocation18], 1
    %4640 = vsyncpa [#allocation21], 1
    %4641 = vsyncpa [#allocation24], 1
    %4642 = vsyncpa [#allocation27], 1
    %4643 = vsyncpa [#allocation30], 1
    %4644 = vsyncpa [#allocation4], 1

</llo_original>
